<compile_context>
chip_gen: v7x
topology: tpu7x:2x2x1
jax: 0.10.0
libtpu: 0.0.40
codegen_flags: <defaults>
</compile_context>

<pallas_src>
import functools

import jax
import jax.numpy as jnp
from jax.experimental import pallas as pl
from jax.experimental.pallas import tpu as pltpu


# ----------------------------------------------------------------------------
# Fused kernel: pos-add + QKV projection + causal attention + FFN (+ residual)
# grid = (num_n_tiles,)
# ----------------------------------------------------------------------------
def _fused_temporal_attn_kernel(x_ref, pos_ref, wq_ref, wk_ref, wv_ref,
                                wl_ref, b_ref, o_ref, *, n_heads, residual):
    # x_ref:   (BN, T, F)   node-tile of raw inputs
    # pos_ref: (T, F)       position embeddings
    # w*_ref:  (F, F)       full Q/K/V projection weights
    # wl_ref:  (F, F)       FFN weight, pre-transposed to (in, out)
    # b_ref:   (1, F)       FFN bias
    # o_ref:   (BN, T, F)   lane-dense output tile
    ti = x_ref[...] + pos_ref[...][None, :, :]            # temporal_inputs
    BN, T, F = ti.shape
    D = F // n_heads

    # Wide, fused QKV projections: one (BN*T, F) x (F, F) matmul each.
    q = jnp.einsum('ntf,fg->ntg', ti, wq_ref[...],
                   preferred_element_type=jnp.float32)
    k = jnp.einsum('ntf,fg->ntg', ti, wk_ref[...],
                   preferred_element_type=jnp.float32)
    v = jnp.einsum('ntf,fg->ntg', ti, wv_ref[...],
                   preferred_element_type=jnp.float32)

    # Causal mask (torch.tril == 0 -> -2**32 + 1), computed once for all heads.
    row = jax.lax.broadcasted_iota(jnp.int32, (T, T), 0)
    col = jax.lax.broadcasted_iota(jnp.int32, (T, T), 1)
    masked = (col > row)[None, :, :]
    neg = jnp.float32(-2.0 ** 32 + 1)
    inv_scale = jnp.float32(1.0 / (T ** 0.5))             # / sqrt(num_time_steps)

    # Per-head attention, heads unrolled in VMEM (small static n_heads).
    head_outs = []
    for h in range(n_heads):
        sl = slice(h * D, (h + 1) * D)
        qh, kh, vh = q[:, :, sl], k[:, :, sl], v[:, :, sl]

        s = jnp.einsum('ntd,nsd->nts', qh, kh,
                       preferred_element_type=jnp.float32) * inv_scale
        s = jnp.where(masked, neg, s)

        m = jnp.max(s, axis=-1, keepdims=True)
        p = jnp.exp(s - m)
        p = p * pl.reciprocal(jnp.sum(p, axis=-1, keepdims=True), approx=True)

        head_outs.append(
            jnp.einsum('nts,nsd->ntd', p, vh,
                       preferred_element_type=jnp.float32))

    # cat(split(dim=feature), dim=feature) head packing -> lane-dense (BN,T,F).
    attn = jnp.concatenate(head_outs, axis=-1)

    # Fused feedforward: relu(attn @ W^T + b) + attn   (W pre-transposed).
    y = jnp.einsum('ntf,fg->ntg', attn, wl_ref[...],
                   preferred_element_type=jnp.float32)
    y = y + b_ref[...][None, :, :]
    y = jnp.maximum(y, 0.0) + attn

    if residual:
        y = y + ti                                        # + temporal_inputs

    o_ref[...] = y


# ----------------------------------------------------------------------------
# Tile-size heuristic: keep the per-step VMEM footprint well under v7x's budget.
# ----------------------------------------------------------------------------
def _pick_block_n(N, T, F, n_heads, budget_bytes=24 * 1024 * 1024):
    # Rough f32 bytes live per node row: x/q/k/v/attn/ffn/residual (~8 * T*F)
    # plus per-head (T, T) scores & probs, with headroom for double-buffered
    # input/output DMA.
    per_row = 4 * (8 * T * F + 2 * n_heads * T * T)
    bn = max(1, min(N, budget_bytes // max(per_row, 1)))
    p = 1
    while p * 2 <= bn:
        p *= 2
    return min(p, N)


# ----------------------------------------------------------------------------
# Wrapper
# ----------------------------------------------------------------------------
def temporal_attention_layer(x, pos_emb, Wq, Wk, Wv, W_lin, b_lin,
                             n_heads, residual=False, block_n=None):
    N, T, F = x.shape
    assert F % n_heads == 0
    if block_n is None:
        block_n = _pick_block_n(N, T, F, n_heads)
    grid = (pl.cdiv(N, block_n),)

    kernel = functools.partial(_fused_temporal_attn_kernel,
                               n_heads=n_heads, residual=residual)

    return pl.pallas_call(
        kernel,
        out_shape=jax.ShapeDtypeStruct((N, T, F), jnp.float32),
        grid=grid,
        in_specs=[
            pl.BlockSpec((block_n, T, F), lambda i: (i, 0, 0)),   # x (tiled over N)
            pl.BlockSpec((T, F), lambda i: (0, 0)),               # pos_emb
            pl.BlockSpec((F, F), lambda i: (0, 0)),               # Wq
            pl.BlockSpec((F, F), lambda i: (0, 0)),               # Wk
            pl.BlockSpec((F, F), lambda i: (0, 0)),               # Wv
            pl.BlockSpec((F, F), lambda i: (0, 0)),               # W_lin^T (in,out)
            pl.BlockSpec((1, F), lambda i: (0, 0)),               # b_lin
        ],
        out_specs=pl.BlockSpec((block_n, T, F), lambda i: (i, 0, 0)),
        compiler_params=pltpu.CompilerParams(
            dimension_semantics=("parallel",)),
    )(x, pos_emb, Wq, Wk, Wv, W_lin.T, b_lin.reshape(1, F))


# ----------------------------------------------------------------------------
# Pure-JAX reference (mirrors the PyTorch forward, eval mode)
# ----------------------------------------------------------------------------
def _reference(x, pos_emb, Wq, Wk, Wv, W_lin, b_lin, n_heads, residual=False):
    N, T, F = x.shape
    ti = x + pos_emb[None, :, :]
    q = jnp.einsum('ntf,fo->nto', ti, Wq)
    k = jnp.einsum('ntf,fo->nto', ti, Wk)
    v = jnp.einsum('ntf,fo->nto', ti, Wv)

    def pack(z):  # cat(split(dim=2), dim=0) -> [H*N, T, D]
        return jnp.concatenate(jnp.split(z, n_heads, axis=2), axis=0)

    q_, k_, v_ = pack(q), pack(k), pack(v)
    s = jnp.einsum('btd,bsd->bts', q_, k_) / (T ** 0.5)
    mask = jnp.tril(jnp.ones((T, T), jnp.float32))
    s = jnp.where(mask[None] == 0, jnp.float32(-2.0 ** 32 + 1), s)
    p = jax.nn.softmax(s, axis=2)
    o = jnp.einsum('bts,bsd->btd', p, v_)
    o = jnp.concatenate(jnp.split(o, n_heads, axis=0), axis=2)   # [N, T, F]
    y = jnp.einsum('ntf,gf->ntg', o, W_lin) + b_lin
    y = jnp.maximum(y, 0.0) + o
    if residual:
        y = y + ti
    return y


# ----------------------------------------------------------------------------
def _xavier_uniform(key, shape):
    fan_out, fan_in = shape[0], shape[1]
    limit = (6.0 / (fan_in + fan_out)) ** 0.5
    return jax.random.uniform(key, shape, jnp.float32, -limit, limit)


if __name__ == "__main__":
    # small shapes consistent with the module: inputs [N, T, F]
    N, T, F, H = 8, 8, 32, 4

    key = jax.random.PRNGKey(0)
    kx, kp, kq, kk, kv, kw, kb = jax.random.split(key, 7)

    x = jax.random.normal(kx, (N, T, F), jnp.float32)

    pos_emb = _xavier_uniform(kp, (T, F))
    Wq = _xavier_uniform(kq, (F, F))
    Wk = _xavier_uniform(kk, (F, F))
    Wv = _xavier_uniform(kv, (F, F))
    # nn.Linear(in_features, in_features): weight [out, in], bias [out]
    bound = 1.0 / (F ** 0.5)
    W_lin = jax.random.uniform(kw, (F, F), jnp.float32, -bound, bound)
    b_lin = jax.random.uniform(kb, (F,), jnp.float32, -bound, bound)

    for residual in (False, True):
        out = temporal_attention_layer(x, pos_emb, Wq, Wk, Wv, W_lin, b_lin,
                                       n_heads=H, residual=residual)
        out = jax.block_until_ready(out)
        ref = _reference(x, pos_emb, Wq, Wk, Wv, W_lin, b_lin,
                         n_heads=H, residual=residual)
        assert out.shape == (N, T, F)
        # approx reciprocal in the softmax denom -> slightly looser tolerance
        assert jnp.allclose(out, ref, atol=5e-3, rtol=5e-3), \
            float(jnp.max(jnp.abs(out - ref)))

    print("KERNEL_OK")
</pallas_src>

<mosaic_0001>
module attributes {stable_mosaic.version = 11 : i64} {
  func.func @_fused_temporal_attn_kernel(%arg0: i32, %arg1: memref<8x8x32xf32, #tpu.memory_space<vmem>>, %arg2: memref<8x32xf32, #tpu.memory_space<vmem>>, %arg3: memref<32x32xf32, #tpu.memory_space<vmem>>, %arg4: memref<32x32xf32, #tpu.memory_space<vmem>>, %arg5: memref<32x32xf32, #tpu.memory_space<vmem>>, %arg6: memref<32x32xf32, #tpu.memory_space<vmem>>, %arg7: memref<1x32xf32, #tpu.memory_space<vmem>>, %arg8: memref<8x8x32xf32, #tpu.memory_space<vmem>>) attributes {dimension_semantics = [#tpu.dimension_semantics<parallel>], iteration_bounds = array<i64: 1>, scalar_prefetch = 0 : i64, scratch_operands = 0 : i64, tpu.core_type = #tpu.core_type<tc>, window_params = [{transform_indices = @transform_0, window_bounds = array<i64: 8, 8, 32>}, {pipeline_mode = #tpu.pipeline_mode<synchronous>, transform_indices = @transform_1, window_bounds = array<i64: 8, 32>}, {pipeline_mode = #tpu.pipeline_mode<synchronous>, transform_indices = @transform_2, window_bounds = array<i64: 32, 32>}, {pipeline_mode = #tpu.pipeline_mode<synchronous>, transform_indices = @transform_3, window_bounds = array<i64: 32, 32>}, {pipeline_mode = #tpu.pipeline_mode<synchronous>, transform_indices = @transform_4, window_bounds = array<i64: 32, 32>}, {pipeline_mode = #tpu.pipeline_mode<synchronous>, transform_indices = @transform_5, window_bounds = array<i64: 32, 32>}, {pipeline_mode = #tpu.pipeline_mode<synchronous>, transform_indices = @transform_6, window_bounds = array<i64: 1, 32>}, {transform_indices = @transform_7, window_bounds = array<i64: 8, 8, 32>}]} {
    %c0 = arith.constant 0 : index
    %c0_0 = arith.constant 0 : index
    %c0_1 = arith.constant 0 : index
    %0 = vector.load %arg1[%c0, %c0_0, %c0_1] : memref<8x8x32xf32, #tpu.memory_space<vmem>>, vector<8x8x32xf32>
    %c0_2 = arith.constant 0 : index
    %c0_3 = arith.constant 0 : index
    %1 = vector.load %arg2[%c0_2, %c0_3] : memref<8x32xf32, #tpu.memory_space<vmem>>, vector<8x32xf32>
    %2 = vector.shape_cast %1 : vector<8x32xf32> to vector<1x8x32xf32>
    %3 = vector.broadcast %2 : vector<1x8x32xf32> to vector<8x8x32xf32>
    %4 = arith.addf %0, %3 : vector<8x8x32xf32>
    %c0_4 = arith.constant 0 : index
    %c0_5 = arith.constant 0 : index
    %5 = vector.load %arg3[%c0_4, %c0_5] : memref<32x32xf32, #tpu.memory_space<vmem>>, vector<32x32xf32>
    "tpu.trace_start"() <{level = 10 : i32, message = "ntf,fg->ntg"}> : () -> ()
    %cst = arith.constant dense<0.000000e+00> : vector<8x8x32xf32>
    %6 = tpu.matmul %4, %5, %cst {dimension_numbers = #tpu.dot_dimension_numbers<[2], [0], [0, 1], [1], [0, 0, 0, 1, 1, 1], [], []>} : vector<8x8x32xf32>, vector<32x32xf32>, vector<8x8x32xf32> -> vector<8x8x32xf32>
    "tpu.trace_stop"() : () -> ()
    %c0_6 = arith.constant 0 : index
    %c0_7 = arith.constant 0 : index
    %7 = vector.load %arg4[%c0_6, %c0_7] : memref<32x32xf32, #tpu.memory_space<vmem>>, vector<32x32xf32>
    "tpu.trace_start"() <{level = 10 : i32, message = "ntf,fg->ntg"}> : () -> ()
    %cst_8 = arith.constant dense<0.000000e+00> : vector<8x8x32xf32>
    %8 = tpu.matmul %4, %7, %cst_8 {dimension_numbers = #tpu.dot_dimension_numbers<[2], [0], [0, 1], [1], [0, 0, 0, 1, 1, 1], [], []>} : vector<8x8x32xf32>, vector<32x32xf32>, vector<8x8x32xf32> -> vector<8x8x32xf32>
    "tpu.trace_stop"() : () -> ()
    %c0_9 = arith.constant 0 : index
    %c0_10 = arith.constant 0 : index
    %9 = vector.load %arg5[%c0_9, %c0_10] : memref<32x32xf32, #tpu.memory_space<vmem>>, vector<32x32xf32>
    "tpu.trace_start"() <{level = 10 : i32, message = "ntf,fg->ntg"}> : () -> ()
    %cst_11 = arith.constant dense<0.000000e+00> : vector<8x8x32xf32>
    %10 = tpu.matmul %4, %9, %cst_11 {dimension_numbers = #tpu.dot_dimension_numbers<[2], [0], [0, 1], [1], [0, 0, 0, 1, 1, 1], [], []>} : vector<8x8x32xf32>, vector<32x32xf32>, vector<8x8x32xf32> -> vector<8x8x32xf32>
    "tpu.trace_stop"() : () -> ()
    %11 = tpu.iota {dimensions = array<i32: 0>} : vector<8x8xi32>
    %12 = tpu.iota {dimensions = array<i32: 1>} : vector<8x8xi32>
    %13 = arith.cmpi sgt, %12, %11 : vector<8x8xi32>
    %14 = vector.shape_cast %13 : vector<8x8xi1> to vector<1x8x8xi1>
    %15 = vector.extract_strided_slice %6 {offsets = [0, 0, 0], sizes = [8, 8, 8], strides = [1, 1, 1]} : vector<8x8x32xf32> to vector<8x8x8xf32>
    %16 = vector.extract_strided_slice %8 {offsets = [0, 0, 0], sizes = [8, 8, 8], strides = [1, 1, 1]} : vector<8x8x32xf32> to vector<8x8x8xf32>
    %17 = vector.extract_strided_slice %10 {offsets = [0, 0, 0], sizes = [8, 8, 8], strides = [1, 1, 1]} : vector<8x8x32xf32> to vector<8x8x8xf32>
    "tpu.trace_start"() <{level = 10 : i32, message = "ntd,nsd->nts"}> : () -> ()
    %cst_12 = arith.constant dense<0.000000e+00> : vector<8x8x8xf32>
    %18 = tpu.matmul %15, %16, %cst_12 {dimension_numbers = #tpu.dot_dimension_numbers<[2], [2], [1], [1], [0, 0, 0, 1, 1, 1], [0], [0]>} : vector<8x8x8xf32>, vector<8x8x8xf32>, vector<8x8x8xf32> -> vector<8x8x8xf32>
    "tpu.trace_stop"() : () -> ()
    %cst_13 = arith.constant 0.353553385 : f32
    %19 = vector.broadcast %cst_13 : f32 to vector<8x8x8xf32>
    %20 = arith.mulf %18, %19 : vector<8x8x8xf32>
    %cst_14 = arith.constant -4.2949673E+9 : f32
    %21 = vector.shape_cast %14 : vector<1x8x8xi1> to vector<1x8x8xi1>
    %22 = vector.broadcast %21 : vector<1x8x8xi1> to vector<8x8x8xi1>
    %23 = vector.broadcast %cst_14 : f32 to vector<8x8x8xf32>
    %24 = arith.select %22, %23, %20 : vector<8x8x8xi1>, vector<8x8x8xf32>
    %cst_15 = arith.constant dense<0xFF800000> : vector<8x8xf32>
    %25 = vector.multi_reduction <maximumf>, %24, %cst_15 [2] : vector<8x8x8xf32> to vector<8x8xf32>
    %26 = vector.shape_cast %25 : vector<8x8xf32> to vector<8x8x1xf32>
    %27 = vector.broadcast %26 : vector<8x8x1xf32> to vector<8x8x8xf32>
    %28 = arith.subf %24, %27 : vector<8x8x8xf32>
    %29 = math.exp %28 : vector<8x8x8xf32>
    %cst_16 = arith.constant dense<0.000000e+00> : vector<8x8xf32>
    %30 = vector.multi_reduction <add>, %29, %cst_16 [2] : vector<8x8x8xf32> to vector<8x8xf32>
    %31 = vector.shape_cast %30 : vector<8x8xf32> to vector<8x8x1xf32>
    %32 = tpu.reciprocal %31 {approx = true} : vector<8x8x1xf32> -> vector<8x8x1xf32>
    %33 = vector.broadcast %32 : vector<8x8x1xf32> to vector<8x8x8xf32>
    %34 = arith.mulf %29, %33 : vector<8x8x8xf32>
    "tpu.trace_start"() <{level = 10 : i32, message = "nts,nsd->ntd"}> : () -> ()
    %cst_17 = arith.constant dense<0.000000e+00> : vector<8x8x8xf32>
    %35 = tpu.matmul %34, %17, %cst_17 {dimension_numbers = #tpu.dot_dimension_numbers<[2], [1], [1], [2], [0, 0, 0, 1, 1, 2], [0], [0]>} : vector<8x8x8xf32>, vector<8x8x8xf32>, vector<8x8x8xf32> -> vector<8x8x8xf32>
    "tpu.trace_stop"() : () -> ()
    %36 = vector.extract_strided_slice %6 {offsets = [0, 0, 8], sizes = [8, 8, 8], strides = [1, 1, 1]} : vector<8x8x32xf32> to vector<8x8x8xf32>
    %37 = vector.extract_strided_slice %8 {offsets = [0, 0, 8], sizes = [8, 8, 8], strides = [1, 1, 1]} : vector<8x8x32xf32> to vector<8x8x8xf32>
    %38 = vector.extract_strided_slice %10 {offsets = [0, 0, 8], sizes = [8, 8, 8], strides = [1, 1, 1]} : vector<8x8x32xf32> to vector<8x8x8xf32>
    "tpu.trace_start"() <{level = 10 : i32, message = "ntd,nsd->nts"}> : () -> ()
    %cst_18 = arith.constant dense<0.000000e+00> : vector<8x8x8xf32>
    %39 = tpu.matmul %36, %37, %cst_18 {dimension_numbers = #tpu.dot_dimension_numbers<[2], [2], [1], [1], [0, 0, 0, 1, 1, 1], [0], [0]>} : vector<8x8x8xf32>, vector<8x8x8xf32>, vector<8x8x8xf32> -> vector<8x8x8xf32>
    "tpu.trace_stop"() : () -> ()
    %cst_19 = arith.constant 0.353553385 : f32
    %40 = vector.broadcast %cst_19 : f32 to vector<8x8x8xf32>
    %41 = arith.mulf %39, %40 : vector<8x8x8xf32>
    %cst_20 = arith.constant -4.2949673E+9 : f32
    %42 = vector.shape_cast %14 : vector<1x8x8xi1> to vector<1x8x8xi1>
    %43 = vector.broadcast %42 : vector<1x8x8xi1> to vector<8x8x8xi1>
    %44 = vector.broadcast %cst_20 : f32 to vector<8x8x8xf32>
    %45 = arith.select %43, %44, %41 : vector<8x8x8xi1>, vector<8x8x8xf32>
    %cst_21 = arith.constant dense<0xFF800000> : vector<8x8xf32>
    %46 = vector.multi_reduction <maximumf>, %45, %cst_21 [2] : vector<8x8x8xf32> to vector<8x8xf32>
    %47 = vector.shape_cast %46 : vector<8x8xf32> to vector<8x8x1xf32>
    %48 = vector.broadcast %47 : vector<8x8x1xf32> to vector<8x8x8xf32>
    %49 = arith.subf %45, %48 : vector<8x8x8xf32>
    %50 = math.exp %49 : vector<8x8x8xf32>
    %cst_22 = arith.constant dense<0.000000e+00> : vector<8x8xf32>
    %51 = vector.multi_reduction <add>, %50, %cst_22 [2] : vector<8x8x8xf32> to vector<8x8xf32>
    %52 = vector.shape_cast %51 : vector<8x8xf32> to vector<8x8x1xf32>
    %53 = tpu.reciprocal %52 {approx = true} : vector<8x8x1xf32> -> vector<8x8x1xf32>
    %54 = vector.broadcast %53 : vector<8x8x1xf32> to vector<8x8x8xf32>
    %55 = arith.mulf %50, %54 : vector<8x8x8xf32>
    "tpu.trace_start"() <{level = 10 : i32, message = "nts,nsd->ntd"}> : () -> ()
    %cst_23 = arith.constant dense<0.000000e+00> : vector<8x8x8xf32>
    %56 = tpu.matmul %55, %38, %cst_23 {dimension_numbers = #tpu.dot_dimension_numbers<[2], [1], [1], [2], [0, 0, 0, 1, 1, 2], [0], [0]>} : vector<8x8x8xf32>, vector<8x8x8xf32>, vector<8x8x8xf32> -> vector<8x8x8xf32>
    "tpu.trace_stop"() : () -> ()
    %57 = vector.extract_strided_slice %6 {offsets = [0, 0, 16], sizes = [8, 8, 8], strides = [1, 1, 1]} : vector<8x8x32xf32> to vector<8x8x8xf32>
    %58 = vector.extract_strided_slice %8 {offsets = [0, 0, 16], sizes = [8, 8, 8], strides = [1, 1, 1]} : vector<8x8x32xf32> to vector<8x8x8xf32>
    %59 = vector.extract_strided_slice %10 {offsets = [0, 0, 16], sizes = [8, 8, 8], strides = [1, 1, 1]} : vector<8x8x32xf32> to vector<8x8x8xf32>
    "tpu.trace_start"() <{level = 10 : i32, message = "ntd,nsd->nts"}> : () -> ()
    %cst_24 = arith.constant dense<0.000000e+00> : vector<8x8x8xf32>
    %60 = tpu.matmul %57, %58, %cst_24 {dimension_numbers = #tpu.dot_dimension_numbers<[2], [2], [1], [1], [0, 0, 0, 1, 1, 1], [0], [0]>} : vector<8x8x8xf32>, vector<8x8x8xf32>, vector<8x8x8xf32> -> vector<8x8x8xf32>
    "tpu.trace_stop"() : () -> ()
    %cst_25 = arith.constant 0.353553385 : f32
    %61 = vector.broadcast %cst_25 : f32 to vector<8x8x8xf32>
    %62 = arith.mulf %60, %61 : vector<8x8x8xf32>
    %cst_26 = arith.constant -4.2949673E+9 : f32
    %63 = vector.shape_cast %14 : vector<1x8x8xi1> to vector<1x8x8xi1>
    %64 = vector.broadcast %63 : vector<1x8x8xi1> to vector<8x8x8xi1>
    %65 = vector.broadcast %cst_26 : f32 to vector<8x8x8xf32>
    %66 = arith.select %64, %65, %62 : vector<8x8x8xi1>, vector<8x8x8xf32>
    %cst_27 = arith.constant dense<0xFF800000> : vector<8x8xf32>
    %67 = vector.multi_reduction <maximumf>, %66, %cst_27 [2] : vector<8x8x8xf32> to vector<8x8xf32>
    %68 = vector.shape_cast %67 : vector<8x8xf32> to vector<8x8x1xf32>
    %69 = vector.broadcast %68 : vector<8x8x1xf32> to vector<8x8x8xf32>
    %70 = arith.subf %66, %69 : vector<8x8x8xf32>
    %71 = math.exp %70 : vector<8x8x8xf32>
    %cst_28 = arith.constant dense<0.000000e+00> : vector<8x8xf32>
    %72 = vector.multi_reduction <add>, %71, %cst_28 [2] : vector<8x8x8xf32> to vector<8x8xf32>
    %73 = vector.shape_cast %72 : vector<8x8xf32> to vector<8x8x1xf32>
    %74 = tpu.reciprocal %73 {approx = true} : vector<8x8x1xf32> -> vector<8x8x1xf32>
    %75 = vector.broadcast %74 : vector<8x8x1xf32> to vector<8x8x8xf32>
    %76 = arith.mulf %71, %75 : vector<8x8x8xf32>
    "tpu.trace_start"() <{level = 10 : i32, message = "nts,nsd->ntd"}> : () -> ()
    %cst_29 = arith.constant dense<0.000000e+00> : vector<8x8x8xf32>
    %77 = tpu.matmul %76, %59, %cst_29 {dimension_numbers = #tpu.dot_dimension_numbers<[2], [1], [1], [2], [0, 0, 0, 1, 1, 2], [0], [0]>} : vector<8x8x8xf32>, vector<8x8x8xf32>, vector<8x8x8xf32> -> vector<8x8x8xf32>
    "tpu.trace_stop"() : () -> ()
    %78 = vector.extract_strided_slice %6 {offsets = [0, 0, 24], sizes = [8, 8, 8], strides = [1, 1, 1]} : vector<8x8x32xf32> to vector<8x8x8xf32>
    %79 = vector.extract_strided_slice %8 {offsets = [0, 0, 24], sizes = [8, 8, 8], strides = [1, 1, 1]} : vector<8x8x32xf32> to vector<8x8x8xf32>
    %80 = vector.extract_strided_slice %10 {offsets = [0, 0, 24], sizes = [8, 8, 8], strides = [1, 1, 1]} : vector<8x8x32xf32> to vector<8x8x8xf32>
    "tpu.trace_start"() <{level = 10 : i32, message = "ntd,nsd->nts"}> : () -> ()
    %cst_30 = arith.constant dense<0.000000e+00> : vector<8x8x8xf32>
    %81 = tpu.matmul %78, %79, %cst_30 {dimension_numbers = #tpu.dot_dimension_numbers<[2], [2], [1], [1], [0, 0, 0, 1, 1, 1], [0], [0]>} : vector<8x8x8xf32>, vector<8x8x8xf32>, vector<8x8x8xf32> -> vector<8x8x8xf32>
    "tpu.trace_stop"() : () -> ()
    %cst_31 = arith.constant 0.353553385 : f32
    %82 = vector.broadcast %cst_31 : f32 to vector<8x8x8xf32>
    %83 = arith.mulf %81, %82 : vector<8x8x8xf32>
    %cst_32 = arith.constant -4.2949673E+9 : f32
    %84 = vector.shape_cast %14 : vector<1x8x8xi1> to vector<1x8x8xi1>
    %85 = vector.broadcast %84 : vector<1x8x8xi1> to vector<8x8x8xi1>
    %86 = vector.broadcast %cst_32 : f32 to vector<8x8x8xf32>
    %87 = arith.select %85, %86, %83 : vector<8x8x8xi1>, vector<8x8x8xf32>
    %cst_33 = arith.constant dense<0xFF800000> : vector<8x8xf32>
    %88 = vector.multi_reduction <maximumf>, %87, %cst_33 [2] : vector<8x8x8xf32> to vector<8x8xf32>
    %89 = vector.shape_cast %88 : vector<8x8xf32> to vector<8x8x1xf32>
    %90 = vector.broadcast %89 : vector<8x8x1xf32> to vector<8x8x8xf32>
    %91 = arith.subf %87, %90 : vector<8x8x8xf32>
    %92 = math.exp %91 : vector<8x8x8xf32>
    %cst_34 = arith.constant dense<0.000000e+00> : vector<8x8xf32>
    %93 = vector.multi_reduction <add>, %92, %cst_34 [2] : vector<8x8x8xf32> to vector<8x8xf32>
    %94 = vector.shape_cast %93 : vector<8x8xf32> to vector<8x8x1xf32>
    %95 = tpu.reciprocal %94 {approx = true} : vector<8x8x1xf32> -> vector<8x8x1xf32>
    %96 = vector.broadcast %95 : vector<8x8x1xf32> to vector<8x8x8xf32>
    %97 = arith.mulf %92, %96 : vector<8x8x8xf32>
    "tpu.trace_start"() <{level = 10 : i32, message = "nts,nsd->ntd"}> : () -> ()
    %cst_35 = arith.constant dense<0.000000e+00> : vector<8x8x8xf32>
    %98 = tpu.matmul %97, %80, %cst_35 {dimension_numbers = #tpu.dot_dimension_numbers<[2], [1], [1], [2], [0, 0, 0, 1, 1, 2], [0], [0]>} : vector<8x8x8xf32>, vector<8x8x8xf32>, vector<8x8x8xf32> -> vector<8x8x8xf32>
    "tpu.trace_stop"() : () -> ()
    %99 = tpu.concatenate %35, %56, %77, %98 in 2 : vector<8x8x8xf32>, vector<8x8x8xf32>, vector<8x8x8xf32>, vector<8x8x8xf32> -> vector<8x8x32xf32>
    %c0_36 = arith.constant 0 : index
    %c0_37 = arith.constant 0 : index
    %100 = vector.load %arg6[%c0_36, %c0_37] : memref<32x32xf32, #tpu.memory_space<vmem>>, vector<32x32xf32>
    "tpu.trace_start"() <{level = 10 : i32, message = "ntf,fg->ntg"}> : () -> ()
    %cst_38 = arith.constant dense<0.000000e+00> : vector<8x8x32xf32>
    %101 = tpu.matmul %99, %100, %cst_38 {dimension_numbers = #tpu.dot_dimension_numbers<[2], [0], [0, 1], [1], [0, 0, 0, 1, 1, 1], [], []>} : vector<8x8x32xf32>, vector<32x32xf32>, vector<8x8x32xf32> -> vector<8x8x32xf32>
    "tpu.trace_stop"() : () -> ()
    %c0_39 = arith.constant 0 : index
    %c0_40 = arith.constant 0 : index
    %102 = vector.load %arg7[%c0_39, %c0_40] : memref<1x32xf32, #tpu.memory_space<vmem>>, vector<1x32xf32>
    %103 = vector.shape_cast %102 : vector<1x32xf32> to vector<1x1x32xf32>
    %104 = vector.broadcast %103 : vector<1x1x32xf32> to vector<8x8x32xf32>
    %105 = arith.addf %101, %104 : vector<8x8x32xf32>
    %cst_41 = arith.constant 0.000000e+00 : f32
    %106 = vector.broadcast %cst_41 : f32 to vector<8x8x32xf32>
    %107 = arith.maximumf %105, %106 : vector<8x8x32xf32>
    %108 = arith.addf %107, %99 : vector<8x8x32xf32>
    %c0_42 = arith.constant 0 : index
    %c0_43 = arith.constant 0 : index
    %c0_44 = arith.constant 0 : index
    %109 = vector.load %arg8[%c0_42, %c0_43, %c0_44] : memref<8x8x32xf32, #tpu.memory_space<vmem>>, vector<8x8x32xf32>
    tpu.vector_store %arg8[%c0_42, %c0_43, %c0_44], %108 {strides = array<i32>} : memref<8x8x32xf32, #tpu.memory_space<vmem>>, vector<8x8x32xf32>,
    return
  }
  func.func @transform_0(%arg0: i32) -> (i32, i32, i32) {
    %c0_i32 = arith.constant 0 : i32
    %c0_i32_0 = arith.constant 0 : i32
    %c0_i32_1 = arith.constant 0 : i32
    return %arg0, %c0_i32, %c0_i32_0 : i32, i32, i32
  }
  func.func @transform_1(%arg0: i32) -> (i32, i32) {
    %c0_i32 = arith.constant 0 : i32
    %c0_i32_0 = arith.constant 0 : i32
    %c0_i32_1 = arith.constant 0 : i32
    return %c0_i32, %c0_i32_0 : i32, i32
  }
  func.func @transform_2(%arg0: i32) -> (i32, i32) {
    %c0_i32 = arith.constant 0 : i32
    %c0_i32_0 = arith.constant 0 : i32
    %c0_i32_1 = arith.constant 0 : i32
    return %c0_i32, %c0_i32_0 : i32, i32
  }
  func.func @transform_3(%arg0: i32) -> (i32, i32) {
    %c0_i32 = arith.constant 0 : i32
    %c0_i32_0 = arith.constant 0 : i32
    %c0_i32_1 = arith.constant 0 : i32
    return %c0_i32, %c0_i32_0 : i32, i32
  }
  func.func @transform_4(%arg0: i32) -> (i32, i32) {
    %c0_i32 = arith.constant 0 : i32
    %c0_i32_0 = arith.constant 0 : i32
    %c0_i32_1 = arith.constant 0 : i32
    return %c0_i32, %c0_i32_0 : i32, i32
  }
  func.func @transform_5(%arg0: i32) -> (i32, i32) {
    %c0_i32 = arith.constant 0 : i32
    %c0_i32_0 = arith.constant 0 : i32
    %c0_i32_1 = arith.constant 0 : i32
    return %c0_i32, %c0_i32_0 : i32, i32
  }
  func.func @transform_6(%arg0: i32) -> (i32, i32) {
    %c0_i32 = arith.constant 0 : i32
    %c0_i32_0 = arith.constant 0 : i32
    %c0_i32_1 = arith.constant 0 : i32
    return %c0_i32, %c0_i32_0 : i32, i32
  }
  func.func @transform_7(%arg0: i32) -> (i32, i32, i32) {
    %c0_i32 = arith.constant 0 : i32
    %c0_i32_0 = arith.constant 0 : i32
    %c0_i32_1 = arith.constant 0 : i32
    return %arg0, %c0_i32, %c0_i32_0 : i32, i32, i32
  }
}

</mosaic_0001>

<llo_original>
// kernel: tpu_custom_call.1
$region0: #{tpu_custom_call.1}
  #allocation0 [shape = 'u32[]', space=smem, size = 0x4, offset = 0x4, fixed_abs, tag = 'smem constant byte address 0x4 - core index']
  #allocation1 [shape = 'u32[144,128]{1,0:T(1,128)}', space=vmem, size = 0x12000, scoped, tag = 'internal scratch']
  %s0 = inlined_call_operand.hbm [shape: f32[8,8,32], index: 0, kind: input, shape index: {}]
  %s1 = inlined_call_operand.hbm [shape: f32[8,32], index: 1, kind: input, shape index: {}]
  %s2 = inlined_call_operand.hbm [shape: f32[32,32], index: 2, kind: input, shape index: {}]
  %s3 = inlined_call_operand.hbm [shape: f32[32,32], index: 3, kind: input, shape index: {}]
  %s4 = inlined_call_operand.hbm [shape: f32[32,32], index: 4, kind: input, shape index: {}]
  %s5 = inlined_call_operand.hbm [shape: f32[32,32], index: 5, kind: input, shape index: {}]
  %s6 = inlined_call_operand.vmem [shape: f32[1,32], index: 6, kind: input, shape index: {}]
  %s7 = inlined_call_operand.hbm [shape: f32[8,8,32], index: 7, kind: output, shape index: {}]
  %s8 = sld [smem:[#allocation0]]
  $region62: #{tpu_custom_call.1} parent=0
    _
  %s10 = ssub.s32 1, %s8
  %s11 = scalar_select 0, %s10, %s8
  $region1: #{tpu_custom_call.1} parent=0
    #allocation2 [shape = 'u8[32768]{0}', space=vmem, size = 0x8000, scoped, tag = 'input window, operand 0, single buffered']
    #allocation3 [shape = 's32[1]{0}', space=sflag, size = 0x4, scoped, tag = 'scoped memory for tpu_custom_call.1']
    #allocation4 [shape = 's32[1]{0}', space=sflag, size = 0x4, scoped, tag = 'scoped memory for tpu_custom_call.1']
    #allocation5 [shape = 'u8[4096]{0}', space=vmem, size = 0x1000, scoped, tag = 'input window, operand 1, single buffered']
    #allocation6 [shape = 's32[1]{0}', space=sflag, size = 0x4, scoped, tag = 'scoped memory for tpu_custom_call.1']
    #allocation7 [shape = 'u8[16384]{0}', space=vmem, size = 0x4000, scoped, tag = 'input window, operand 2, single buffered']
    #allocation8 [shape = 'u8[16384]{0}', space=vmem, size = 0x4000, scoped, tag = 'input window, operand 3, single buffered']
    #allocation9 [shape = 's32[1]{0}', space=sflag, size = 0x4, scoped, tag = 'scoped memory for tpu_custom_call.1']
    #allocation10 [shape = 'u8[16384]{0}', space=vmem, size = 0x4000, scoped, tag = 'input window, operand 4, single buffered']
    #allocation11 [shape = 'u8[16384]{0}', space=vmem, size = 0x4000, scoped, tag = 'input window, operand 5, single buffered']
    #allocation12 [shape = 's32[1]{0}', space=sflag, size = 0x4, scoped, tag = 'scoped memory for tpu_custom_call.1']
    #allocation13 [shape = 'u8[32768]{0}', space=vmem, size = 0x8000, scoped, tag = 'output window, operand 0, single buffered']
    %12 = vsyncpa [#allocation3], 0
    %13 = vsyncpa [#allocation6], 0
    %14 = vsyncpa [#allocation9], 0
    %15 = vsyncpa [#allocation12], 0
    %16 = vsyncpa [#allocation4], 0
    // Predicated region
    $region2: #{tpu_custom_call.1} parent=1 // pred_check
      _
    $region3: #{tpu_custom_call.1} parent=1 // pred_check_branch
      %18 = sbr.rel (0) target = $region5
    $region4: #{tpu_custom_call.1} parent=1 // pred_region
      %s20 = ssub.s32 1024, 1024
      %21 = vsyncadd [#allocation3], %s20
      %s22 = sshll.u32 [#allocation2], 4
      %s23 = int_to_ptr.vmem [resolvable:$true] %s22
      %28 = dma.hbm_to_vmem [thread:$0]  %s0, 1024, %s23, [#allocation3], 128, 128, 8
    $region5: #{tpu_custom_call.1} parent=1 // pred_fallthru
      _
    // Predicated region
    $region6: #{tpu_custom_call.1} parent=1 // pred_check
      _
    $region7: #{tpu_custom_call.1} parent=1 // pred_check_branch
      %30 = sbr.rel (0) target = $region9
    $region8: #{tpu_custom_call.1} parent=1 // pred_region
      %s32 = ssub.s32 128, 128
      %33 = vsyncadd [#allocation6], %s32
      %s35 = sshll.u32 [#allocation5], 4
      %s36 = int_to_ptr.vmem [resolvable:$true] %s35
      %38 = dma.hbm_to_vmem [thread:$0]  %s1, 128, %s36, [#allocation6]
    $region9: #{tpu_custom_call.1} parent=1 // pred_fallthru
      _
    // Predicated region
    $region10: #{tpu_custom_call.1} parent=1 // pred_check
      _
    $region11: #{tpu_custom_call.1} parent=1 // pred_check_branch
      %40 = sbr.rel (0) target = $region13
    $region12: #{tpu_custom_call.1} parent=1 // pred_region
      %s42 = ssub.s32 512, 512
      %43 = vsyncadd [#allocation6], %s42
      %s44 = sshll.u32 [#allocation7], 4
      %s45 = int_to_ptr.vmem [resolvable:$true] %s44
      %50 = dma.hbm_to_vmem [thread:$0]  %s2, 512, %s45, [#allocation6], 128, 128, 8
    $region13: #{tpu_custom_call.1} parent=1 // pred_fallthru
      _
    // Predicated region
    $region14: #{tpu_custom_call.1} parent=1 // pred_check
      _
    $region15: #{tpu_custom_call.1} parent=1 // pred_check_branch
      %52 = sbr.rel (0) target = $region17
    $region16: #{tpu_custom_call.1} parent=1 // pred_region
      %s54 = ssub.s32 512, 512
      %55 = vsyncadd [#allocation9], %s54
      %s56 = sshll.u32 [#allocation8], 4
      %s57 = int_to_ptr.vmem [resolvable:$true] %s56
      %62 = dma.hbm_to_vmem [thread:$0]  %s3, 512, %s57, [#allocation9], 128, 128, 8
    $region17: #{tpu_custom_call.1} parent=1 // pred_fallthru
      _
    // Predicated region
    $region18: #{tpu_custom_call.1} parent=1 // pred_check
      _
    $region19: #{tpu_custom_call.1} parent=1 // pred_check_branch
      %64 = sbr.rel (0) target = $region21
    $region20: #{tpu_custom_call.1} parent=1 // pred_region
      %s66 = ssub.s32 512, 512
      %67 = vsyncadd [#allocation9], %s66
      %s68 = sshll.u32 [#allocation10], 4
      %s69 = int_to_ptr.vmem [resolvable:$true] %s68
      %74 = dma.hbm_to_vmem [thread:$0]  %s4, 512, %s69, [#allocation9], 128, 128, 8
    $region21: #{tpu_custom_call.1} parent=1 // pred_fallthru
      _
    // Predicated region
    $region22: #{tpu_custom_call.1} parent=1 // pred_check
      _
    $region23: #{tpu_custom_call.1} parent=1 // pred_check_branch
      %76 = sbr.rel (0) target = $region25
    $region24: #{tpu_custom_call.1} parent=1 // pred_region
      %s78 = ssub.s32 512, 512
      %79 = vsyncadd [#allocation12], %s78
      %s80 = sshll.u32 [#allocation11], 4
      %s81 = int_to_ptr.vmem [resolvable:$true] %s80
      %86 = dma.hbm_to_vmem [thread:$0]  %s5, 512, %s81, [#allocation12], 128, 128, 8
    $region25: #{tpu_custom_call.1} parent=1 // pred_fallthru
      _
    // Predicated region
    $region26: #{tpu_custom_call.1} parent=1 // pred_check
      _
    $region27: #{tpu_custom_call.1} parent=1 // pred_check_branch
      %88 = sbr.rel (0) target = $region29
    $region28: #{tpu_custom_call.1} parent=1 // pred_region
      _
    $region29: #{tpu_custom_call.1} parent=1 // pred_fallthru
      _
    // Predicated region
    $region30: #{tpu_custom_call.1} parent=1 // pred_check
      _
    $region31: #{tpu_custom_call.1} parent=1 // pred_check_branch
      %90 = sbr.rel (0) target = $region33
    $region32: #{tpu_custom_call.1} parent=1 // pred_region
      %91 = dma.done [#allocation3], 1024
    $region33: #{tpu_custom_call.1} parent=1 // pred_fallthru
      _
    // Predicated region
    $region34: #{tpu_custom_call.1} parent=1 // pred_check
      _
    $region35: #{tpu_custom_call.1} parent=1 // pred_check_branch
      %93 = sbr.rel (0) target = $region37
    $region36: #{tpu_custom_call.1} parent=1 // pred_region
      %94 = dma.done [#allocation6], 128
    $region37: #{tpu_custom_call.1} parent=1 // pred_fallthru
      _
    // Predicated region
    $region38: #{tpu_custom_call.1} parent=1 // pred_check
      _
    $region39: #{tpu_custom_call.1} parent=1 // pred_check_branch
      %96 = sbr.rel (0) target = $region41
    $region40: #{tpu_custom_call.1} parent=1 // pred_region
      %97 = dma.done [#allocation6], 512
    $region41: #{tpu_custom_call.1} parent=1 // pred_fallthru
      _
    // Predicated region
    $region42: #{tpu_custom_call.1} parent=1 // pred_check
      _
    $region43: #{tpu_custom_call.1} parent=1 // pred_check_branch
      %99 = sbr.rel (0) target = $region45
    $region44: #{tpu_custom_call.1} parent=1 // pred_region
      %100 = dma.done [#allocation9], 512
    $region45: #{tpu_custom_call.1} parent=1 // pred_fallthru
      _
    // Predicated region
    $region46: #{tpu_custom_call.1} parent=1 // pred_check
      _
    $region47: #{tpu_custom_call.1} parent=1 // pred_check_branch
      %102 = sbr.rel (0) target = $region49
    $region48: #{tpu_custom_call.1} parent=1 // pred_region
      %103 = dma.done [#allocation9], 512
    $region49: #{tpu_custom_call.1} parent=1 // pred_fallthru
      _
    // Predicated region
    $region50: #{tpu_custom_call.1} parent=1 // pred_check
      _
    $region51: #{tpu_custom_call.1} parent=1 // pred_check_branch
      %105 = sbr.rel (0) target = $region53
    $region52: #{tpu_custom_call.1} parent=1 // pred_region
      %106 = dma.done [#allocation12], 512
    $region53: #{tpu_custom_call.1} parent=1 // pred_fallthru
      _
    %v107 = vld [vmem:[#allocation2] sm:$0xff]
    %v108 = vld [vmem:[#allocation2 + $0x8] sm:$0xff]
    %v109 = vld [vmem:[#allocation2 + $0x10] sm:$0xff]
    %v110 = vld [vmem:[#allocation2 + $0x18] sm:$0xff]
    %v111 = vld [vmem:[#allocation2 + $0x20] sm:$0xff]
    %v112 = vld [vmem:[#allocation2 + $0x28] sm:$0xff]
    %v113 = vld [vmem:[#allocation2 + $0x30] sm:$0xff]
    %v114 = vld [vmem:[#allocation2 + $0x38] sm:$0xff]
    %v115 = vld [vmem:[#allocation5] sm:$0xff]
    %v116 = vadd.f32 %v107, %v115
    %v117 = vadd.f32 %v108, %v115
    %v118 = vadd.f32 %v109, %v115
    %v119 = vadd.f32 %v110, %v115
    %v120 = vadd.f32 %v111, %v115
    %v121 = vadd.f32 %v112, %v115
    %v122 = vadd.f32 %v113, %v115
    %v123 = vadd.f32 %v114, %v115
    %v124 = vld [vmem:[#allocation7] sm:$0xff]
    %v125 = vld [vmem:[#allocation7 + $0x8] sm:$0xff]
    %v126 = vld [vmem:[#allocation7 + $0x10] sm:$0xff]
    %v127 = vld [vmem:[#allocation7 + $0x18] sm:$0xff]
    %vm128 = vcmask 261120
    %v130 = vsel %vm128, %v116, 0
    %v133 = vsel %vm128, %v117, 0
    %v136 = vsel %vm128, %v118, 0
    %v139 = vsel %vm128, %v119, 0
    %v142 = vsel %vm128, %v120, 0
    %v145 = vsel %vm128, %v121, 0
    %v148 = vsel %vm128, %v122, 0
    %v151 = vsel %vm128, %v123, 0
    %153 = vmatprep.subr.mxu0 0.0
    %154 = vmatpush1.msra.mxu0 %v124
    %155 = vmatprep.subr.mxu0 0.0
    %156 = vmatpush1.msra.mxu0 %v125
    %157 = vmatprep.subr.mxu0 0.0
    %158 = vmatpush1.msra.mxu0 %v126
    %159 = vmatprep.subr.mxu0 0.0
    %160 = vmatpush1.msra.mxu0 %v127
    %161 = vmatprep.subr.mxu0 0.0
    %162 = vmatpush1.msra.mxu0 0.0
    %163 = vmatprep.subr.mxu0 0.0
    %164 = vmatpush1.msra.mxu0 0.0
    %165 = vmatprep.subr.mxu0 0.0
    %166 = vmatpush1.msra.mxu0 0.0
    %167 = vmatprep.subr.mxu0 0.0
    %168 = vmatpush1.msra.mxu0 0.0
    %169 = vmatprep.subr.mxu0 0.0
    %170 = vmatpush1.msra.mxu0 0.0
    %171 = vmatprep.subr.mxu0 0.0
    %172 = vmatpush1.msra.mxu0 0.0
    %173 = vmatprep.subr.mxu0 0.0
    %174 = vmatpush1.msra.mxu0 0.0
    %175 = vmatprep.subr.mxu0 0.0
    %176 = vmatpush1.msra.mxu0 0.0
    %177 = vmatprep.subr.mxu0 0.0
    %178 = vmatpush1.msra.mxu0 0.0
    %179 = vmatprep.subr.mxu0 0.0
    %180 = vmatpush1.msra.mxu0 0.0
    %181 = vmatprep.subr.mxu0 0.0
    %182 = vmatpush1.msra.mxu0 0.0
    %183 = vmatprep.subr.mxu0 0.0
    %184 = vmatpush1.msra.mxu0 0.0
    %185 = vmatprep.subr.mxu0 0.0
    %186 = vmatpush1.msra.mxu0 0.0
    %187 = vmatprep.subr.mxu0 0.0
    %188 = vmatpush1.msra.mxu0 0.0
    %189 = vmatprep.subr.mxu0 0.0
    %190 = vmatpush1.msra.mxu0 0.0
    %191 = vmatprep.subr.mxu0 0.0
    %192 = vmatpush1.msra.mxu0 0.0
    %193 = vmatprep.subr.mxu0 0.0
    %194 = vmatpush1.msra.mxu0 0.0
    %195 = vmatprep.subr.mxu0 0.0
    %196 = vmatpush1.msra.mxu0 0.0
    %197 = vmatprep.subr.mxu0 0.0
    %198 = vmatpush1.msra.mxu0 0.0
    %199 = vmatprep.subr.mxu0 0.0
    %200 = vmatpush1.msra.mxu0 0.0
    %201 = vmatprep.subr.mxu0 0.0
    %202 = vmatpush1.msra.mxu0 0.0
    %203 = vmatprep.subr.mxu0 0.0
    %204 = vmatpush1.msra.mxu0 0.0
    %205 = vmatprep.subr.mxu0 0.0
    %206 = vmatpush1.msra.mxu0 0.0
    %207 = vmatprep.subr.mxu0 0.0
    %208 = vmatpush1.msra.mxu0 0.0
    %209 = vmatprep.subr.mxu0 0.0
    %210 = vmatpush1.msra.mxu0 0.0
    %211 = vmatprep.subr.mxu0 0.0
    %212 = vmatpush1.msra.mxu0 0.0
    %213 = vmatprep.subr.mxu0 0.0
    %214 = vmatpush1.msra.mxu0 0.0
    %215 = vmatprep.subr.mxu0 0.0
    %216 = vmatpush1.msra.mxu0 0.0
    %217 = vmatprep.mubr.f32.mxu0 0.0
    %218 = vmatmul.mubr.f32.gmra.mrb[0].mxu0 %v130
    %v219 = vpop.f32.mrb[0].mxu0
    %v220 = vadd.f32 0.0, %v219
    %v221 = vpop.f32.mrb[0].mxu0
    %222 = vmatprep.mubr.f32.mxu0 0.0
    %223 = vmatmul.mubr.f32.gmra.mrb[0].mxu0 %v133
    %v224 = vpop.f32.mrb[0].mxu0
    %v225 = vadd.f32 0.0, %v224
    %v226 = vpop.f32.mrb[0].mxu0
    %227 = vmatprep.mubr.f32.mxu0 0.0
    %228 = vmatmul.mubr.f32.gmra.mrb[0].mxu0 %v136
    %v229 = vpop.f32.mrb[0].mxu0
    %v230 = vadd.f32 0.0, %v229
    %v231 = vpop.f32.mrb[0].mxu0
    %232 = vmatprep.mubr.f32.mxu0 0.0
    %233 = vmatmul.mubr.f32.gmra.mrb[0].mxu0 %v139
    %v234 = vpop.f32.mrb[0].mxu0
    %v235 = vadd.f32 0.0, %v234
    %v236 = vpop.f32.mrb[0].mxu0
    %237 = vmatprep.mubr.f32.mxu0 0.0
    %238 = vmatmul.mubr.f32.gmra.mrb[0].mxu0 %v142
    %v239 = vpop.f32.mrb[0].mxu0
    %v240 = vadd.f32 0.0, %v239
    %v241 = vpop.f32.mrb[0].mxu0
    %242 = vmatprep.mubr.f32.mxu0 0.0
    %243 = vmatmul.mubr.f32.gmra.mrb[0].mxu0 %v145
    %v244 = vpop.f32.mrb[0].mxu0
    %v245 = vadd.f32 0.0, %v244
    %v246 = vpop.f32.mrb[0].mxu0
    %247 = vmatprep.mubr.f32.mxu0 0.0
    %248 = vmatmul.mubr.f32.gmra.mrb[0].mxu0 %v148
    %v249 = vpop.f32.mrb[0].mxu0
    %v250 = vadd.f32 0.0, %v249
    %v251 = vpop.f32.mrb[0].mxu0
    %252 = vmatprep.mubr.f32.mxu0 0.0
    %253 = vmatmul.mubr.f32.gmra.mrb[0].mxu0 %v151
    %v254 = vpop.f32.mrb[0].mxu0
    %v255 = vadd.f32 0.0, %v254
    %v256 = vpop.f32.mrb[0].mxu0
    %257 = vdwg.mxu0
    %v258 = vld [vmem:[#allocation8] sm:$0xff]
    %v259 = vld [vmem:[#allocation8 + $0x8] sm:$0xff]
    %v260 = vld [vmem:[#allocation8 + $0x10] sm:$0xff]
    %v261 = vld [vmem:[#allocation8 + $0x18] sm:$0xff]
    %262 = vmatprep.subr.mxu0 0.0
    %263 = vmatpush1.msra.mxu0 %v258
    %264 = vmatprep.subr.mxu0 0.0
    %265 = vmatpush1.msra.mxu0 %v259
    %266 = vmatprep.subr.mxu0 0.0
    %267 = vmatpush1.msra.mxu0 %v260
    %268 = vmatprep.subr.mxu0 0.0
    %269 = vmatpush1.msra.mxu0 %v261
    %270 = vmatprep.subr.mxu0 0.0
    %271 = vmatpush1.msra.mxu0 0.0
    %272 = vmatprep.subr.mxu0 0.0
    %273 = vmatpush1.msra.mxu0 0.0
    %274 = vmatprep.subr.mxu0 0.0
    %275 = vmatpush1.msra.mxu0 0.0
    %276 = vmatprep.subr.mxu0 0.0
    %277 = vmatpush1.msra.mxu0 0.0
    %278 = vmatprep.subr.mxu0 0.0
    %279 = vmatpush1.msra.mxu0 0.0
    %280 = vmatprep.subr.mxu0 0.0
    %281 = vmatpush1.msra.mxu0 0.0
    %282 = vmatprep.subr.mxu0 0.0
    %283 = vmatpush1.msra.mxu0 0.0
    %284 = vmatprep.subr.mxu0 0.0
    %285 = vmatpush1.msra.mxu0 0.0
    %286 = vmatprep.subr.mxu0 0.0
    %287 = vmatpush1.msra.mxu0 0.0
    %288 = vmatprep.subr.mxu0 0.0
    %289 = vmatpush1.msra.mxu0 0.0
    %290 = vmatprep.subr.mxu0 0.0
    %291 = vmatpush1.msra.mxu0 0.0
    %292 = vmatprep.subr.mxu0 0.0
    %293 = vmatpush1.msra.mxu0 0.0
    %294 = vmatprep.subr.mxu0 0.0
    %295 = vmatpush1.msra.mxu0 0.0
    %296 = vmatprep.subr.mxu0 0.0
    %297 = vmatpush1.msra.mxu0 0.0
    %298 = vmatprep.subr.mxu0 0.0
    %299 = vmatpush1.msra.mxu0 0.0
    %300 = vmatprep.subr.mxu0 0.0
    %301 = vmatpush1.msra.mxu0 0.0
    %302 = vmatprep.subr.mxu0 0.0
    %303 = vmatpush1.msra.mxu0 0.0
    %304 = vmatprep.subr.mxu0 0.0
    %305 = vmatpush1.msra.mxu0 0.0
    %306 = vmatprep.subr.mxu0 0.0
    %307 = vmatpush1.msra.mxu0 0.0
    %308 = vmatprep.subr.mxu0 0.0
    %309 = vmatpush1.msra.mxu0 0.0
    %310 = vmatprep.subr.mxu0 0.0
    %311 = vmatpush1.msra.mxu0 0.0
    %312 = vmatprep.subr.mxu0 0.0
    %313 = vmatpush1.msra.mxu0 0.0
    %314 = vmatprep.subr.mxu0 0.0
    %315 = vmatpush1.msra.mxu0 0.0
    %316 = vmatprep.subr.mxu0 0.0
    %317 = vmatpush1.msra.mxu0 0.0
    %318 = vmatprep.subr.mxu0 0.0
    %319 = vmatpush1.msra.mxu0 0.0
    %320 = vmatprep.subr.mxu0 0.0
    %321 = vmatpush1.msra.mxu0 0.0
    %322 = vmatprep.subr.mxu0 0.0
    %323 = vmatpush1.msra.mxu0 0.0
    %324 = vmatprep.subr.mxu0 0.0
    %325 = vmatpush1.msra.mxu0 0.0
    %326 = vmatprep.mubr.f32.mxu0 0.0
    %327 = vmatmul.mubr.f32.gmra.mrb[0].mxu0 %v130
    %v328 = vpop.f32.mrb[0].mxu0
    %v329 = vadd.f32 0.0, %v328
    %v330 = vpop.f32.mrb[0].mxu0
    %331 = vmatprep.mubr.f32.mxu0 0.0
    %332 = vmatmul.mubr.f32.gmra.mrb[0].mxu0 %v133
    %v333 = vpop.f32.mrb[0].mxu0
    %v334 = vadd.f32 0.0, %v333
    %v335 = vpop.f32.mrb[0].mxu0
    %336 = vmatprep.mubr.f32.mxu0 0.0
    %337 = vmatmul.mubr.f32.gmra.mrb[0].mxu0 %v136
    %v338 = vpop.f32.mrb[0].mxu0
    %v339 = vadd.f32 0.0, %v338
    %v340 = vpop.f32.mrb[0].mxu0
    %341 = vmatprep.mubr.f32.mxu0 0.0
    %342 = vmatmul.mubr.f32.gmra.mrb[0].mxu0 %v139
    %v343 = vpop.f32.mrb[0].mxu0
    %v344 = vadd.f32 0.0, %v343
    %v345 = vpop.f32.mrb[0].mxu0
    %346 = vmatprep.mubr.f32.mxu0 0.0
    %347 = vmatmul.mubr.f32.gmra.mrb[0].mxu0 %v142
    %v348 = vpop.f32.mrb[0].mxu0
    %v349 = vadd.f32 0.0, %v348
    %v350 = vpop.f32.mrb[0].mxu0
    %351 = vmatprep.mubr.f32.mxu0 0.0
    %352 = vmatmul.mubr.f32.gmra.mrb[0].mxu0 %v145
    %v353 = vpop.f32.mrb[0].mxu0
    %v354 = vadd.f32 0.0, %v353
    %v355 = vpop.f32.mrb[0].mxu0
    %356 = vmatprep.mubr.f32.mxu0 0.0
    %357 = vmatmul.mubr.f32.gmra.mrb[0].mxu0 %v148
    %v358 = vpop.f32.mrb[0].mxu0
    %v359 = vadd.f32 0.0, %v358
    %v360 = vpop.f32.mrb[0].mxu0
    %361 = vmatprep.mubr.f32.mxu0 0.0
    %362 = vmatmul.mubr.f32.gmra.mrb[0].mxu0 %v151
    %v363 = vpop.f32.mrb[0].mxu0
    %v364 = vadd.f32 0.0, %v363
    %v365 = vpop.f32.mrb[0].mxu0
    %366 = vdwg.mxu0
    %v367 = vld [vmem:[#allocation10] sm:$0xff]
    %v368 = vld [vmem:[#allocation10 + $0x8] sm:$0xff]
    %v369 = vld [vmem:[#allocation10 + $0x10] sm:$0xff]
    %v370 = vld [vmem:[#allocation10 + $0x18] sm:$0xff]
    %371 = vmatprep.subr.mxu0 0.0
    %372 = vmatpush1.msra.mxu0 %v367
    %373 = vmatprep.subr.mxu0 0.0
    %374 = vmatpush1.msra.mxu0 %v368
    %375 = vmatprep.subr.mxu0 0.0
    %376 = vmatpush1.msra.mxu0 %v369
    %377 = vmatprep.subr.mxu0 0.0
    %378 = vmatpush1.msra.mxu0 %v370
    %379 = vmatprep.subr.mxu0 0.0
    %380 = vmatpush1.msra.mxu0 0.0
    %381 = vmatprep.subr.mxu0 0.0
    %382 = vmatpush1.msra.mxu0 0.0
    %383 = vmatprep.subr.mxu0 0.0
    %384 = vmatpush1.msra.mxu0 0.0
    %385 = vmatprep.subr.mxu0 0.0
    %386 = vmatpush1.msra.mxu0 0.0
    %387 = vmatprep.subr.mxu0 0.0
    %388 = vmatpush1.msra.mxu0 0.0
    %389 = vmatprep.subr.mxu0 0.0
    %390 = vmatpush1.msra.mxu0 0.0
    %391 = vmatprep.subr.mxu0 0.0
    %392 = vmatpush1.msra.mxu0 0.0
    %393 = vmatprep.subr.mxu0 0.0
    %394 = vmatpush1.msra.mxu0 0.0
    %395 = vmatprep.subr.mxu0 0.0
    %396 = vmatpush1.msra.mxu0 0.0
    %397 = vmatprep.subr.mxu0 0.0
    %398 = vmatpush1.msra.mxu0 0.0
    %399 = vmatprep.subr.mxu0 0.0
    %400 = vmatpush1.msra.mxu0 0.0
    %401 = vmatprep.subr.mxu0 0.0
    %402 = vmatpush1.msra.mxu0 0.0
    %403 = vmatprep.subr.mxu0 0.0
    %404 = vmatpush1.msra.mxu0 0.0
    %405 = vmatprep.subr.mxu0 0.0
    %406 = vmatpush1.msra.mxu0 0.0
    %407 = vmatprep.subr.mxu0 0.0
    %408 = vmatpush1.msra.mxu0 0.0
    %409 = vmatprep.subr.mxu0 0.0
    %410 = vmatpush1.msra.mxu0 0.0
    %411 = vmatprep.subr.mxu0 0.0
    %412 = vmatpush1.msra.mxu0 0.0
    %413 = vmatprep.subr.mxu0 0.0
    %414 = vmatpush1.msra.mxu0 0.0
    %415 = vmatprep.subr.mxu0 0.0
    %416 = vmatpush1.msra.mxu0 0.0
    %417 = vmatprep.subr.mxu0 0.0
    %418 = vmatpush1.msra.mxu0 0.0
    %419 = vmatprep.subr.mxu0 0.0
    %420 = vmatpush1.msra.mxu0 0.0
    %421 = vmatprep.subr.mxu0 0.0
    %422 = vmatpush1.msra.mxu0 0.0
    %423 = vmatprep.subr.mxu0 0.0
    %424 = vmatpush1.msra.mxu0 0.0
    %425 = vmatprep.subr.mxu0 0.0
    %426 = vmatpush1.msra.mxu0 0.0
    %427 = vmatprep.subr.mxu0 0.0
    %428 = vmatpush1.msra.mxu0 0.0
    %429 = vmatprep.subr.mxu0 0.0
    %430 = vmatpush1.msra.mxu0 0.0
    %431 = vmatprep.subr.mxu0 0.0
    %432 = vmatpush1.msra.mxu0 0.0
    %433 = vmatprep.subr.mxu0 0.0
    %434 = vmatpush1.msra.mxu0 0.0
    %435 = vmatprep.mubr.f32.mxu0 0.0
    %436 = vmatmul.mubr.f32.gmra.mrb[0].mxu0 %v130
    %v437 = vpop.f32.mrb[0].mxu0
    %v438 = vadd.f32 0.0, %v437
    %v439 = vpop.f32.mrb[0].mxu0
    %440 = vmatprep.mubr.f32.mxu0 0.0
    %441 = vmatmul.mubr.f32.gmra.mrb[0].mxu0 %v133
    %v442 = vpop.f32.mrb[0].mxu0
    %v443 = vadd.f32 0.0, %v442
    %v444 = vpop.f32.mrb[0].mxu0
    %445 = vmatprep.mubr.f32.mxu0 0.0
    %446 = vmatmul.mubr.f32.gmra.mrb[0].mxu0 %v136
    %v447 = vpop.f32.mrb[0].mxu0
    %v448 = vadd.f32 0.0, %v447
    %v449 = vpop.f32.mrb[0].mxu0
    %450 = vmatprep.mubr.f32.mxu0 0.0
    %451 = vmatmul.mubr.f32.gmra.mrb[0].mxu0 %v139
    %v452 = vpop.f32.mrb[0].mxu0
    %v453 = vadd.f32 0.0, %v452
    %v454 = vpop.f32.mrb[0].mxu0
    %455 = vmatprep.mubr.f32.mxu0 0.0
    %456 = vmatmul.mubr.f32.gmra.mrb[0].mxu0 %v142
    %v457 = vpop.f32.mrb[0].mxu0
    %v458 = vadd.f32 0.0, %v457
    %v459 = vpop.f32.mrb[0].mxu0
    %460 = vmatprep.mubr.f32.mxu0 0.0
    %461 = vmatmul.mubr.f32.gmra.mrb[0].mxu0 %v145
    %v462 = vpop.f32.mrb[0].mxu0
    %v463 = vadd.f32 0.0, %v462
    %v464 = vpop.f32.mrb[0].mxu0
    %465 = vmatprep.mubr.f32.mxu0 0.0
    %466 = vmatmul.mubr.f32.gmra.mrb[0].mxu0 %v148
    %v467 = vpop.f32.mrb[0].mxu0
    %v468 = vadd.f32 0.0, %v467
    %v469 = vpop.f32.mrb[0].mxu0
    %470 = vmatprep.mubr.f32.mxu0 0.0
    %471 = vmatmul.mubr.f32.gmra.mrb[0].mxu0 %v151
    %v472 = vpop.f32.mrb[0].mxu0
    %v473 = vadd.f32 0.0, %v472
    %v474 = vpop.f32.mrb[0].mxu0
    %475 = vdwg.mxu0
    %v476 = vlaneseq
    %v477 = vshrl.u32 %v476, 7
    %v478 = vlaneseq
    %v479 = vand.u32 %v478, 127
    %vm480 = vcmp.gt.s32.totalorder %v479, %v477
    %vm481 = vcmask 64512
    %v483 = vsel %vm481, %v220, 0
    %v486 = vsel %vm481, %v329, 0
    %488 = vmatprep.subr.mxu0 0.0
    %489 = vmatpush1.xpose.msra.mxu0 %v486
    %490 = vmatprep.subr.mxu0 0.0
    %491 = vmatpush1.xpose.msra.mxu0 0.0
    %492 = vmatprep.subr.mxu0 0.0
    %493 = vmatpush1.xpose.msra.mxu0 0.0
    %494 = vmatprep.subr.mxu0 0.0
    %495 = vmatpush1.xpose.msra.mxu0 0.0
    %496 = vmatprep.subr.mxu0 0.0
    %497 = vmatpush1.xpose.msra.mxu0 0.0
    %498 = vmatprep.subr.mxu0 0.0
    %499 = vmatpush1.xpose.msra.mxu0 0.0
    %500 = vmatprep.subr.mxu0 0.0
    %501 = vmatpush1.xpose.msra.mxu0 0.0
    %502 = vmatprep.subr.mxu0 0.0
    %503 = vmatpush1.xpose.msra.mxu0 0.0
    %504 = vmatprep.subr.mxu0 0.0
    %505 = vmatpush1.xpose.msra.mxu0 0.0
    %506 = vmatprep.subr.mxu0 0.0
    %507 = vmatpush1.xpose.msra.mxu0 0.0
    %508 = vmatprep.subr.mxu0 0.0
    %509 = vmatpush1.xpose.msra.mxu0 0.0
    %510 = vmatprep.subr.mxu0 0.0
    %511 = vmatpush1.xpose.msra.mxu0 0.0
    %512 = vmatprep.subr.mxu0 0.0
    %513 = vmatpush1.xpose.msra.mxu0 0.0
    %514 = vmatprep.subr.mxu0 0.0
    %515 = vmatpush1.xpose.msra.mxu0 0.0
    %516 = vmatprep.subr.mxu0 0.0
    %517 = vmatpush1.xpose.msra.mxu0 0.0
    %518 = vmatprep.subr.mxu0 0.0
    %519 = vmatpush1.xpose.msra.mxu0 0.0
    %520 = vmatprep.subr.mxu0 0.0
    %521 = vmatpush1.xpose.msra.mxu0 0.0
    %522 = vmatprep.subr.mxu0 0.0
    %523 = vmatpush1.xpose.msra.mxu0 0.0
    %524 = vmatprep.subr.mxu0 0.0
    %525 = vmatpush1.xpose.msra.mxu0 0.0
    %526 = vmatprep.subr.mxu0 0.0
    %527 = vmatpush1.xpose.msra.mxu0 0.0
    %528 = vmatprep.subr.mxu0 0.0
    %529 = vmatpush1.xpose.msra.mxu0 0.0
    %530 = vmatprep.subr.mxu0 0.0
    %531 = vmatpush1.xpose.msra.mxu0 0.0
    %532 = vmatprep.subr.mxu0 0.0
    %533 = vmatpush1.xpose.msra.mxu0 0.0
    %534 = vmatprep.subr.mxu0 0.0
    %535 = vmatpush1.xpose.msra.mxu0 0.0
    %536 = vmatprep.subr.mxu0 0.0
    %537 = vmatpush1.xpose.msra.mxu0 0.0
    %538 = vmatprep.subr.mxu0 0.0
    %539 = vmatpush1.xpose.msra.mxu0 0.0
    %540 = vmatprep.subr.mxu0 0.0
    %541 = vmatpush1.xpose.msra.mxu0 0.0
    %542 = vmatprep.subr.mxu0 0.0
    %543 = vmatpush1.xpose.msra.mxu0 0.0
    %544 = vmatprep.subr.mxu0 0.0
    %545 = vmatpush1.xpose.msra.mxu0 0.0
    %546 = vmatprep.subr.mxu0 0.0
    %547 = vmatpush1.xpose.msra.mxu0 0.0
    %548 = vmatprep.subr.mxu0 0.0
    %549 = vmatpush1.xpose.msra.mxu0 0.0
    %550 = vmatprep.subr.mxu0 0.0
    %551 = vmatpush1.xpose.msra.mxu0 0.0
    %552 = vmatprep.mubr.f32.mxu0 0.0
    %553 = vmatmul.mubr.f32.gmra.mrb[0].mxu0 %v483
    %v554 = vpop.f32.mrb[0].mxu0
    %v555 = vadd.f32 0.0, %v554
    %v556 = vpop.f32.mrb[0].mxu0
    %557 = vdwg.mxu0
    %v559 = vsel %vm481, %v225, 0
    %v562 = vsel %vm481, %v334, 0
    %564 = vmatprep.subr.mxu0 0.0
    %565 = vmatpush1.xpose.msra.mxu0 %v562
    %566 = vmatprep.subr.mxu0 0.0
    %567 = vmatpush1.xpose.msra.mxu0 0.0
    %568 = vmatprep.subr.mxu0 0.0
    %569 = vmatpush1.xpose.msra.mxu0 0.0
    %570 = vmatprep.subr.mxu0 0.0
    %571 = vmatpush1.xpose.msra.mxu0 0.0
    %572 = vmatprep.subr.mxu0 0.0
    %573 = vmatpush1.xpose.msra.mxu0 0.0
    %574 = vmatprep.subr.mxu0 0.0
    %575 = vmatpush1.xpose.msra.mxu0 0.0
    %576 = vmatprep.subr.mxu0 0.0
    %577 = vmatpush1.xpose.msra.mxu0 0.0
    %578 = vmatprep.subr.mxu0 0.0
    %579 = vmatpush1.xpose.msra.mxu0 0.0
    %580 = vmatprep.subr.mxu0 0.0
    %581 = vmatpush1.xpose.msra.mxu0 0.0
    %582 = vmatprep.subr.mxu0 0.0
    %583 = vmatpush1.xpose.msra.mxu0 0.0
    %584 = vmatprep.subr.mxu0 0.0
    %585 = vmatpush1.xpose.msra.mxu0 0.0
    %586 = vmatprep.subr.mxu0 0.0
    %587 = vmatpush1.xpose.msra.mxu0 0.0
    %588 = vmatprep.subr.mxu0 0.0
    %589 = vmatpush1.xpose.msra.mxu0 0.0
    %590 = vmatprep.subr.mxu0 0.0
    %591 = vmatpush1.xpose.msra.mxu0 0.0
    %592 = vmatprep.subr.mxu0 0.0
    %593 = vmatpush1.xpose.msra.mxu0 0.0
    %594 = vmatprep.subr.mxu0 0.0
    %595 = vmatpush1.xpose.msra.mxu0 0.0
    %596 = vmatprep.subr.mxu0 0.0
    %597 = vmatpush1.xpose.msra.mxu0 0.0
    %598 = vmatprep.subr.mxu0 0.0
    %599 = vmatpush1.xpose.msra.mxu0 0.0
    %600 = vmatprep.subr.mxu0 0.0
    %601 = vmatpush1.xpose.msra.mxu0 0.0
    %602 = vmatprep.subr.mxu0 0.0
    %603 = vmatpush1.xpose.msra.mxu0 0.0
    %604 = vmatprep.subr.mxu0 0.0
    %605 = vmatpush1.xpose.msra.mxu0 0.0
    %606 = vmatprep.subr.mxu0 0.0
    %607 = vmatpush1.xpose.msra.mxu0 0.0
    %608 = vmatprep.subr.mxu0 0.0
    %609 = vmatpush1.xpose.msra.mxu0 0.0
    %610 = vmatprep.subr.mxu0 0.0
    %611 = vmatpush1.xpose.msra.mxu0 0.0
    %612 = vmatprep.subr.mxu0 0.0
    %613 = vmatpush1.xpose.msra.mxu0 0.0
    %614 = vmatprep.subr.mxu0 0.0
    %615 = vmatpush1.xpose.msra.mxu0 0.0
    %616 = vmatprep.subr.mxu0 0.0
    %617 = vmatpush1.xpose.msra.mxu0 0.0
    %618 = vmatprep.subr.mxu0 0.0
    %619 = vmatpush1.xpose.msra.mxu0 0.0
    %620 = vmatprep.subr.mxu0 0.0
    %621 = vmatpush1.xpose.msra.mxu0 0.0
    %622 = vmatprep.subr.mxu0 0.0
    %623 = vmatpush1.xpose.msra.mxu0 0.0
    %624 = vmatprep.subr.mxu0 0.0
    %625 = vmatpush1.xpose.msra.mxu0 0.0
    %626 = vmatprep.subr.mxu0 0.0
    %627 = vmatpush1.xpose.msra.mxu0 0.0
    %628 = vmatprep.mubr.f32.mxu0 0.0
    %629 = vmatmul.mubr.f32.gmra.mrb[0].mxu0 %v559
    %v630 = vpop.f32.mrb[0].mxu0
    %v631 = vadd.f32 0.0, %v630
    %v632 = vpop.f32.mrb[0].mxu0
    %633 = vdwg.mxu0
    %v635 = vsel %vm481, %v230, 0
    %v638 = vsel %vm481, %v339, 0
    %640 = vmatprep.subr.mxu0 0.0
    %641 = vmatpush1.xpose.msra.mxu0 %v638
    %642 = vmatprep.subr.mxu0 0.0
    %643 = vmatpush1.xpose.msra.mxu0 0.0
    %644 = vmatprep.subr.mxu0 0.0
    %645 = vmatpush1.xpose.msra.mxu0 0.0
    %646 = vmatprep.subr.mxu0 0.0
    %647 = vmatpush1.xpose.msra.mxu0 0.0
    %648 = vmatprep.subr.mxu0 0.0
    %649 = vmatpush1.xpose.msra.mxu0 0.0
    %650 = vmatprep.subr.mxu0 0.0
    %651 = vmatpush1.xpose.msra.mxu0 0.0
    %652 = vmatprep.subr.mxu0 0.0
    %653 = vmatpush1.xpose.msra.mxu0 0.0
    %654 = vmatprep.subr.mxu0 0.0
    %655 = vmatpush1.xpose.msra.mxu0 0.0
    %656 = vmatprep.subr.mxu0 0.0
    %657 = vmatpush1.xpose.msra.mxu0 0.0
    %658 = vmatprep.subr.mxu0 0.0
    %659 = vmatpush1.xpose.msra.mxu0 0.0
    %660 = vmatprep.subr.mxu0 0.0
    %661 = vmatpush1.xpose.msra.mxu0 0.0
    %662 = vmatprep.subr.mxu0 0.0
    %663 = vmatpush1.xpose.msra.mxu0 0.0
    %664 = vmatprep.subr.mxu0 0.0
    %665 = vmatpush1.xpose.msra.mxu0 0.0
    %666 = vmatprep.subr.mxu0 0.0
    %667 = vmatpush1.xpose.msra.mxu0 0.0
    %668 = vmatprep.subr.mxu0 0.0
    %669 = vmatpush1.xpose.msra.mxu0 0.0
    %670 = vmatprep.subr.mxu0 0.0
    %671 = vmatpush1.xpose.msra.mxu0 0.0
    %672 = vmatprep.subr.mxu0 0.0
    %673 = vmatpush1.xpose.msra.mxu0 0.0
    %674 = vmatprep.subr.mxu0 0.0
    %675 = vmatpush1.xpose.msra.mxu0 0.0
    %676 = vmatprep.subr.mxu0 0.0
    %677 = vmatpush1.xpose.msra.mxu0 0.0
    %678 = vmatprep.subr.mxu0 0.0
    %679 = vmatpush1.xpose.msra.mxu0 0.0
    %680 = vmatprep.subr.mxu0 0.0
    %681 = vmatpush1.xpose.msra.mxu0 0.0
    %682 = vmatprep.subr.mxu0 0.0
    %683 = vmatpush1.xpose.msra.mxu0 0.0
    %684 = vmatprep.subr.mxu0 0.0
    %685 = vmatpush1.xpose.msra.mxu0 0.0
    %686 = vmatprep.subr.mxu0 0.0
    %687 = vmatpush1.xpose.msra.mxu0 0.0
    %688 = vmatprep.subr.mxu0 0.0
    %689 = vmatpush1.xpose.msra.mxu0 0.0
    %690 = vmatprep.subr.mxu0 0.0
    %691 = vmatpush1.xpose.msra.mxu0 0.0
    %692 = vmatprep.subr.mxu0 0.0
    %693 = vmatpush1.xpose.msra.mxu0 0.0
    %694 = vmatprep.subr.mxu0 0.0
    %695 = vmatpush1.xpose.msra.mxu0 0.0
    %696 = vmatprep.subr.mxu0 0.0
    %697 = vmatpush1.xpose.msra.mxu0 0.0
    %698 = vmatprep.subr.mxu0 0.0
    %699 = vmatpush1.xpose.msra.mxu0 0.0
    %700 = vmatprep.subr.mxu0 0.0
    %701 = vmatpush1.xpose.msra.mxu0 0.0
    %702 = vmatprep.subr.mxu0 0.0
    %703 = vmatpush1.xpose.msra.mxu0 0.0
    %704 = vmatprep.mubr.f32.mxu0 0.0
    %705 = vmatmul.mubr.f32.gmra.mrb[0].mxu0 %v635
    %v706 = vpop.f32.mrb[0].mxu0
    %v707 = vadd.f32 0.0, %v706
    %v708 = vpop.f32.mrb[0].mxu0
    %709 = vdwg.mxu0
    %v711 = vsel %vm481, %v235, 0
    %v714 = vsel %vm481, %v344, 0
    %716 = vmatprep.subr.mxu0 0.0
    %717 = vmatpush1.xpose.msra.mxu0 %v714
    %718 = vmatprep.subr.mxu0 0.0
    %719 = vmatpush1.xpose.msra.mxu0 0.0
    %720 = vmatprep.subr.mxu0 0.0
    %721 = vmatpush1.xpose.msra.mxu0 0.0
    %722 = vmatprep.subr.mxu0 0.0
    %723 = vmatpush1.xpose.msra.mxu0 0.0
    %724 = vmatprep.subr.mxu0 0.0
    %725 = vmatpush1.xpose.msra.mxu0 0.0
    %726 = vmatprep.subr.mxu0 0.0
    %727 = vmatpush1.xpose.msra.mxu0 0.0
    %728 = vmatprep.subr.mxu0 0.0
    %729 = vmatpush1.xpose.msra.mxu0 0.0
    %730 = vmatprep.subr.mxu0 0.0
    %731 = vmatpush1.xpose.msra.mxu0 0.0
    %732 = vmatprep.subr.mxu0 0.0
    %733 = vmatpush1.xpose.msra.mxu0 0.0
    %734 = vmatprep.subr.mxu0 0.0
    %735 = vmatpush1.xpose.msra.mxu0 0.0
    %736 = vmatprep.subr.mxu0 0.0
    %737 = vmatpush1.xpose.msra.mxu0 0.0
    %738 = vmatprep.subr.mxu0 0.0
    %739 = vmatpush1.xpose.msra.mxu0 0.0
    %740 = vmatprep.subr.mxu0 0.0
    %741 = vmatpush1.xpose.msra.mxu0 0.0
    %742 = vmatprep.subr.mxu0 0.0
    %743 = vmatpush1.xpose.msra.mxu0 0.0
    %744 = vmatprep.subr.mxu0 0.0
    %745 = vmatpush1.xpose.msra.mxu0 0.0
    %746 = vmatprep.subr.mxu0 0.0
    %747 = vmatpush1.xpose.msra.mxu0 0.0
    %748 = vmatprep.subr.mxu0 0.0
    %749 = vmatpush1.xpose.msra.mxu0 0.0
    %750 = vmatprep.subr.mxu0 0.0
    %751 = vmatpush1.xpose.msra.mxu0 0.0
    %752 = vmatprep.subr.mxu0 0.0
    %753 = vmatpush1.xpose.msra.mxu0 0.0
    %754 = vmatprep.subr.mxu0 0.0
    %755 = vmatpush1.xpose.msra.mxu0 0.0
    %756 = vmatprep.subr.mxu0 0.0
    %757 = vmatpush1.xpose.msra.mxu0 0.0
    %758 = vmatprep.subr.mxu0 0.0
    %759 = vmatpush1.xpose.msra.mxu0 0.0
    %760 = vmatprep.subr.mxu0 0.0
    %761 = vmatpush1.xpose.msra.mxu0 0.0
    %762 = vmatprep.subr.mxu0 0.0
    %763 = vmatpush1.xpose.msra.mxu0 0.0
    %764 = vmatprep.subr.mxu0 0.0
    %765 = vmatpush1.xpose.msra.mxu0 0.0
    %766 = vmatprep.subr.mxu0 0.0
    %767 = vmatpush1.xpose.msra.mxu0 0.0
    %768 = vmatprep.subr.mxu0 0.0
    %769 = vmatpush1.xpose.msra.mxu0 0.0
    %770 = vmatprep.subr.mxu0 0.0
    %771 = vmatpush1.xpose.msra.mxu0 0.0
    %772 = vmatprep.subr.mxu0 0.0
    %773 = vmatpush1.xpose.msra.mxu0 0.0
    %774 = vmatprep.subr.mxu0 0.0
    %775 = vmatpush1.xpose.msra.mxu0 0.0
    %776 = vmatprep.subr.mxu0 0.0
    %777 = vmatpush1.xpose.msra.mxu0 0.0
    %778 = vmatprep.subr.mxu0 0.0
    %779 = vmatpush1.xpose.msra.mxu0 0.0
    %780 = vmatprep.mubr.f32.mxu0 0.0
    %781 = vmatmul.mubr.f32.gmra.mrb[0].mxu0 %v711
    %v782 = vpop.f32.mrb[0].mxu0
    %v783 = vadd.f32 0.0, %v782
    %v784 = vpop.f32.mrb[0].mxu0
    %785 = vdwg.mxu0
    %v787 = vsel %vm481, %v240, 0
    %v790 = vsel %vm481, %v349, 0
    %792 = vmatprep.subr.mxu0 0.0
    %793 = vmatpush1.xpose.msra.mxu0 %v790
    %794 = vmatprep.subr.mxu0 0.0
    %795 = vmatpush1.xpose.msra.mxu0 0.0
    %796 = vmatprep.subr.mxu0 0.0
    %797 = vmatpush1.xpose.msra.mxu0 0.0
    %798 = vmatprep.subr.mxu0 0.0
    %799 = vmatpush1.xpose.msra.mxu0 0.0
    %800 = vmatprep.subr.mxu0 0.0
    %801 = vmatpush1.xpose.msra.mxu0 0.0
    %802 = vmatprep.subr.mxu0 0.0
    %803 = vmatpush1.xpose.msra.mxu0 0.0
    %804 = vmatprep.subr.mxu0 0.0
    %805 = vmatpush1.xpose.msra.mxu0 0.0
    %806 = vmatprep.subr.mxu0 0.0
    %807 = vmatpush1.xpose.msra.mxu0 0.0
    %808 = vmatprep.subr.mxu0 0.0
    %809 = vmatpush1.xpose.msra.mxu0 0.0
    %810 = vmatprep.subr.mxu0 0.0
    %811 = vmatpush1.xpose.msra.mxu0 0.0
    %812 = vmatprep.subr.mxu0 0.0
    %813 = vmatpush1.xpose.msra.mxu0 0.0
    %814 = vmatprep.subr.mxu0 0.0
    %815 = vmatpush1.xpose.msra.mxu0 0.0
    %816 = vmatprep.subr.mxu0 0.0
    %817 = vmatpush1.xpose.msra.mxu0 0.0
    %818 = vmatprep.subr.mxu0 0.0
    %819 = vmatpush1.xpose.msra.mxu0 0.0
    %820 = vmatprep.subr.mxu0 0.0
    %821 = vmatpush1.xpose.msra.mxu0 0.0
    %822 = vmatprep.subr.mxu0 0.0
    %823 = vmatpush1.xpose.msra.mxu0 0.0
    %824 = vmatprep.subr.mxu0 0.0
    %825 = vmatpush1.xpose.msra.mxu0 0.0
    %826 = vmatprep.subr.mxu0 0.0
    %827 = vmatpush1.xpose.msra.mxu0 0.0
    %828 = vmatprep.subr.mxu0 0.0
    %829 = vmatpush1.xpose.msra.mxu0 0.0
    %830 = vmatprep.subr.mxu0 0.0
    %831 = vmatpush1.xpose.msra.mxu0 0.0
    %832 = vmatprep.subr.mxu0 0.0
    %833 = vmatpush1.xpose.msra.mxu0 0.0
    %834 = vmatprep.subr.mxu0 0.0
    %835 = vmatpush1.xpose.msra.mxu0 0.0
    %836 = vmatprep.subr.mxu0 0.0
    %837 = vmatpush1.xpose.msra.mxu0 0.0
    %838 = vmatprep.subr.mxu0 0.0
    %839 = vmatpush1.xpose.msra.mxu0 0.0
    %840 = vmatprep.subr.mxu0 0.0
    %841 = vmatpush1.xpose.msra.mxu0 0.0
    %842 = vmatprep.subr.mxu0 0.0
    %843 = vmatpush1.xpose.msra.mxu0 0.0
    %844 = vmatprep.subr.mxu0 0.0
    %845 = vmatpush1.xpose.msra.mxu0 0.0
    %846 = vmatprep.subr.mxu0 0.0
    %847 = vmatpush1.xpose.msra.mxu0 0.0
    %848 = vmatprep.subr.mxu0 0.0
    %849 = vmatpush1.xpose.msra.mxu0 0.0
    %850 = vmatprep.subr.mxu0 0.0
    %851 = vmatpush1.xpose.msra.mxu0 0.0
    %852 = vmatprep.subr.mxu0 0.0
    %853 = vmatpush1.xpose.msra.mxu0 0.0
    %854 = vmatprep.subr.mxu0 0.0
    %855 = vmatpush1.xpose.msra.mxu0 0.0
    %856 = vmatprep.mubr.f32.mxu0 0.0
    %857 = vmatmul.mubr.f32.gmra.mrb[0].mxu0 %v787
    %v858 = vpop.f32.mrb[0].mxu0
    %v859 = vadd.f32 0.0, %v858
    %v860 = vpop.f32.mrb[0].mxu0
    %861 = vdwg.mxu0
    %v863 = vsel %vm481, %v245, 0
    %v866 = vsel %vm481, %v354, 0
    %868 = vmatprep.subr.mxu0 0.0
    %869 = vmatpush1.xpose.msra.mxu0 %v866
    %870 = vmatprep.subr.mxu0 0.0
    %871 = vmatpush1.xpose.msra.mxu0 0.0
    %872 = vmatprep.subr.mxu0 0.0
    %873 = vmatpush1.xpose.msra.mxu0 0.0
    %874 = vmatprep.subr.mxu0 0.0
    %875 = vmatpush1.xpose.msra.mxu0 0.0
    %876 = vmatprep.subr.mxu0 0.0
    %877 = vmatpush1.xpose.msra.mxu0 0.0
    %878 = vmatprep.subr.mxu0 0.0
    %879 = vmatpush1.xpose.msra.mxu0 0.0
    %880 = vmatprep.subr.mxu0 0.0
    %881 = vmatpush1.xpose.msra.mxu0 0.0
    %882 = vmatprep.subr.mxu0 0.0
    %883 = vmatpush1.xpose.msra.mxu0 0.0
    %884 = vmatprep.subr.mxu0 0.0
    %885 = vmatpush1.xpose.msra.mxu0 0.0
    %886 = vmatprep.subr.mxu0 0.0
    %887 = vmatpush1.xpose.msra.mxu0 0.0
    %888 = vmatprep.subr.mxu0 0.0
    %889 = vmatpush1.xpose.msra.mxu0 0.0
    %890 = vmatprep.subr.mxu0 0.0
    %891 = vmatpush1.xpose.msra.mxu0 0.0
    %892 = vmatprep.subr.mxu0 0.0
    %893 = vmatpush1.xpose.msra.mxu0 0.0
    %894 = vmatprep.subr.mxu0 0.0
    %895 = vmatpush1.xpose.msra.mxu0 0.0
    %896 = vmatprep.subr.mxu0 0.0
    %897 = vmatpush1.xpose.msra.mxu0 0.0
    %898 = vmatprep.subr.mxu0 0.0
    %899 = vmatpush1.xpose.msra.mxu0 0.0
    %900 = vmatprep.subr.mxu0 0.0
    %901 = vmatpush1.xpose.msra.mxu0 0.0
    %902 = vmatprep.subr.mxu0 0.0
    %903 = vmatpush1.xpose.msra.mxu0 0.0
    %904 = vmatprep.subr.mxu0 0.0
    %905 = vmatpush1.xpose.msra.mxu0 0.0
    %906 = vmatprep.subr.mxu0 0.0
    %907 = vmatpush1.xpose.msra.mxu0 0.0
    %908 = vmatprep.subr.mxu0 0.0
    %909 = vmatpush1.xpose.msra.mxu0 0.0
    %910 = vmatprep.subr.mxu0 0.0
    %911 = vmatpush1.xpose.msra.mxu0 0.0
    %912 = vmatprep.subr.mxu0 0.0
    %913 = vmatpush1.xpose.msra.mxu0 0.0
    %914 = vmatprep.subr.mxu0 0.0
    %915 = vmatpush1.xpose.msra.mxu0 0.0
    %916 = vmatprep.subr.mxu0 0.0
    %917 = vmatpush1.xpose.msra.mxu0 0.0
    %918 = vmatprep.subr.mxu0 0.0
    %919 = vmatpush1.xpose.msra.mxu0 0.0
    %920 = vmatprep.subr.mxu0 0.0
    %921 = vmatpush1.xpose.msra.mxu0 0.0
    %922 = vmatprep.subr.mxu0 0.0
    %923 = vmatpush1.xpose.msra.mxu0 0.0
    %924 = vmatprep.subr.mxu0 0.0
    %925 = vmatpush1.xpose.msra.mxu0 0.0
    %926 = vmatprep.subr.mxu0 0.0
    %927 = vmatpush1.xpose.msra.mxu0 0.0
    %928 = vmatprep.subr.mxu0 0.0
    %929 = vmatpush1.xpose.msra.mxu0 0.0
    %930 = vmatprep.subr.mxu0 0.0
    %931 = vmatpush1.xpose.msra.mxu0 0.0
    %932 = vmatprep.mubr.f32.mxu0 0.0
    %933 = vmatmul.mubr.f32.gmra.mrb[0].mxu0 %v863
    %v934 = vpop.f32.mrb[0].mxu0
    %v935 = vadd.f32 0.0, %v934
    %v936 = vpop.f32.mrb[0].mxu0
    %937 = vdwg.mxu0
    %v939 = vsel %vm481, %v250, 0
    %v942 = vsel %vm481, %v359, 0
    %944 = vmatprep.subr.mxu0 0.0
    %945 = vmatpush1.xpose.msra.mxu0 %v942
    %946 = vmatprep.subr.mxu0 0.0
    %947 = vmatpush1.xpose.msra.mxu0 0.0
    %948 = vmatprep.subr.mxu0 0.0
    %949 = vmatpush1.xpose.msra.mxu0 0.0
    %950 = vmatprep.subr.mxu0 0.0
    %951 = vmatpush1.xpose.msra.mxu0 0.0
    %952 = vmatprep.subr.mxu0 0.0
    %953 = vmatpush1.xpose.msra.mxu0 0.0
    %954 = vmatprep.subr.mxu0 0.0
    %955 = vmatpush1.xpose.msra.mxu0 0.0
    %956 = vmatprep.subr.mxu0 0.0
    %957 = vmatpush1.xpose.msra.mxu0 0.0
    %958 = vmatprep.subr.mxu0 0.0
    %959 = vmatpush1.xpose.msra.mxu0 0.0
    %960 = vmatprep.subr.mxu0 0.0
    %961 = vmatpush1.xpose.msra.mxu0 0.0
    %962 = vmatprep.subr.mxu0 0.0
    %963 = vmatpush1.xpose.msra.mxu0 0.0
    %964 = vmatprep.subr.mxu0 0.0
    %965 = vmatpush1.xpose.msra.mxu0 0.0
    %966 = vmatprep.subr.mxu0 0.0
    %967 = vmatpush1.xpose.msra.mxu0 0.0
    %968 = vmatprep.subr.mxu0 0.0
    %969 = vmatpush1.xpose.msra.mxu0 0.0
    %970 = vmatprep.subr.mxu0 0.0
    %971 = vmatpush1.xpose.msra.mxu0 0.0
    %972 = vmatprep.subr.mxu0 0.0
    %973 = vmatpush1.xpose.msra.mxu0 0.0
    %974 = vmatprep.subr.mxu0 0.0
    %975 = vmatpush1.xpose.msra.mxu0 0.0
    %976 = vmatprep.subr.mxu0 0.0
    %977 = vmatpush1.xpose.msra.mxu0 0.0
    %978 = vmatprep.subr.mxu0 0.0
    %979 = vmatpush1.xpose.msra.mxu0 0.0
    %980 = vmatprep.subr.mxu0 0.0
    %981 = vmatpush1.xpose.msra.mxu0 0.0
    %982 = vmatprep.subr.mxu0 0.0
    %983 = vmatpush1.xpose.msra.mxu0 0.0
    %984 = vmatprep.subr.mxu0 0.0
    %985 = vmatpush1.xpose.msra.mxu0 0.0
    %986 = vmatprep.subr.mxu0 0.0
    %987 = vmatpush1.xpose.msra.mxu0 0.0
    %988 = vmatprep.subr.mxu0 0.0
    %989 = vmatpush1.xpose.msra.mxu0 0.0
    %990 = vmatprep.subr.mxu0 0.0
    %991 = vmatpush1.xpose.msra.mxu0 0.0
    %992 = vmatprep.subr.mxu0 0.0
    %993 = vmatpush1.xpose.msra.mxu0 0.0
    %994 = vmatprep.subr.mxu0 0.0
    %995 = vmatpush1.xpose.msra.mxu0 0.0
    %996 = vmatprep.subr.mxu0 0.0
    %997 = vmatpush1.xpose.msra.mxu0 0.0
    %998 = vmatprep.subr.mxu0 0.0
    %999 = vmatpush1.xpose.msra.mxu0 0.0
    %1000 = vmatprep.subr.mxu0 0.0
    %1001 = vmatpush1.xpose.msra.mxu0 0.0
    %1002 = vmatprep.subr.mxu0 0.0
    %1003 = vmatpush1.xpose.msra.mxu0 0.0
    %1004 = vmatprep.subr.mxu0 0.0
    %1005 = vmatpush1.xpose.msra.mxu0 0.0
    %1006 = vmatprep.subr.mxu0 0.0
    %1007 = vmatpush1.xpose.msra.mxu0 0.0
    %1008 = vmatprep.mubr.f32.mxu0 0.0
    %1009 = vmatmul.mubr.f32.gmra.mrb[0].mxu0 %v939
    %v1010 = vpop.f32.mrb[0].mxu0
    %v1011 = vadd.f32 0.0, %v1010
    %v1012 = vpop.f32.mrb[0].mxu0
    %1013 = vdwg.mxu0
    %v1015 = vsel %vm481, %v255, 0
    %v1018 = vsel %vm481, %v364, 0
    %1020 = vmatprep.subr.mxu0 0.0
    %1021 = vmatpush1.xpose.msra.mxu0 %v1018
    %1022 = vmatprep.subr.mxu0 0.0
    %1023 = vmatpush1.xpose.msra.mxu0 0.0
    %1024 = vmatprep.subr.mxu0 0.0
    %1025 = vmatpush1.xpose.msra.mxu0 0.0
    %1026 = vmatprep.subr.mxu0 0.0
    %1027 = vmatpush1.xpose.msra.mxu0 0.0
    %1028 = vmatprep.subr.mxu0 0.0
    %1029 = vmatpush1.xpose.msra.mxu0 0.0
    %1030 = vmatprep.subr.mxu0 0.0
    %1031 = vmatpush1.xpose.msra.mxu0 0.0
    %1032 = vmatprep.subr.mxu0 0.0
    %1033 = vmatpush1.xpose.msra.mxu0 0.0
    %1034 = vmatprep.subr.mxu0 0.0
    %1035 = vmatpush1.xpose.msra.mxu0 0.0
    %1036 = vmatprep.subr.mxu0 0.0
    %1037 = vmatpush1.xpose.msra.mxu0 0.0
    %1038 = vmatprep.subr.mxu0 0.0
    %1039 = vmatpush1.xpose.msra.mxu0 0.0
    %1040 = vmatprep.subr.mxu0 0.0
    %1041 = vmatpush1.xpose.msra.mxu0 0.0
    %1042 = vmatprep.subr.mxu0 0.0
    %1043 = vmatpush1.xpose.msra.mxu0 0.0
    %1044 = vmatprep.subr.mxu0 0.0
    %1045 = vmatpush1.xpose.msra.mxu0 0.0
    %1046 = vmatprep.subr.mxu0 0.0
    %1047 = vmatpush1.xpose.msra.mxu0 0.0
    %1048 = vmatprep.subr.mxu0 0.0
    %1049 = vmatpush1.xpose.msra.mxu0 0.0
    %1050 = vmatprep.subr.mxu0 0.0
    %1051 = vmatpush1.xpose.msra.mxu0 0.0
    %1052 = vmatprep.subr.mxu0 0.0
    %1053 = vmatpush1.xpose.msra.mxu0 0.0
    %1054 = vmatprep.subr.mxu0 0.0
    %1055 = vmatpush1.xpose.msra.mxu0 0.0
    %1056 = vmatprep.subr.mxu0 0.0
    %1057 = vmatpush1.xpose.msra.mxu0 0.0
    %1058 = vmatprep.subr.mxu0 0.0
    %1059 = vmatpush1.xpose.msra.mxu0 0.0
    %1060 = vmatprep.subr.mxu0 0.0
    %1061 = vmatpush1.xpose.msra.mxu0 0.0
    %1062 = vmatprep.subr.mxu0 0.0
    %1063 = vmatpush1.xpose.msra.mxu0 0.0
    %1064 = vmatprep.subr.mxu0 0.0
    %1065 = vmatpush1.xpose.msra.mxu0 0.0
    %1066 = vmatprep.subr.mxu0 0.0
    %1067 = vmatpush1.xpose.msra.mxu0 0.0
    %1068 = vmatprep.subr.mxu0 0.0
    %1069 = vmatpush1.xpose.msra.mxu0 0.0
    %1070 = vmatprep.subr.mxu0 0.0
    %1071 = vmatpush1.xpose.msra.mxu0 0.0
    %1072 = vmatprep.subr.mxu0 0.0
    %1073 = vmatpush1.xpose.msra.mxu0 0.0
    %1074 = vmatprep.subr.mxu0 0.0
    %1075 = vmatpush1.xpose.msra.mxu0 0.0
    %1076 = vmatprep.subr.mxu0 0.0
    %1077 = vmatpush1.xpose.msra.mxu0 0.0
    %1078 = vmatprep.subr.mxu0 0.0
    %1079 = vmatpush1.xpose.msra.mxu0 0.0
    %1080 = vmatprep.subr.mxu0 0.0
    %1081 = vmatpush1.xpose.msra.mxu0 0.0
    %1082 = vmatprep.subr.mxu0 0.0
    %1083 = vmatpush1.xpose.msra.mxu0 0.0
    %1084 = vmatprep.mubr.f32.mxu0 0.0
    %1085 = vmatmul.mubr.f32.gmra.mrb[0].mxu0 %v1015
    %v1086 = vpop.f32.mrb[0].mxu0
    %v1087 = vadd.f32 0.0, %v1086
    %v1088 = vpop.f32.mrb[0].mxu0
    %1089 = vdwg.mxu0
    %v1090 = vmul.f32 %v555, 0.35355338
    %v1091 = vmul.f32 %v631, 0.35355338
    %v1092 = vmul.f32 %v707, 0.35355338
    %v1093 = vmul.f32 %v783, 0.35355338
    %v1094 = vmul.f32 %v859, 0.35355338
    %v1095 = vmul.f32 %v935, 0.35355338
    %v1096 = vmul.f32 %v1011, 0.35355338
    %v1097 = vmul.f32 %v1087, 0.35355338
    %v1098 = vsel %vm480, 1, 0
    %vm1099 = vcmp.eq.s32.totalorder %v1098, 1
    %v1100 = vsel %vm1099, -4.2949673e+09, %v1090
    %v1101 = vsel %vm1099, -4.2949673e+09, %v1091
    %v1102 = vsel %vm1099, -4.2949673e+09, %v1092
    %v1103 = vsel %vm1099, -4.2949673e+09, %v1093
    %v1104 = vsel %vm1099, -4.2949673e+09, %v1094
    %v1105 = vsel %vm1099, -4.2949673e+09, %v1095
    %v1106 = vsel %vm1099, -4.2949673e+09, %v1096
    %v1107 = vsel %vm1099, -4.2949673e+09, %v1097
    %v1108 = vsel %vm481, %v1100, -inf
    %1109 = vmax.xlane.f32.xlu0 %v1108
    %v1110 = vpop.xlane.xlu0 %1109
    %v1111 = vsel %vm481, %v1101, -inf
    %1112 = vmax.xlane.f32.xlu0 %v1111
    %v1113 = vpop.xlane.xlu0 %1112
    %v1114 = vsel %vm481, %v1102, -inf
    %1115 = vmax.xlane.f32.xlu0 %v1114
    %v1116 = vpop.xlane.xlu0 %1115
    %v1117 = vsel %vm481, %v1103, -inf
    %1118 = vmax.xlane.f32.xlu0 %v1117
    %v1119 = vpop.xlane.xlu0 %1118
    %v1120 = vsel %vm481, %v1104, -inf
    %1121 = vmax.xlane.f32.xlu0 %v1120
    %v1122 = vpop.xlane.xlu0 %1121
    %v1123 = vsel %vm481, %v1105, -inf
    %1124 = vmax.xlane.f32.xlu0 %v1123
    %v1125 = vpop.xlane.xlu0 %1124
    %v1126 = vsel %vm481, %v1106, -inf
    %1127 = vmax.xlane.f32.xlu0 %v1126
    %v1128 = vpop.xlane.xlu0 %1127
    %v1129 = vsel %vm481, %v1107, -inf
    %1130 = vmax.xlane.f32.xlu0 %v1129
    %v1131 = vpop.xlane.xlu0 %1130
    %v1132 = vsub.f32 %v1100, %v1110
    %v1133 = vsub.f32 %v1101, %v1113
    %v1134 = vsub.f32 %v1102, %v1116
    %v1135 = vsub.f32 %v1103, %v1119
    %v1136 = vsub.f32 %v1104, %v1122
    %v1137 = vsub.f32 %v1105, %v1125
    %v1138 = vsub.f32 %v1106, %v1128
    %v1139 = vsub.f32 %v1107, %v1131
    %v1140 = vmul.f32 %v1132, 1.442695
    %v1141 = vpow.pop %v1140
    %v1142 = vmul.f32 %v1133, 1.442695
    %v1143 = vpow.pop %v1142
    %v1144 = vmul.f32 %v1134, 1.442695
    %v1145 = vpow.pop %v1144
    %v1146 = vmul.f32 %v1135, 1.442695
    %v1147 = vpow.pop %v1146
    %v1148 = vmul.f32 %v1136, 1.442695
    %v1149 = vpow.pop %v1148
    %v1150 = vmul.f32 %v1137, 1.442695
    %v1151 = vpow.pop %v1150
    %v1152 = vmul.f32 %v1138, 1.442695
    %v1153 = vpow.pop %v1152
    %v1154 = vmul.f32 %v1139, 1.442695
    %v1155 = vpow.pop %v1154
    %v1156 = vsel %vm481, %v1141, 0.0
    %1157 = vadd.xlane.f32.xlu0 %v1156
    %v1158 = vpop.xlane.xlu0 %1157
    %v1159 = vsel %vm481, %v1143, 0.0
    %1160 = vadd.xlane.f32.xlu0 %v1159
    %v1161 = vpop.xlane.xlu0 %1160
    %v1162 = vsel %vm481, %v1145, 0.0
    %1163 = vadd.xlane.f32.xlu0 %v1162
    %v1164 = vpop.xlane.xlu0 %1163
    %v1165 = vsel %vm481, %v1147, 0.0
    %1166 = vadd.xlane.f32.xlu0 %v1165
    %v1167 = vpop.xlane.xlu0 %1166
    %v1168 = vsel %vm481, %v1149, 0.0
    %1169 = vadd.xlane.f32.xlu0 %v1168
    %v1170 = vpop.xlane.xlu0 %1169
    %v1171 = vsel %vm481, %v1151, 0.0
    %1172 = vadd.xlane.f32.xlu0 %v1171
    %v1173 = vpop.xlane.xlu0 %1172
    %v1174 = vsel %vm481, %v1153, 0.0
    %1175 = vadd.xlane.f32.xlu0 %v1174
    %v1176 = vpop.xlane.xlu0 %1175
    %v1177 = vsel %vm481, %v1155, 0.0
    %1178 = vadd.xlane.f32.xlu0 %v1177
    %v1179 = vpop.xlane.xlu0 %1178
    %v1180 = vrcp.pop %v1158
    %v1181 = vrcp.pop %v1161
    %v1182 = vrcp.pop %v1164
    %v1183 = vrcp.pop %v1167
    %v1184 = vrcp.pop %v1170
    %v1185 = vrcp.pop %v1173
    %v1186 = vrcp.pop %v1176
    %v1187 = vrcp.pop %v1179
    %v1188 = vmul.f32 %v1141, %v1180
    %v1189 = vmul.f32 %v1143, %v1181
    %v1190 = vmul.f32 %v1145, %v1182
    %v1191 = vmul.f32 %v1147, %v1183
    %v1192 = vmul.f32 %v1149, %v1184
    %v1193 = vmul.f32 %v1151, %v1185
    %v1194 = vmul.f32 %v1153, %v1186
    %v1195 = vmul.f32 %v1155, %v1187
    %v1197 = vsel %vm481, %v1188, 0
    %1199 = vmatprep.subr.mxu0 0.0
    %1200 = vmatpush1.msra.mxu0 %v438
    %1201 = vmatprep.subr.mxu0 0.0
    %1202 = vmatpush1.msra.mxu0 0.0
    %1203 = vmatprep.subr.mxu0 0.0
    %1204 = vmatpush1.msra.mxu0 0.0
    %1205 = vmatprep.subr.mxu0 0.0
    %1206 = vmatpush1.msra.mxu0 0.0
    %1207 = vmatprep.subr.mxu0 0.0
    %1208 = vmatpush1.msra.mxu0 0.0
    %1209 = vmatprep.subr.mxu0 0.0
    %1210 = vmatpush1.msra.mxu0 0.0
    %1211 = vmatprep.subr.mxu0 0.0
    %1212 = vmatpush1.msra.mxu0 0.0
    %1213 = vmatprep.subr.mxu0 0.0
    %1214 = vmatpush1.msra.mxu0 0.0
    %1215 = vmatprep.subr.mxu0 0.0
    %1216 = vmatpush1.msra.mxu0 0.0
    %1217 = vmatprep.subr.mxu0 0.0
    %1218 = vmatpush1.msra.mxu0 0.0
    %1219 = vmatprep.subr.mxu0 0.0
    %1220 = vmatpush1.msra.mxu0 0.0
    %1221 = vmatprep.subr.mxu0 0.0
    %1222 = vmatpush1.msra.mxu0 0.0
    %1223 = vmatprep.subr.mxu0 0.0
    %1224 = vmatpush1.msra.mxu0 0.0
    %1225 = vmatprep.subr.mxu0 0.0
    %1226 = vmatpush1.msra.mxu0 0.0
    %1227 = vmatprep.subr.mxu0 0.0
    %1228 = vmatpush1.msra.mxu0 0.0
    %1229 = vmatprep.subr.mxu0 0.0
    %1230 = vmatpush1.msra.mxu0 0.0
    %1231 = vmatprep.subr.mxu0 0.0
    %1232 = vmatpush1.msra.mxu0 0.0
    %1233 = vmatprep.subr.mxu0 0.0
    %1234 = vmatpush1.msra.mxu0 0.0
    %1235 = vmatprep.subr.mxu0 0.0
    %1236 = vmatpush1.msra.mxu0 0.0
    %1237 = vmatprep.subr.mxu0 0.0
    %1238 = vmatpush1.msra.mxu0 0.0
    %1239 = vmatprep.subr.mxu0 0.0
    %1240 = vmatpush1.msra.mxu0 0.0
    %1241 = vmatprep.subr.mxu0 0.0
    %1242 = vmatpush1.msra.mxu0 0.0
    %1243 = vmatprep.subr.mxu0 0.0
    %1244 = vmatpush1.msra.mxu0 0.0
    %1245 = vmatprep.subr.mxu0 0.0
    %1246 = vmatpush1.msra.mxu0 0.0
    %1247 = vmatprep.subr.mxu0 0.0
    %1248 = vmatpush1.msra.mxu0 0.0
    %1249 = vmatprep.subr.mxu0 0.0
    %1250 = vmatpush1.msra.mxu0 0.0
    %1251 = vmatprep.subr.mxu0 0.0
    %1252 = vmatpush1.msra.mxu0 0.0
    %1253 = vmatprep.subr.mxu0 0.0
    %1254 = vmatpush1.msra.mxu0 0.0
    %1255 = vmatprep.subr.mxu0 0.0
    %1256 = vmatpush1.msra.mxu0 0.0
    %1257 = vmatprep.subr.mxu0 0.0
    %1258 = vmatpush1.msra.mxu0 0.0
    %1259 = vmatprep.subr.mxu0 0.0
    %1260 = vmatpush1.msra.mxu0 0.0
    %1261 = vmatprep.subr.mxu0 0.0
    %1262 = vmatpush1.msra.mxu0 0.0
    %1263 = vmatprep.mubr.f32.mxu0 0.0
    %1264 = vmatmul.mubr.f32.gmra.mrb[0].mxu0 %v1197
    %v1265 = vpop.f32.mrb[0].mxu0
    %v1266 = vadd.f32 0.0, %v1265
    %v1267 = vpop.f32.mrb[0].mxu0
    %1268 = vdwg.mxu0
    %v1270 = vsel %vm481, %v1189, 0
    %1272 = vmatprep.subr.mxu0 0.0
    %1273 = vmatpush1.msra.mxu0 %v443
    %1274 = vmatprep.subr.mxu0 0.0
    %1275 = vmatpush1.msra.mxu0 0.0
    %1276 = vmatprep.subr.mxu0 0.0
    %1277 = vmatpush1.msra.mxu0 0.0
    %1278 = vmatprep.subr.mxu0 0.0
    %1279 = vmatpush1.msra.mxu0 0.0
    %1280 = vmatprep.subr.mxu0 0.0
    %1281 = vmatpush1.msra.mxu0 0.0
    %1282 = vmatprep.subr.mxu0 0.0
    %1283 = vmatpush1.msra.mxu0 0.0
    %1284 = vmatprep.subr.mxu0 0.0
    %1285 = vmatpush1.msra.mxu0 0.0
    %1286 = vmatprep.subr.mxu0 0.0
    %1287 = vmatpush1.msra.mxu0 0.0
    %1288 = vmatprep.subr.mxu0 0.0
    %1289 = vmatpush1.msra.mxu0 0.0
    %1290 = vmatprep.subr.mxu0 0.0
    %1291 = vmatpush1.msra.mxu0 0.0
    %1292 = vmatprep.subr.mxu0 0.0
    %1293 = vmatpush1.msra.mxu0 0.0
    %1294 = vmatprep.subr.mxu0 0.0
    %1295 = vmatpush1.msra.mxu0 0.0
    %1296 = vmatprep.subr.mxu0 0.0
    %1297 = vmatpush1.msra.mxu0 0.0
    %1298 = vmatprep.subr.mxu0 0.0
    %1299 = vmatpush1.msra.mxu0 0.0
    %1300 = vmatprep.subr.mxu0 0.0
    %1301 = vmatpush1.msra.mxu0 0.0
    %1302 = vmatprep.subr.mxu0 0.0
    %1303 = vmatpush1.msra.mxu0 0.0
    %1304 = vmatprep.subr.mxu0 0.0
    %1305 = vmatpush1.msra.mxu0 0.0
    %1306 = vmatprep.subr.mxu0 0.0
    %1307 = vmatpush1.msra.mxu0 0.0
    %1308 = vmatprep.subr.mxu0 0.0
    %1309 = vmatpush1.msra.mxu0 0.0
    %1310 = vmatprep.subr.mxu0 0.0
    %1311 = vmatpush1.msra.mxu0 0.0
    %1312 = vmatprep.subr.mxu0 0.0
    %1313 = vmatpush1.msra.mxu0 0.0
    %1314 = vmatprep.subr.mxu0 0.0
    %1315 = vmatpush1.msra.mxu0 0.0
    %1316 = vmatprep.subr.mxu0 0.0
    %1317 = vmatpush1.msra.mxu0 0.0
    %1318 = vmatprep.subr.mxu0 0.0
    %1319 = vmatpush1.msra.mxu0 0.0
    %1320 = vmatprep.subr.mxu0 0.0
    %1321 = vmatpush1.msra.mxu0 0.0
    %1322 = vmatprep.subr.mxu0 0.0
    %1323 = vmatpush1.msra.mxu0 0.0
    %1324 = vmatprep.subr.mxu0 0.0
    %1325 = vmatpush1.msra.mxu0 0.0
    %1326 = vmatprep.subr.mxu0 0.0
    %1327 = vmatpush1.msra.mxu0 0.0
    %1328 = vmatprep.subr.mxu0 0.0
    %1329 = vmatpush1.msra.mxu0 0.0
    %1330 = vmatprep.subr.mxu0 0.0
    %1331 = vmatpush1.msra.mxu0 0.0
    %1332 = vmatprep.subr.mxu0 0.0
    %1333 = vmatpush1.msra.mxu0 0.0
    %1334 = vmatprep.subr.mxu0 0.0
    %1335 = vmatpush1.msra.mxu0 0.0
    %1336 = vmatprep.mubr.f32.mxu0 0.0
    %1337 = vmatmul.mubr.f32.gmra.mrb[0].mxu0 %v1270
    %v1338 = vpop.f32.mrb[0].mxu0
    %v1339 = vadd.f32 0.0, %v1338
    %v1340 = vpop.f32.mrb[0].mxu0
    %1341 = vdwg.mxu0
    %v1343 = vsel %vm481, %v1190, 0
    %1345 = vmatprep.subr.mxu0 0.0
    %1346 = vmatpush1.msra.mxu0 %v448
    %1347 = vmatprep.subr.mxu0 0.0
    %1348 = vmatpush1.msra.mxu0 0.0
    %1349 = vmatprep.subr.mxu0 0.0
    %1350 = vmatpush1.msra.mxu0 0.0
    %1351 = vmatprep.subr.mxu0 0.0
    %1352 = vmatpush1.msra.mxu0 0.0
    %1353 = vmatprep.subr.mxu0 0.0
    %1354 = vmatpush1.msra.mxu0 0.0
    %1355 = vmatprep.subr.mxu0 0.0
    %1356 = vmatpush1.msra.mxu0 0.0
    %1357 = vmatprep.subr.mxu0 0.0
    %1358 = vmatpush1.msra.mxu0 0.0
    %1359 = vmatprep.subr.mxu0 0.0
    %1360 = vmatpush1.msra.mxu0 0.0
    %1361 = vmatprep.subr.mxu0 0.0
    %1362 = vmatpush1.msra.mxu0 0.0
    %1363 = vmatprep.subr.mxu0 0.0
    %1364 = vmatpush1.msra.mxu0 0.0
    %1365 = vmatprep.subr.mxu0 0.0
    %1366 = vmatpush1.msra.mxu0 0.0
    %1367 = vmatprep.subr.mxu0 0.0
    %1368 = vmatpush1.msra.mxu0 0.0
    %1369 = vmatprep.subr.mxu0 0.0
    %1370 = vmatpush1.msra.mxu0 0.0
    %1371 = vmatprep.subr.mxu0 0.0
    %1372 = vmatpush1.msra.mxu0 0.0
    %1373 = vmatprep.subr.mxu0 0.0
    %1374 = vmatpush1.msra.mxu0 0.0
    %1375 = vmatprep.subr.mxu0 0.0
    %1376 = vmatpush1.msra.mxu0 0.0
    %1377 = vmatprep.subr.mxu0 0.0
    %1378 = vmatpush1.msra.mxu0 0.0
    %1379 = vmatprep.subr.mxu0 0.0
    %1380 = vmatpush1.msra.mxu0 0.0
    %1381 = vmatprep.subr.mxu0 0.0
    %1382 = vmatpush1.msra.mxu0 0.0
    %1383 = vmatprep.subr.mxu0 0.0
    %1384 = vmatpush1.msra.mxu0 0.0
    %1385 = vmatprep.subr.mxu0 0.0
    %1386 = vmatpush1.msra.mxu0 0.0
    %1387 = vmatprep.subr.mxu0 0.0
    %1388 = vmatpush1.msra.mxu0 0.0
    %1389 = vmatprep.subr.mxu0 0.0
    %1390 = vmatpush1.msra.mxu0 0.0
    %1391 = vmatprep.subr.mxu0 0.0
    %1392 = vmatpush1.msra.mxu0 0.0
    %1393 = vmatprep.subr.mxu0 0.0
    %1394 = vmatpush1.msra.mxu0 0.0
    %1395 = vmatprep.subr.mxu0 0.0
    %1396 = vmatpush1.msra.mxu0 0.0
    %1397 = vmatprep.subr.mxu0 0.0
    %1398 = vmatpush1.msra.mxu0 0.0
    %1399 = vmatprep.subr.mxu0 0.0
    %1400 = vmatpush1.msra.mxu0 0.0
    %1401 = vmatprep.subr.mxu0 0.0
    %1402 = vmatpush1.msra.mxu0 0.0
    %1403 = vmatprep.subr.mxu0 0.0
    %1404 = vmatpush1.msra.mxu0 0.0
    %1405 = vmatprep.subr.mxu0 0.0
    %1406 = vmatpush1.msra.mxu0 0.0
    %1407 = vmatprep.subr.mxu0 0.0
    %1408 = vmatpush1.msra.mxu0 0.0
    %1409 = vmatprep.mubr.f32.mxu0 0.0
    %1410 = vmatmul.mubr.f32.gmra.mrb[0].mxu0 %v1343
    %v1411 = vpop.f32.mrb[0].mxu0
    %v1412 = vadd.f32 0.0, %v1411
    %v1413 = vpop.f32.mrb[0].mxu0
    %1414 = vdwg.mxu0
    %v1416 = vsel %vm481, %v1191, 0
    %1418 = vmatprep.subr.mxu0 0.0
    %1419 = vmatpush1.msra.mxu0 %v453
    %1420 = vmatprep.subr.mxu0 0.0
    %1421 = vmatpush1.msra.mxu0 0.0
    %1422 = vmatprep.subr.mxu0 0.0
    %1423 = vmatpush1.msra.mxu0 0.0
    %1424 = vmatprep.subr.mxu0 0.0
    %1425 = vmatpush1.msra.mxu0 0.0
    %1426 = vmatprep.subr.mxu0 0.0
    %1427 = vmatpush1.msra.mxu0 0.0
    %1428 = vmatprep.subr.mxu0 0.0
    %1429 = vmatpush1.msra.mxu0 0.0
    %1430 = vmatprep.subr.mxu0 0.0
    %1431 = vmatpush1.msra.mxu0 0.0
    %1432 = vmatprep.subr.mxu0 0.0
    %1433 = vmatpush1.msra.mxu0 0.0
    %1434 = vmatprep.subr.mxu0 0.0
    %1435 = vmatpush1.msra.mxu0 0.0
    %1436 = vmatprep.subr.mxu0 0.0
    %1437 = vmatpush1.msra.mxu0 0.0
    %1438 = vmatprep.subr.mxu0 0.0
    %1439 = vmatpush1.msra.mxu0 0.0
    %1440 = vmatprep.subr.mxu0 0.0
    %1441 = vmatpush1.msra.mxu0 0.0
    %1442 = vmatprep.subr.mxu0 0.0
    %1443 = vmatpush1.msra.mxu0 0.0
    %1444 = vmatprep.subr.mxu0 0.0
    %1445 = vmatpush1.msra.mxu0 0.0
    %1446 = vmatprep.subr.mxu0 0.0
    %1447 = vmatpush1.msra.mxu0 0.0
    %1448 = vmatprep.subr.mxu0 0.0
    %1449 = vmatpush1.msra.mxu0 0.0
    %1450 = vmatprep.subr.mxu0 0.0
    %1451 = vmatpush1.msra.mxu0 0.0
    %1452 = vmatprep.subr.mxu0 0.0
    %1453 = vmatpush1.msra.mxu0 0.0
    %1454 = vmatprep.subr.mxu0 0.0
    %1455 = vmatpush1.msra.mxu0 0.0
    %1456 = vmatprep.subr.mxu0 0.0
    %1457 = vmatpush1.msra.mxu0 0.0
    %1458 = vmatprep.subr.mxu0 0.0
    %1459 = vmatpush1.msra.mxu0 0.0
    %1460 = vmatprep.subr.mxu0 0.0
    %1461 = vmatpush1.msra.mxu0 0.0
    %1462 = vmatprep.subr.mxu0 0.0
    %1463 = vmatpush1.msra.mxu0 0.0
    %1464 = vmatprep.subr.mxu0 0.0
    %1465 = vmatpush1.msra.mxu0 0.0
    %1466 = vmatprep.subr.mxu0 0.0
    %1467 = vmatpush1.msra.mxu0 0.0
    %1468 = vmatprep.subr.mxu0 0.0
    %1469 = vmatpush1.msra.mxu0 0.0
    %1470 = vmatprep.subr.mxu0 0.0
    %1471 = vmatpush1.msra.mxu0 0.0
    %1472 = vmatprep.subr.mxu0 0.0
    %1473 = vmatpush1.msra.mxu0 0.0
    %1474 = vmatprep.subr.mxu0 0.0
    %1475 = vmatpush1.msra.mxu0 0.0
    %1476 = vmatprep.subr.mxu0 0.0
    %1477 = vmatpush1.msra.mxu0 0.0
    %1478 = vmatprep.subr.mxu0 0.0
    %1479 = vmatpush1.msra.mxu0 0.0
    %1480 = vmatprep.subr.mxu0 0.0
    %1481 = vmatpush1.msra.mxu0 0.0
    %1482 = vmatprep.mubr.f32.mxu0 0.0
    %1483 = vmatmul.mubr.f32.gmra.mrb[0].mxu0 %v1416
    %v1484 = vpop.f32.mrb[0].mxu0
    %v1485 = vadd.f32 0.0, %v1484
    %v1486 = vpop.f32.mrb[0].mxu0
    %1487 = vdwg.mxu0
    %v1489 = vsel %vm481, %v1192, 0
    %1491 = vmatprep.subr.mxu0 0.0
    %1492 = vmatpush1.msra.mxu0 %v458
    %1493 = vmatprep.subr.mxu0 0.0
    %1494 = vmatpush1.msra.mxu0 0.0
    %1495 = vmatprep.subr.mxu0 0.0
    %1496 = vmatpush1.msra.mxu0 0.0
    %1497 = vmatprep.subr.mxu0 0.0
    %1498 = vmatpush1.msra.mxu0 0.0
    %1499 = vmatprep.subr.mxu0 0.0
    %1500 = vmatpush1.msra.mxu0 0.0
    %1501 = vmatprep.subr.mxu0 0.0
    %1502 = vmatpush1.msra.mxu0 0.0
    %1503 = vmatprep.subr.mxu0 0.0
    %1504 = vmatpush1.msra.mxu0 0.0
    %1505 = vmatprep.subr.mxu0 0.0
    %1506 = vmatpush1.msra.mxu0 0.0
    %1507 = vmatprep.subr.mxu0 0.0
    %1508 = vmatpush1.msra.mxu0 0.0
    %1509 = vmatprep.subr.mxu0 0.0
    %1510 = vmatpush1.msra.mxu0 0.0
    %1511 = vmatprep.subr.mxu0 0.0
    %1512 = vmatpush1.msra.mxu0 0.0
    %1513 = vmatprep.subr.mxu0 0.0
    %1514 = vmatpush1.msra.mxu0 0.0
    %1515 = vmatprep.subr.mxu0 0.0
    %1516 = vmatpush1.msra.mxu0 0.0
    %1517 = vmatprep.subr.mxu0 0.0
    %1518 = vmatpush1.msra.mxu0 0.0
    %1519 = vmatprep.subr.mxu0 0.0
    %1520 = vmatpush1.msra.mxu0 0.0
    %1521 = vmatprep.subr.mxu0 0.0
    %1522 = vmatpush1.msra.mxu0 0.0
    %1523 = vmatprep.subr.mxu0 0.0
    %1524 = vmatpush1.msra.mxu0 0.0
    %1525 = vmatprep.subr.mxu0 0.0
    %1526 = vmatpush1.msra.mxu0 0.0
    %1527 = vmatprep.subr.mxu0 0.0
    %1528 = vmatpush1.msra.mxu0 0.0
    %1529 = vmatprep.subr.mxu0 0.0
    %1530 = vmatpush1.msra.mxu0 0.0
    %1531 = vmatprep.subr.mxu0 0.0
    %1532 = vmatpush1.msra.mxu0 0.0
    %1533 = vmatprep.subr.mxu0 0.0
    %1534 = vmatpush1.msra.mxu0 0.0
    %1535 = vmatprep.subr.mxu0 0.0
    %1536 = vmatpush1.msra.mxu0 0.0
    %1537 = vmatprep.subr.mxu0 0.0
    %1538 = vmatpush1.msra.mxu0 0.0
    %1539 = vmatprep.subr.mxu0 0.0
    %1540 = vmatpush1.msra.mxu0 0.0
    %1541 = vmatprep.subr.mxu0 0.0
    %1542 = vmatpush1.msra.mxu0 0.0
    %1543 = vmatprep.subr.mxu0 0.0
    %1544 = vmatpush1.msra.mxu0 0.0
    %1545 = vmatprep.subr.mxu0 0.0
    %1546 = vmatpush1.msra.mxu0 0.0
    %1547 = vmatprep.subr.mxu0 0.0
    %1548 = vmatpush1.msra.mxu0 0.0
    %1549 = vmatprep.subr.mxu0 0.0
    %1550 = vmatpush1.msra.mxu0 0.0
    %1551 = vmatprep.subr.mxu0 0.0
    %1552 = vmatpush1.msra.mxu0 0.0
    %1553 = vmatprep.subr.mxu0 0.0
    %1554 = vmatpush1.msra.mxu0 0.0
    %1555 = vmatprep.mubr.f32.mxu0 0.0
    %1556 = vmatmul.mubr.f32.gmra.mrb[0].mxu0 %v1489
    %v1557 = vpop.f32.mrb[0].mxu0
    %v1558 = vadd.f32 0.0, %v1557
    %v1559 = vpop.f32.mrb[0].mxu0
    %1560 = vdwg.mxu0
    %v1562 = vsel %vm481, %v1193, 0
    %1564 = vmatprep.subr.mxu0 0.0
    %1565 = vmatpush1.msra.mxu0 %v463
    %1566 = vmatprep.subr.mxu0 0.0
    %1567 = vmatpush1.msra.mxu0 0.0
    %1568 = vmatprep.subr.mxu0 0.0
    %1569 = vmatpush1.msra.mxu0 0.0
    %1570 = vmatprep.subr.mxu0 0.0
    %1571 = vmatpush1.msra.mxu0 0.0
    %1572 = vmatprep.subr.mxu0 0.0
    %1573 = vmatpush1.msra.mxu0 0.0
    %1574 = vmatprep.subr.mxu0 0.0
    %1575 = vmatpush1.msra.mxu0 0.0
    %1576 = vmatprep.subr.mxu0 0.0
    %1577 = vmatpush1.msra.mxu0 0.0
    %1578 = vmatprep.subr.mxu0 0.0
    %1579 = vmatpush1.msra.mxu0 0.0
    %1580 = vmatprep.subr.mxu0 0.0
    %1581 = vmatpush1.msra.mxu0 0.0
    %1582 = vmatprep.subr.mxu0 0.0
    %1583 = vmatpush1.msra.mxu0 0.0
    %1584 = vmatprep.subr.mxu0 0.0
    %1585 = vmatpush1.msra.mxu0 0.0
    %1586 = vmatprep.subr.mxu0 0.0
    %1587 = vmatpush1.msra.mxu0 0.0
    %1588 = vmatprep.subr.mxu0 0.0
    %1589 = vmatpush1.msra.mxu0 0.0
    %1590 = vmatprep.subr.mxu0 0.0
    %1591 = vmatpush1.msra.mxu0 0.0
    %1592 = vmatprep.subr.mxu0 0.0
    %1593 = vmatpush1.msra.mxu0 0.0
    %1594 = vmatprep.subr.mxu0 0.0
    %1595 = vmatpush1.msra.mxu0 0.0
    %1596 = vmatprep.subr.mxu0 0.0
    %1597 = vmatpush1.msra.mxu0 0.0
    %1598 = vmatprep.subr.mxu0 0.0
    %1599 = vmatpush1.msra.mxu0 0.0
    %1600 = vmatprep.subr.mxu0 0.0
    %1601 = vmatpush1.msra.mxu0 0.0
    %1602 = vmatprep.subr.mxu0 0.0
    %1603 = vmatpush1.msra.mxu0 0.0
    %1604 = vmatprep.subr.mxu0 0.0
    %1605 = vmatpush1.msra.mxu0 0.0
    %1606 = vmatprep.subr.mxu0 0.0
    %1607 = vmatpush1.msra.mxu0 0.0
    %1608 = vmatprep.subr.mxu0 0.0
    %1609 = vmatpush1.msra.mxu0 0.0
    %1610 = vmatprep.subr.mxu0 0.0
    %1611 = vmatpush1.msra.mxu0 0.0
    %1612 = vmatprep.subr.mxu0 0.0
    %1613 = vmatpush1.msra.mxu0 0.0
    %1614 = vmatprep.subr.mxu0 0.0
    %1615 = vmatpush1.msra.mxu0 0.0
    %1616 = vmatprep.subr.mxu0 0.0
    %1617 = vmatpush1.msra.mxu0 0.0
    %1618 = vmatprep.subr.mxu0 0.0
    %1619 = vmatpush1.msra.mxu0 0.0
    %1620 = vmatprep.subr.mxu0 0.0
    %1621 = vmatpush1.msra.mxu0 0.0
    %1622 = vmatprep.subr.mxu0 0.0
    %1623 = vmatpush1.msra.mxu0 0.0
    %1624 = vmatprep.subr.mxu0 0.0
    %1625 = vmatpush1.msra.mxu0 0.0
    %1626 = vmatprep.subr.mxu0 0.0
    %1627 = vmatpush1.msra.mxu0 0.0
    %1628 = vmatprep.mubr.f32.mxu0 0.0
    %1629 = vmatmul.mubr.f32.gmra.mrb[0].mxu0 %v1562
    %v1630 = vpop.f32.mrb[0].mxu0
    %v1631 = vadd.f32 0.0, %v1630
    %v1632 = vpop.f32.mrb[0].mxu0
    %1633 = vdwg.mxu0
    %v1635 = vsel %vm481, %v1194, 0
    %1637 = vmatprep.subr.mxu0 0.0
    %1638 = vmatpush1.msra.mxu0 %v468
    %1639 = vmatprep.subr.mxu0 0.0
    %1640 = vmatpush1.msra.mxu0 0.0
    %1641 = vmatprep.subr.mxu0 0.0
    %1642 = vmatpush1.msra.mxu0 0.0
    %1643 = vmatprep.subr.mxu0 0.0
    %1644 = vmatpush1.msra.mxu0 0.0
    %1645 = vmatprep.subr.mxu0 0.0
    %1646 = vmatpush1.msra.mxu0 0.0
    %1647 = vmatprep.subr.mxu0 0.0
    %1648 = vmatpush1.msra.mxu0 0.0
    %1649 = vmatprep.subr.mxu0 0.0
    %1650 = vmatpush1.msra.mxu0 0.0
    %1651 = vmatprep.subr.mxu0 0.0
    %1652 = vmatpush1.msra.mxu0 0.0
    %1653 = vmatprep.subr.mxu0 0.0
    %1654 = vmatpush1.msra.mxu0 0.0
    %1655 = vmatprep.subr.mxu0 0.0
    %1656 = vmatpush1.msra.mxu0 0.0
    %1657 = vmatprep.subr.mxu0 0.0
    %1658 = vmatpush1.msra.mxu0 0.0
    %1659 = vmatprep.subr.mxu0 0.0
    %1660 = vmatpush1.msra.mxu0 0.0
    %1661 = vmatprep.subr.mxu0 0.0
    %1662 = vmatpush1.msra.mxu0 0.0
    %1663 = vmatprep.subr.mxu0 0.0
    %1664 = vmatpush1.msra.mxu0 0.0
    %1665 = vmatprep.subr.mxu0 0.0
    %1666 = vmatpush1.msra.mxu0 0.0
    %1667 = vmatprep.subr.mxu0 0.0
    %1668 = vmatpush1.msra.mxu0 0.0
    %1669 = vmatprep.subr.mxu0 0.0
    %1670 = vmatpush1.msra.mxu0 0.0
    %1671 = vmatprep.subr.mxu0 0.0
    %1672 = vmatpush1.msra.mxu0 0.0
    %1673 = vmatprep.subr.mxu0 0.0
    %1674 = vmatpush1.msra.mxu0 0.0
    %1675 = vmatprep.subr.mxu0 0.0
    %1676 = vmatpush1.msra.mxu0 0.0
    %1677 = vmatprep.subr.mxu0 0.0
    %1678 = vmatpush1.msra.mxu0 0.0
    %1679 = vmatprep.subr.mxu0 0.0
    %1680 = vmatpush1.msra.mxu0 0.0
    %1681 = vmatprep.subr.mxu0 0.0
    %1682 = vmatpush1.msra.mxu0 0.0
    %1683 = vmatprep.subr.mxu0 0.0
    %1684 = vmatpush1.msra.mxu0 0.0
    %1685 = vmatprep.subr.mxu0 0.0
    %1686 = vmatpush1.msra.mxu0 0.0
    %1687 = vmatprep.subr.mxu0 0.0
    %1688 = vmatpush1.msra.mxu0 0.0
    %1689 = vmatprep.subr.mxu0 0.0
    %1690 = vmatpush1.msra.mxu0 0.0
    %1691 = vmatprep.subr.mxu0 0.0
    %1692 = vmatpush1.msra.mxu0 0.0
    %1693 = vmatprep.subr.mxu0 0.0
    %1694 = vmatpush1.msra.mxu0 0.0
    %1695 = vmatprep.subr.mxu0 0.0
    %1696 = vmatpush1.msra.mxu0 0.0
    %1697 = vmatprep.subr.mxu0 0.0
    %1698 = vmatpush1.msra.mxu0 0.0
    %1699 = vmatprep.subr.mxu0 0.0
    %1700 = vmatpush1.msra.mxu0 0.0
    %1701 = vmatprep.mubr.f32.mxu0 0.0
    %1702 = vmatmul.mubr.f32.gmra.mrb[0].mxu0 %v1635
    %v1703 = vpop.f32.mrb[0].mxu0
    %v1704 = vadd.f32 0.0, %v1703
    %v1705 = vpop.f32.mrb[0].mxu0
    %1706 = vdwg.mxu0
    %v1708 = vsel %vm481, %v1195, 0
    %1710 = vmatprep.subr.mxu0 0.0
    %1711 = vmatpush1.msra.mxu0 %v473
    %1712 = vmatprep.subr.mxu0 0.0
    %1713 = vmatpush1.msra.mxu0 0.0
    %1714 = vmatprep.subr.mxu0 0.0
    %1715 = vmatpush1.msra.mxu0 0.0
    %1716 = vmatprep.subr.mxu0 0.0
    %1717 = vmatpush1.msra.mxu0 0.0
    %1718 = vmatprep.subr.mxu0 0.0
    %1719 = vmatpush1.msra.mxu0 0.0
    %1720 = vmatprep.subr.mxu0 0.0
    %1721 = vmatpush1.msra.mxu0 0.0
    %1722 = vmatprep.subr.mxu0 0.0
    %1723 = vmatpush1.msra.mxu0 0.0
    %1724 = vmatprep.subr.mxu0 0.0
    %1725 = vmatpush1.msra.mxu0 0.0
    %1726 = vmatprep.subr.mxu0 0.0
    %1727 = vmatpush1.msra.mxu0 0.0
    %1728 = vmatprep.subr.mxu0 0.0
    %1729 = vmatpush1.msra.mxu0 0.0
    %1730 = vmatprep.subr.mxu0 0.0
    %1731 = vmatpush1.msra.mxu0 0.0
    %1732 = vmatprep.subr.mxu0 0.0
    %1733 = vmatpush1.msra.mxu0 0.0
    %1734 = vmatprep.subr.mxu0 0.0
    %1735 = vmatpush1.msra.mxu0 0.0
    %1736 = vmatprep.subr.mxu0 0.0
    %1737 = vmatpush1.msra.mxu0 0.0
    %1738 = vmatprep.subr.mxu0 0.0
    %1739 = vmatpush1.msra.mxu0 0.0
    %1740 = vmatprep.subr.mxu0 0.0
    %1741 = vmatpush1.msra.mxu0 0.0
    %1742 = vmatprep.subr.mxu0 0.0
    %1743 = vmatpush1.msra.mxu0 0.0
    %1744 = vmatprep.subr.mxu0 0.0
    %1745 = vmatpush1.msra.mxu0 0.0
    %1746 = vmatprep.subr.mxu0 0.0
    %1747 = vmatpush1.msra.mxu0 0.0
    %1748 = vmatprep.subr.mxu0 0.0
    %1749 = vmatpush1.msra.mxu0 0.0
    %1750 = vmatprep.subr.mxu0 0.0
    %1751 = vmatpush1.msra.mxu0 0.0
    %1752 = vmatprep.subr.mxu0 0.0
    %1753 = vmatpush1.msra.mxu0 0.0
    %1754 = vmatprep.subr.mxu0 0.0
    %1755 = vmatpush1.msra.mxu0 0.0
    %1756 = vmatprep.subr.mxu0 0.0
    %1757 = vmatpush1.msra.mxu0 0.0
    %1758 = vmatprep.subr.mxu0 0.0
    %1759 = vmatpush1.msra.mxu0 0.0
    %1760 = vmatprep.subr.mxu0 0.0
    %1761 = vmatpush1.msra.mxu0 0.0
    %1762 = vmatprep.subr.mxu0 0.0
    %1763 = vmatpush1.msra.mxu0 0.0
    %1764 = vmatprep.subr.mxu0 0.0
    %1765 = vmatpush1.msra.mxu0 0.0
    %1766 = vmatprep.subr.mxu0 0.0
    %1767 = vmatpush1.msra.mxu0 0.0
    %1768 = vmatprep.subr.mxu0 0.0
    %1769 = vmatpush1.msra.mxu0 0.0
    %1770 = vmatprep.subr.mxu0 0.0
    %1771 = vmatpush1.msra.mxu0 0.0
    %1772 = vmatprep.subr.mxu0 0.0
    %1773 = vmatpush1.msra.mxu0 0.0
    %1774 = vmatprep.mubr.f32.mxu0 0.0
    %1775 = vmatmul.mubr.f32.gmra.mrb[0].mxu0 %v1708
    %v1776 = vpop.f32.mrb[0].mxu0
    %v1777 = vadd.f32 0.0, %v1776
    %v1778 = vpop.f32.mrb[0].mxu0
    %1779 = vdwg.mxu0
    %1780 = vrot.lane.b32.xlu0 %v220, 120
    %v1781 = vpop.permute.xlu0 %1780
    %1782 = vrot.lane.b32.xlu0 %v329, 120
    %v1783 = vpop.permute.xlu0 %1782
    %v1784 = vsel %vm481, %v1781, 0
    %v1786 = vsel %vm481, %v1783, 0
    %1788 = vmatprep.subr.mxu0 0.0
    %1789 = vmatpush1.xpose.msra.mxu0 %v1786
    %1790 = vmatprep.subr.mxu0 0.0
    %1791 = vmatpush1.xpose.msra.mxu0 0.0
    %1792 = vmatprep.subr.mxu0 0.0
    %1793 = vmatpush1.xpose.msra.mxu0 0.0
    %1794 = vmatprep.subr.mxu0 0.0
    %1795 = vmatpush1.xpose.msra.mxu0 0.0
    %1796 = vmatprep.subr.mxu0 0.0
    %1797 = vmatpush1.xpose.msra.mxu0 0.0
    %1798 = vmatprep.subr.mxu0 0.0
    %1799 = vmatpush1.xpose.msra.mxu0 0.0
    %1800 = vmatprep.subr.mxu0 0.0
    %1801 = vmatpush1.xpose.msra.mxu0 0.0
    %1802 = vmatprep.subr.mxu0 0.0
    %1803 = vmatpush1.xpose.msra.mxu0 0.0
    %1804 = vmatprep.subr.mxu0 0.0
    %1805 = vmatpush1.xpose.msra.mxu0 0.0
    %1806 = vmatprep.subr.mxu0 0.0
    %1807 = vmatpush1.xpose.msra.mxu0 0.0
    %1808 = vmatprep.subr.mxu0 0.0
    %1809 = vmatpush1.xpose.msra.mxu0 0.0
    %1810 = vmatprep.subr.mxu0 0.0
    %1811 = vmatpush1.xpose.msra.mxu0 0.0
    %1812 = vmatprep.subr.mxu0 0.0
    %1813 = vmatpush1.xpose.msra.mxu0 0.0
    %1814 = vmatprep.subr.mxu0 0.0
    %1815 = vmatpush1.xpose.msra.mxu0 0.0
    %1816 = vmatprep.subr.mxu0 0.0
    %1817 = vmatpush1.xpose.msra.mxu0 0.0
    %1818 = vmatprep.subr.mxu0 0.0
    %1819 = vmatpush1.xpose.msra.mxu0 0.0
    %1820 = vmatprep.subr.mxu0 0.0
    %1821 = vmatpush1.xpose.msra.mxu0 0.0
    %1822 = vmatprep.subr.mxu0 0.0
    %1823 = vmatpush1.xpose.msra.mxu0 0.0
    %1824 = vmatprep.subr.mxu0 0.0
    %1825 = vmatpush1.xpose.msra.mxu0 0.0
    %1826 = vmatprep.subr.mxu0 0.0
    %1827 = vmatpush1.xpose.msra.mxu0 0.0
    %1828 = vmatprep.subr.mxu0 0.0
    %1829 = vmatpush1.xpose.msra.mxu0 0.0
    %1830 = vmatprep.subr.mxu0 0.0
    %1831 = vmatpush1.xpose.msra.mxu0 0.0
    %1832 = vmatprep.subr.mxu0 0.0
    %1833 = vmatpush1.xpose.msra.mxu0 0.0
    %1834 = vmatprep.subr.mxu0 0.0
    %1835 = vmatpush1.xpose.msra.mxu0 0.0
    %1836 = vmatprep.subr.mxu0 0.0
    %1837 = vmatpush1.xpose.msra.mxu0 0.0
    %1838 = vmatprep.subr.mxu0 0.0
    %1839 = vmatpush1.xpose.msra.mxu0 0.0
    %1840 = vmatprep.subr.mxu0 0.0
    %1841 = vmatpush1.xpose.msra.mxu0 0.0
    %1842 = vmatprep.subr.mxu0 0.0
    %1843 = vmatpush1.xpose.msra.mxu0 0.0
    %1844 = vmatprep.subr.mxu0 0.0
    %1845 = vmatpush1.xpose.msra.mxu0 0.0
    %1846 = vmatprep.subr.mxu0 0.0
    %1847 = vmatpush1.xpose.msra.mxu0 0.0
    %1848 = vmatprep.subr.mxu0 0.0
    %1849 = vmatpush1.xpose.msra.mxu0 0.0
    %1850 = vmatprep.subr.mxu0 0.0
    %1851 = vmatpush1.xpose.msra.mxu0 0.0
    %1852 = vmatprep.mubr.f32.mxu0 0.0
    %1853 = vmatmul.mubr.f32.gmra.mrb[0].mxu0 %v1784
    %v1854 = vpop.f32.mrb[0].mxu0
    %v1855 = vadd.f32 0.0, %v1854
    %v1856 = vpop.f32.mrb[0].mxu0
    %1857 = vdwg.mxu0
    %1858 = vrot.lane.b32.xlu0 %v225, 120
    %v1859 = vpop.permute.xlu0 %1858
    %1860 = vrot.lane.b32.xlu0 %v334, 120
    %v1861 = vpop.permute.xlu0 %1860
    %v1862 = vsel %vm481, %v1859, 0
    %v1864 = vsel %vm481, %v1861, 0
    %1866 = vmatprep.subr.mxu0 0.0
    %1867 = vmatpush1.xpose.msra.mxu0 %v1864
    %1868 = vmatprep.subr.mxu0 0.0
    %1869 = vmatpush1.xpose.msra.mxu0 0.0
    %1870 = vmatprep.subr.mxu0 0.0
    %1871 = vmatpush1.xpose.msra.mxu0 0.0
    %1872 = vmatprep.subr.mxu0 0.0
    %1873 = vmatpush1.xpose.msra.mxu0 0.0
    %1874 = vmatprep.subr.mxu0 0.0
    %1875 = vmatpush1.xpose.msra.mxu0 0.0
    %1876 = vmatprep.subr.mxu0 0.0
    %1877 = vmatpush1.xpose.msra.mxu0 0.0
    %1878 = vmatprep.subr.mxu0 0.0
    %1879 = vmatpush1.xpose.msra.mxu0 0.0
    %1880 = vmatprep.subr.mxu0 0.0
    %1881 = vmatpush1.xpose.msra.mxu0 0.0
    %1882 = vmatprep.subr.mxu0 0.0
    %1883 = vmatpush1.xpose.msra.mxu0 0.0
    %1884 = vmatprep.subr.mxu0 0.0
    %1885 = vmatpush1.xpose.msra.mxu0 0.0
    %1886 = vmatprep.subr.mxu0 0.0
    %1887 = vmatpush1.xpose.msra.mxu0 0.0
    %1888 = vmatprep.subr.mxu0 0.0
    %1889 = vmatpush1.xpose.msra.mxu0 0.0
    %1890 = vmatprep.subr.mxu0 0.0
    %1891 = vmatpush1.xpose.msra.mxu0 0.0
    %1892 = vmatprep.subr.mxu0 0.0
    %1893 = vmatpush1.xpose.msra.mxu0 0.0
    %1894 = vmatprep.subr.mxu0 0.0
    %1895 = vmatpush1.xpose.msra.mxu0 0.0
    %1896 = vmatprep.subr.mxu0 0.0
    %1897 = vmatpush1.xpose.msra.mxu0 0.0
    %1898 = vmatprep.subr.mxu0 0.0
    %1899 = vmatpush1.xpose.msra.mxu0 0.0
    %1900 = vmatprep.subr.mxu0 0.0
    %1901 = vmatpush1.xpose.msra.mxu0 0.0
    %1902 = vmatprep.subr.mxu0 0.0
    %1903 = vmatpush1.xpose.msra.mxu0 0.0
    %1904 = vmatprep.subr.mxu0 0.0
    %1905 = vmatpush1.xpose.msra.mxu0 0.0
    %1906 = vmatprep.subr.mxu0 0.0
    %1907 = vmatpush1.xpose.msra.mxu0 0.0
    %1908 = vmatprep.subr.mxu0 0.0
    %1909 = vmatpush1.xpose.msra.mxu0 0.0
    %1910 = vmatprep.subr.mxu0 0.0
    %1911 = vmatpush1.xpose.msra.mxu0 0.0
    %1912 = vmatprep.subr.mxu0 0.0
    %1913 = vmatpush1.xpose.msra.mxu0 0.0
    %1914 = vmatprep.subr.mxu0 0.0
    %1915 = vmatpush1.xpose.msra.mxu0 0.0
    %1916 = vmatprep.subr.mxu0 0.0
    %1917 = vmatpush1.xpose.msra.mxu0 0.0
    %1918 = vmatprep.subr.mxu0 0.0
    %1919 = vmatpush1.xpose.msra.mxu0 0.0
    %1920 = vmatprep.subr.mxu0 0.0
    %1921 = vmatpush1.xpose.msra.mxu0 0.0
    %1922 = vmatprep.subr.mxu0 0.0
    %1923 = vmatpush1.xpose.msra.mxu0 0.0
    %1924 = vmatprep.subr.mxu0 0.0
    %1925 = vmatpush1.xpose.msra.mxu0 0.0
    %1926 = vmatprep.subr.mxu0 0.0
    %1927 = vmatpush1.xpose.msra.mxu0 0.0
    %1928 = vmatprep.subr.mxu0 0.0
    %1929 = vmatpush1.xpose.msra.mxu0 0.0
    %1930 = vmatprep.mubr.f32.mxu0 0.0
    %1931 = vmatmul.mubr.f32.gmra.mrb[0].mxu0 %v1862
    %v1932 = vpop.f32.mrb[0].mxu0
    %v1933 = vadd.f32 0.0, %v1932
    %v1934 = vpop.f32.mrb[0].mxu0
    %1935 = vdwg.mxu0
    %1936 = vrot.lane.b32.xlu0 %v230, 120
    %v1937 = vpop.permute.xlu0 %1936
    %1938 = vrot.lane.b32.xlu0 %v339, 120
    %v1939 = vpop.permute.xlu0 %1938
    %v1940 = vsel %vm481, %v1937, 0
    %v1942 = vsel %vm481, %v1939, 0
    %1944 = vmatprep.subr.mxu0 0.0
    %1945 = vmatpush1.xpose.msra.mxu0 %v1942
    %1946 = vmatprep.subr.mxu0 0.0
    %1947 = vmatpush1.xpose.msra.mxu0 0.0
    %1948 = vmatprep.subr.mxu0 0.0
    %1949 = vmatpush1.xpose.msra.mxu0 0.0
    %1950 = vmatprep.subr.mxu0 0.0
    %1951 = vmatpush1.xpose.msra.mxu0 0.0
    %1952 = vmatprep.subr.mxu0 0.0
    %1953 = vmatpush1.xpose.msra.mxu0 0.0
    %1954 = vmatprep.subr.mxu0 0.0
    %1955 = vmatpush1.xpose.msra.mxu0 0.0
    %1956 = vmatprep.subr.mxu0 0.0
    %1957 = vmatpush1.xpose.msra.mxu0 0.0
    %1958 = vmatprep.subr.mxu0 0.0
    %1959 = vmatpush1.xpose.msra.mxu0 0.0
    %1960 = vmatprep.subr.mxu0 0.0
    %1961 = vmatpush1.xpose.msra.mxu0 0.0
    %1962 = vmatprep.subr.mxu0 0.0
    %1963 = vmatpush1.xpose.msra.mxu0 0.0
    %1964 = vmatprep.subr.mxu0 0.0
    %1965 = vmatpush1.xpose.msra.mxu0 0.0
    %1966 = vmatprep.subr.mxu0 0.0
    %1967 = vmatpush1.xpose.msra.mxu0 0.0
    %1968 = vmatprep.subr.mxu0 0.0
    %1969 = vmatpush1.xpose.msra.mxu0 0.0
    %1970 = vmatprep.subr.mxu0 0.0
    %1971 = vmatpush1.xpose.msra.mxu0 0.0
    %1972 = vmatprep.subr.mxu0 0.0
    %1973 = vmatpush1.xpose.msra.mxu0 0.0
    %1974 = vmatprep.subr.mxu0 0.0
    %1975 = vmatpush1.xpose.msra.mxu0 0.0
    %1976 = vmatprep.subr.mxu0 0.0
    %1977 = vmatpush1.xpose.msra.mxu0 0.0
    %1978 = vmatprep.subr.mxu0 0.0
    %1979 = vmatpush1.xpose.msra.mxu0 0.0
    %1980 = vmatprep.subr.mxu0 0.0
    %1981 = vmatpush1.xpose.msra.mxu0 0.0
    %1982 = vmatprep.subr.mxu0 0.0
    %1983 = vmatpush1.xpose.msra.mxu0 0.0
    %1984 = vmatprep.subr.mxu0 0.0
    %1985 = vmatpush1.xpose.msra.mxu0 0.0
    %1986 = vmatprep.subr.mxu0 0.0
    %1987 = vmatpush1.xpose.msra.mxu0 0.0
    %1988 = vmatprep.subr.mxu0 0.0
    %1989 = vmatpush1.xpose.msra.mxu0 0.0
    %1990 = vmatprep.subr.mxu0 0.0
    %1991 = vmatpush1.xpose.msra.mxu0 0.0
    %1992 = vmatprep.subr.mxu0 0.0
    %1993 = vmatpush1.xpose.msra.mxu0 0.0
    %1994 = vmatprep.subr.mxu0 0.0
    %1995 = vmatpush1.xpose.msra.mxu0 0.0
    %1996 = vmatprep.subr.mxu0 0.0
    %1997 = vmatpush1.xpose.msra.mxu0 0.0
    %1998 = vmatprep.subr.mxu0 0.0
    %1999 = vmatpush1.xpose.msra.mxu0 0.0
    %2000 = vmatprep.subr.mxu0 0.0
    %2001 = vmatpush1.xpose.msra.mxu0 0.0
    %2002 = vmatprep.subr.mxu0 0.0
    %2003 = vmatpush1.xpose.msra.mxu0 0.0
    %2004 = vmatprep.subr.mxu0 0.0
    %2005 = vmatpush1.xpose.msra.mxu0 0.0
    %2006 = vmatprep.subr.mxu0 0.0
    %2007 = vmatpush1.xpose.msra.mxu0 0.0
    %2008 = vmatprep.mubr.f32.mxu0 0.0
    %2009 = vmatmul.mubr.f32.gmra.mrb[0].mxu0 %v1940
    %v2010 = vpop.f32.mrb[0].mxu0
    %v2011 = vadd.f32 0.0, %v2010
    %v2012 = vpop.f32.mrb[0].mxu0
    %2013 = vdwg.mxu0
    %2014 = vrot.lane.b32.xlu0 %v235, 120
    %v2015 = vpop.permute.xlu0 %2014
    %2016 = vrot.lane.b32.xlu0 %v344, 120
    %v2017 = vpop.permute.xlu0 %2016
    %v2018 = vsel %vm481, %v2015, 0
    %v2020 = vsel %vm481, %v2017, 0
    %2022 = vmatprep.subr.mxu0 0.0
    %2023 = vmatpush1.xpose.msra.mxu0 %v2020
    %2024 = vmatprep.subr.mxu0 0.0
    %2025 = vmatpush1.xpose.msra.mxu0 0.0
    %2026 = vmatprep.subr.mxu0 0.0
    %2027 = vmatpush1.xpose.msra.mxu0 0.0
    %2028 = vmatprep.subr.mxu0 0.0
    %2029 = vmatpush1.xpose.msra.mxu0 0.0
    %2030 = vmatprep.subr.mxu0 0.0
    %2031 = vmatpush1.xpose.msra.mxu0 0.0
    %2032 = vmatprep.subr.mxu0 0.0
    %2033 = vmatpush1.xpose.msra.mxu0 0.0
    %2034 = vmatprep.subr.mxu0 0.0
    %2035 = vmatpush1.xpose.msra.mxu0 0.0
    %2036 = vmatprep.subr.mxu0 0.0
    %2037 = vmatpush1.xpose.msra.mxu0 0.0
    %2038 = vmatprep.subr.mxu0 0.0
    %2039 = vmatpush1.xpose.msra.mxu0 0.0
    %2040 = vmatprep.subr.mxu0 0.0
    %2041 = vmatpush1.xpose.msra.mxu0 0.0
    %2042 = vmatprep.subr.mxu0 0.0
    %2043 = vmatpush1.xpose.msra.mxu0 0.0
    %2044 = vmatprep.subr.mxu0 0.0
    %2045 = vmatpush1.xpose.msra.mxu0 0.0
    %2046 = vmatprep.subr.mxu0 0.0
    %2047 = vmatpush1.xpose.msra.mxu0 0.0
    %2048 = vmatprep.subr.mxu0 0.0
    %2049 = vmatpush1.xpose.msra.mxu0 0.0
    %2050 = vmatprep.subr.mxu0 0.0
    %2051 = vmatpush1.xpose.msra.mxu0 0.0
    %2052 = vmatprep.subr.mxu0 0.0
    %2053 = vmatpush1.xpose.msra.mxu0 0.0
    %2054 = vmatprep.subr.mxu0 0.0
    %2055 = vmatpush1.xpose.msra.mxu0 0.0
    %2056 = vmatprep.subr.mxu0 0.0
    %2057 = vmatpush1.xpose.msra.mxu0 0.0
    %2058 = vmatprep.subr.mxu0 0.0
    %2059 = vmatpush1.xpose.msra.mxu0 0.0
    %2060 = vmatprep.subr.mxu0 0.0
    %2061 = vmatpush1.xpose.msra.mxu0 0.0
    %2062 = vmatprep.subr.mxu0 0.0
    %2063 = vmatpush1.xpose.msra.mxu0 0.0
    %2064 = vmatprep.subr.mxu0 0.0
    %2065 = vmatpush1.xpose.msra.mxu0 0.0
    %2066 = vmatprep.subr.mxu0 0.0
    %2067 = vmatpush1.xpose.msra.mxu0 0.0
    %2068 = vmatprep.subr.mxu0 0.0
    %2069 = vmatpush1.xpose.msra.mxu0 0.0
    %2070 = vmatprep.subr.mxu0 0.0
    %2071 = vmatpush1.xpose.msra.mxu0 0.0
    %2072 = vmatprep.subr.mxu0 0.0
    %2073 = vmatpush1.xpose.msra.mxu0 0.0
    %2074 = vmatprep.subr.mxu0 0.0
    %2075 = vmatpush1.xpose.msra.mxu0 0.0
    %2076 = vmatprep.subr.mxu0 0.0
    %2077 = vmatpush1.xpose.msra.mxu0 0.0
    %2078 = vmatprep.subr.mxu0 0.0
    %2079 = vmatpush1.xpose.msra.mxu0 0.0
    %2080 = vmatprep.subr.mxu0 0.0
    %2081 = vmatpush1.xpose.msra.mxu0 0.0
    %2082 = vmatprep.subr.mxu0 0.0
    %2083 = vmatpush1.xpose.msra.mxu0 0.0
    %2084 = vmatprep.subr.mxu0 0.0
    %2085 = vmatpush1.xpose.msra.mxu0 0.0
    %2086 = vmatprep.mubr.f32.mxu0 0.0
    %2087 = vmatmul.mubr.f32.gmra.mrb[0].mxu0 %v2018
    %v2088 = vpop.f32.mrb[0].mxu0
    %v2089 = vadd.f32 0.0, %v2088
    %v2090 = vpop.f32.mrb[0].mxu0
    %2091 = vdwg.mxu0
    %2092 = vrot.lane.b32.xlu0 %v240, 120
    %v2093 = vpop.permute.xlu0 %2092
    %2094 = vrot.lane.b32.xlu0 %v349, 120
    %v2095 = vpop.permute.xlu0 %2094
    %v2096 = vsel %vm481, %v2093, 0
    %v2098 = vsel %vm481, %v2095, 0
    %2100 = vmatprep.subr.mxu0 0.0
    %2101 = vmatpush1.xpose.msra.mxu0 %v2098
    %2102 = vmatprep.subr.mxu0 0.0
    %2103 = vmatpush1.xpose.msra.mxu0 0.0
    %2104 = vmatprep.subr.mxu0 0.0
    %2105 = vmatpush1.xpose.msra.mxu0 0.0
    %2106 = vmatprep.subr.mxu0 0.0
    %2107 = vmatpush1.xpose.msra.mxu0 0.0
    %2108 = vmatprep.subr.mxu0 0.0
    %2109 = vmatpush1.xpose.msra.mxu0 0.0
    %2110 = vmatprep.subr.mxu0 0.0
    %2111 = vmatpush1.xpose.msra.mxu0 0.0
    %2112 = vmatprep.subr.mxu0 0.0
    %2113 = vmatpush1.xpose.msra.mxu0 0.0
    %2114 = vmatprep.subr.mxu0 0.0
    %2115 = vmatpush1.xpose.msra.mxu0 0.0
    %2116 = vmatprep.subr.mxu0 0.0
    %2117 = vmatpush1.xpose.msra.mxu0 0.0
    %2118 = vmatprep.subr.mxu0 0.0
    %2119 = vmatpush1.xpose.msra.mxu0 0.0
    %2120 = vmatprep.subr.mxu0 0.0
    %2121 = vmatpush1.xpose.msra.mxu0 0.0
    %2122 = vmatprep.subr.mxu0 0.0
    %2123 = vmatpush1.xpose.msra.mxu0 0.0
    %2124 = vmatprep.subr.mxu0 0.0
    %2125 = vmatpush1.xpose.msra.mxu0 0.0
    %2126 = vmatprep.subr.mxu0 0.0
    %2127 = vmatpush1.xpose.msra.mxu0 0.0
    %2128 = vmatprep.subr.mxu0 0.0
    %2129 = vmatpush1.xpose.msra.mxu0 0.0
    %2130 = vmatprep.subr.mxu0 0.0
    %2131 = vmatpush1.xpose.msra.mxu0 0.0
    %2132 = vmatprep.subr.mxu0 0.0
    %2133 = vmatpush1.xpose.msra.mxu0 0.0
    %2134 = vmatprep.subr.mxu0 0.0
    %2135 = vmatpush1.xpose.msra.mxu0 0.0
    %2136 = vmatprep.subr.mxu0 0.0
    %2137 = vmatpush1.xpose.msra.mxu0 0.0
    %2138 = vmatprep.subr.mxu0 0.0
    %2139 = vmatpush1.xpose.msra.mxu0 0.0
    %2140 = vmatprep.subr.mxu0 0.0
    %2141 = vmatpush1.xpose.msra.mxu0 0.0
    %2142 = vmatprep.subr.mxu0 0.0
    %2143 = vmatpush1.xpose.msra.mxu0 0.0
    %2144 = vmatprep.subr.mxu0 0.0
    %2145 = vmatpush1.xpose.msra.mxu0 0.0
    %2146 = vmatprep.subr.mxu0 0.0
    %2147 = vmatpush1.xpose.msra.mxu0 0.0
    %2148 = vmatprep.subr.mxu0 0.0
    %2149 = vmatpush1.xpose.msra.mxu0 0.0
    %2150 = vmatprep.subr.mxu0 0.0
    %2151 = vmatpush1.xpose.msra.mxu0 0.0
    %2152 = vmatprep.subr.mxu0 0.0
    %2153 = vmatpush1.xpose.msra.mxu0 0.0
    %2154 = vmatprep.subr.mxu0 0.0
    %2155 = vmatpush1.xpose.msra.mxu0 0.0
    %2156 = vmatprep.subr.mxu0 0.0
    %2157 = vmatpush1.xpose.msra.mxu0 0.0
    %2158 = vmatprep.subr.mxu0 0.0
    %2159 = vmatpush1.xpose.msra.mxu0 0.0
    %2160 = vmatprep.subr.mxu0 0.0
    %2161 = vmatpush1.xpose.msra.mxu0 0.0
    %2162 = vmatprep.subr.mxu0 0.0
    %2163 = vmatpush1.xpose.msra.mxu0 0.0
    %2164 = vmatprep.mubr.f32.mxu0 0.0
    %2165 = vmatmul.mubr.f32.gmra.mrb[0].mxu0 %v2096
    %v2166 = vpop.f32.mrb[0].mxu0
    %v2167 = vadd.f32 0.0, %v2166
    %v2168 = vpop.f32.mrb[0].mxu0
    %2169 = vdwg.mxu0
    %2170 = vrot.lane.b32.xlu0 %v245, 120
    %v2171 = vpop.permute.xlu0 %2170
    %2172 = vrot.lane.b32.xlu0 %v354, 120
    %v2173 = vpop.permute.xlu0 %2172
    %v2174 = vsel %vm481, %v2171, 0
    %v2176 = vsel %vm481, %v2173, 0
    %2178 = vmatprep.subr.mxu0 0.0
    %2179 = vmatpush1.xpose.msra.mxu0 %v2176
    %2180 = vmatprep.subr.mxu0 0.0
    %2181 = vmatpush1.xpose.msra.mxu0 0.0
    %2182 = vmatprep.subr.mxu0 0.0
    %2183 = vmatpush1.xpose.msra.mxu0 0.0
    %2184 = vmatprep.subr.mxu0 0.0
    %2185 = vmatpush1.xpose.msra.mxu0 0.0
    %2186 = vmatprep.subr.mxu0 0.0
    %2187 = vmatpush1.xpose.msra.mxu0 0.0
    %2188 = vmatprep.subr.mxu0 0.0
    %2189 = vmatpush1.xpose.msra.mxu0 0.0
    %2190 = vmatprep.subr.mxu0 0.0
    %2191 = vmatpush1.xpose.msra.mxu0 0.0
    %2192 = vmatprep.subr.mxu0 0.0
    %2193 = vmatpush1.xpose.msra.mxu0 0.0
    %2194 = vmatprep.subr.mxu0 0.0
    %2195 = vmatpush1.xpose.msra.mxu0 0.0
    %2196 = vmatprep.subr.mxu0 0.0
    %2197 = vmatpush1.xpose.msra.mxu0 0.0
    %2198 = vmatprep.subr.mxu0 0.0
    %2199 = vmatpush1.xpose.msra.mxu0 0.0
    %2200 = vmatprep.subr.mxu0 0.0
    %2201 = vmatpush1.xpose.msra.mxu0 0.0
    %2202 = vmatprep.subr.mxu0 0.0
    %2203 = vmatpush1.xpose.msra.mxu0 0.0
    %2204 = vmatprep.subr.mxu0 0.0
    %2205 = vmatpush1.xpose.msra.mxu0 0.0
    %2206 = vmatprep.subr.mxu0 0.0
    %2207 = vmatpush1.xpose.msra.mxu0 0.0
    %2208 = vmatprep.subr.mxu0 0.0
    %2209 = vmatpush1.xpose.msra.mxu0 0.0
    %2210 = vmatprep.subr.mxu0 0.0
    %2211 = vmatpush1.xpose.msra.mxu0 0.0
    %2212 = vmatprep.subr.mxu0 0.0
    %2213 = vmatpush1.xpose.msra.mxu0 0.0
    %2214 = vmatprep.subr.mxu0 0.0
    %2215 = vmatpush1.xpose.msra.mxu0 0.0
    %2216 = vmatprep.subr.mxu0 0.0
    %2217 = vmatpush1.xpose.msra.mxu0 0.0
    %2218 = vmatprep.subr.mxu0 0.0
    %2219 = vmatpush1.xpose.msra.mxu0 0.0
    %2220 = vmatprep.subr.mxu0 0.0
    %2221 = vmatpush1.xpose.msra.mxu0 0.0
    %2222 = vmatprep.subr.mxu0 0.0
    %2223 = vmatpush1.xpose.msra.mxu0 0.0
    %2224 = vmatprep.subr.mxu0 0.0
    %2225 = vmatpush1.xpose.msra.mxu0 0.0
    %2226 = vmatprep.subr.mxu0 0.0
    %2227 = vmatpush1.xpose.msra.mxu0 0.0
    %2228 = vmatprep.subr.mxu0 0.0
    %2229 = vmatpush1.xpose.msra.mxu0 0.0
    %2230 = vmatprep.subr.mxu0 0.0
    %2231 = vmatpush1.xpose.msra.mxu0 0.0
    %2232 = vmatprep.subr.mxu0 0.0
    %2233 = vmatpush1.xpose.msra.mxu0 0.0
    %2234 = vmatprep.subr.mxu0 0.0
    %2235 = vmatpush1.xpose.msra.mxu0 0.0
    %2236 = vmatprep.subr.mxu0 0.0
    %2237 = vmatpush1.xpose.msra.mxu0 0.0
    %2238 = vmatprep.subr.mxu0 0.0
    %2239 = vmatpush1.xpose.msra.mxu0 0.0
    %2240 = vmatprep.subr.mxu0 0.0
    %2241 = vmatpush1.xpose.msra.mxu0 0.0
    %2242 = vmatprep.mubr.f32.mxu0 0.0
    %2243 = vmatmul.mubr.f32.gmra.mrb[0].mxu0 %v2174
    %v2244 = vpop.f32.mrb[0].mxu0
    %v2245 = vadd.f32 0.0, %v2244
    %v2246 = vpop.f32.mrb[0].mxu0
    %2247 = vdwg.mxu0
    %2248 = vrot.lane.b32.xlu0 %v250, 120
    %v2249 = vpop.permute.xlu0 %2248
    %2250 = vrot.lane.b32.xlu0 %v359, 120
    %v2251 = vpop.permute.xlu0 %2250
    %v2252 = vsel %vm481, %v2249, 0
    %v2254 = vsel %vm481, %v2251, 0
    %2256 = vmatprep.subr.mxu0 0.0
    %2257 = vmatpush1.xpose.msra.mxu0 %v2254
    %2258 = vmatprep.subr.mxu0 0.0
    %2259 = vmatpush1.xpose.msra.mxu0 0.0
    %2260 = vmatprep.subr.mxu0 0.0
    %2261 = vmatpush1.xpose.msra.mxu0 0.0
    %2262 = vmatprep.subr.mxu0 0.0
    %2263 = vmatpush1.xpose.msra.mxu0 0.0
    %2264 = vmatprep.subr.mxu0 0.0
    %2265 = vmatpush1.xpose.msra.mxu0 0.0
    %2266 = vmatprep.subr.mxu0 0.0
    %2267 = vmatpush1.xpose.msra.mxu0 0.0
    %2268 = vmatprep.subr.mxu0 0.0
    %2269 = vmatpush1.xpose.msra.mxu0 0.0
    %2270 = vmatprep.subr.mxu0 0.0
    %2271 = vmatpush1.xpose.msra.mxu0 0.0
    %2272 = vmatprep.subr.mxu0 0.0
    %2273 = vmatpush1.xpose.msra.mxu0 0.0
    %2274 = vmatprep.subr.mxu0 0.0
    %2275 = vmatpush1.xpose.msra.mxu0 0.0
    %2276 = vmatprep.subr.mxu0 0.0
    %2277 = vmatpush1.xpose.msra.mxu0 0.0
    %2278 = vmatprep.subr.mxu0 0.0
    %2279 = vmatpush1.xpose.msra.mxu0 0.0
    %2280 = vmatprep.subr.mxu0 0.0
    %2281 = vmatpush1.xpose.msra.mxu0 0.0
    %2282 = vmatprep.subr.mxu0 0.0
    %2283 = vmatpush1.xpose.msra.mxu0 0.0
    %2284 = vmatprep.subr.mxu0 0.0
    %2285 = vmatpush1.xpose.msra.mxu0 0.0
    %2286 = vmatprep.subr.mxu0 0.0
    %2287 = vmatpush1.xpose.msra.mxu0 0.0
    %2288 = vmatprep.subr.mxu0 0.0
    %2289 = vmatpush1.xpose.msra.mxu0 0.0
    %2290 = vmatprep.subr.mxu0 0.0
    %2291 = vmatpush1.xpose.msra.mxu0 0.0
    %2292 = vmatprep.subr.mxu0 0.0
    %2293 = vmatpush1.xpose.msra.mxu0 0.0
    %2294 = vmatprep.subr.mxu0 0.0
    %2295 = vmatpush1.xpose.msra.mxu0 0.0
    %2296 = vmatprep.subr.mxu0 0.0
    %2297 = vmatpush1.xpose.msra.mxu0 0.0
    %2298 = vmatprep.subr.mxu0 0.0
    %2299 = vmatpush1.xpose.msra.mxu0 0.0
    %2300 = vmatprep.subr.mxu0 0.0
    %2301 = vmatpush1.xpose.msra.mxu0 0.0
    %2302 = vmatprep.subr.mxu0 0.0
    %2303 = vmatpush1.xpose.msra.mxu0 0.0
    %2304 = vmatprep.subr.mxu0 0.0
    %2305 = vmatpush1.xpose.msra.mxu0 0.0
    %2306 = vmatprep.subr.mxu0 0.0
    %2307 = vmatpush1.xpose.msra.mxu0 0.0
    %2308 = vmatprep.subr.mxu0 0.0
    %2309 = vmatpush1.xpose.msra.mxu0 0.0
    %2310 = vmatprep.subr.mxu0 0.0
    %2311 = vmatpush1.xpose.msra.mxu0 0.0
    %2312 = vmatprep.subr.mxu0 0.0
    %2313 = vmatpush1.xpose.msra.mxu0 0.0
    %2314 = vmatprep.subr.mxu0 0.0
    %2315 = vmatpush1.xpose.msra.mxu0 0.0
    %2316 = vmatprep.subr.mxu0 0.0
    %2317 = vmatpush1.xpose.msra.mxu0 0.0
    %2318 = vmatprep.subr.mxu0 0.0
    %2319 = vmatpush1.xpose.msra.mxu0 0.0
    %2320 = vmatprep.mubr.f32.mxu0 0.0
    %2321 = vmatmul.mubr.f32.gmra.mrb[0].mxu0 %v2252
    %v2322 = vpop.f32.mrb[0].mxu0
    %v2323 = vadd.f32 0.0, %v2322
    %v2324 = vpop.f32.mrb[0].mxu0
    %2325 = vdwg.mxu0
    %2326 = vrot.lane.b32.xlu0 %v255, 120
    %v2327 = vpop.permute.xlu0 %2326
    %2328 = vrot.lane.b32.xlu0 %v364, 120
    %v2329 = vpop.permute.xlu0 %2328
    %v2330 = vsel %vm481, %v2327, 0
    %v2332 = vsel %vm481, %v2329, 0
    %2334 = vmatprep.subr.mxu0 0.0
    %2335 = vmatpush1.xpose.msra.mxu0 %v2332
    %2336 = vmatprep.subr.mxu0 0.0
    %2337 = vmatpush1.xpose.msra.mxu0 0.0
    %2338 = vmatprep.subr.mxu0 0.0
    %2339 = vmatpush1.xpose.msra.mxu0 0.0
    %2340 = vmatprep.subr.mxu0 0.0
    %2341 = vmatpush1.xpose.msra.mxu0 0.0
    %2342 = vmatprep.subr.mxu0 0.0
    %2343 = vmatpush1.xpose.msra.mxu0 0.0
    %2344 = vmatprep.subr.mxu0 0.0
    %2345 = vmatpush1.xpose.msra.mxu0 0.0
    %2346 = vmatprep.subr.mxu0 0.0
    %2347 = vmatpush1.xpose.msra.mxu0 0.0
    %2348 = vmatprep.subr.mxu0 0.0
    %2349 = vmatpush1.xpose.msra.mxu0 0.0
    %2350 = vmatprep.subr.mxu0 0.0
    %2351 = vmatpush1.xpose.msra.mxu0 0.0
    %2352 = vmatprep.subr.mxu0 0.0
    %2353 = vmatpush1.xpose.msra.mxu0 0.0
    %2354 = vmatprep.subr.mxu0 0.0
    %2355 = vmatpush1.xpose.msra.mxu0 0.0
    %2356 = vmatprep.subr.mxu0 0.0
    %2357 = vmatpush1.xpose.msra.mxu0 0.0
    %2358 = vmatprep.subr.mxu0 0.0
    %2359 = vmatpush1.xpose.msra.mxu0 0.0
    %2360 = vmatprep.subr.mxu0 0.0
    %2361 = vmatpush1.xpose.msra.mxu0 0.0
    %2362 = vmatprep.subr.mxu0 0.0
    %2363 = vmatpush1.xpose.msra.mxu0 0.0
    %2364 = vmatprep.subr.mxu0 0.0
    %2365 = vmatpush1.xpose.msra.mxu0 0.0
    %2366 = vmatprep.subr.mxu0 0.0
    %2367 = vmatpush1.xpose.msra.mxu0 0.0
    %2368 = vmatprep.subr.mxu0 0.0
    %2369 = vmatpush1.xpose.msra.mxu0 0.0
    %2370 = vmatprep.subr.mxu0 0.0
    %2371 = vmatpush1.xpose.msra.mxu0 0.0
    %2372 = vmatprep.subr.mxu0 0.0
    %2373 = vmatpush1.xpose.msra.mxu0 0.0
    %2374 = vmatprep.subr.mxu0 0.0
    %2375 = vmatpush1.xpose.msra.mxu0 0.0
    %2376 = vmatprep.subr.mxu0 0.0
    %2377 = vmatpush1.xpose.msra.mxu0 0.0
    %2378 = vmatprep.subr.mxu0 0.0
    %2379 = vmatpush1.xpose.msra.mxu0 0.0
    %2380 = vmatprep.subr.mxu0 0.0
    %2381 = vmatpush1.xpose.msra.mxu0 0.0
    %2382 = vmatprep.subr.mxu0 0.0
    %2383 = vmatpush1.xpose.msra.mxu0 0.0
    %2384 = vmatprep.subr.mxu0 0.0
    %2385 = vmatpush1.xpose.msra.mxu0 0.0
    %2386 = vmatprep.subr.mxu0 0.0
    %2387 = vmatpush1.xpose.msra.mxu0 0.0
    %2388 = vmatprep.subr.mxu0 0.0
    %2389 = vmatpush1.xpose.msra.mxu0 0.0
    %2390 = vmatprep.subr.mxu0 0.0
    %2391 = vmatpush1.xpose.msra.mxu0 0.0
    %2392 = vmatprep.subr.mxu0 0.0
    %2393 = vmatpush1.xpose.msra.mxu0 0.0
    %2394 = vmatprep.subr.mxu0 0.0
    %2395 = vmatpush1.xpose.msra.mxu0 0.0
    %2396 = vmatprep.subr.mxu0 0.0
    %2397 = vmatpush1.xpose.msra.mxu0 0.0
    %2398 = vmatprep.mubr.f32.mxu0 0.0
    %2399 = vmatmul.mubr.f32.gmra.mrb[0].mxu0 %v2330
    %v2400 = vpop.f32.mrb[0].mxu0
    %v2401 = vadd.f32 0.0, %v2400
    %v2402 = vpop.f32.mrb[0].mxu0
    %2403 = vdwg.mxu0
    %v2404 = vmul.f32 %v1855, 0.35355338
    %v2405 = vmul.f32 %v1933, 0.35355338
    %v2406 = vmul.f32 %v2011, 0.35355338
    %v2407 = vmul.f32 %v2089, 0.35355338
    %v2408 = vmul.f32 %v2167, 0.35355338
    %v2409 = vmul.f32 %v2245, 0.35355338
    %v2410 = vmul.f32 %v2323, 0.35355338
    %v2411 = vmul.f32 %v2401, 0.35355338
    %v2412 = vsel %vm1099, -4.2949673e+09, %v2404
    %v2413 = vsel %vm1099, -4.2949673e+09, %v2405
    %v2414 = vsel %vm1099, -4.2949673e+09, %v2406
    %v2415 = vsel %vm1099, -4.2949673e+09, %v2407
    %v2416 = vsel %vm1099, -4.2949673e+09, %v2408
    %v2417 = vsel %vm1099, -4.2949673e+09, %v2409
    %v2418 = vsel %vm1099, -4.2949673e+09, %v2410
    %v2419 = vsel %vm1099, -4.2949673e+09, %v2411
    %v2420 = vsel %vm481, %v2412, -inf
    %2421 = vmax.xlane.f32.xlu0 %v2420
    %v2422 = vpop.xlane.xlu0 %2421
    %v2423 = vsel %vm481, %v2413, -inf
    %2424 = vmax.xlane.f32.xlu0 %v2423
    %v2425 = vpop.xlane.xlu0 %2424
    %v2426 = vsel %vm481, %v2414, -inf
    %2427 = vmax.xlane.f32.xlu0 %v2426
    %v2428 = vpop.xlane.xlu0 %2427
    %v2429 = vsel %vm481, %v2415, -inf
    %2430 = vmax.xlane.f32.xlu0 %v2429
    %v2431 = vpop.xlane.xlu0 %2430
    %v2432 = vsel %vm481, %v2416, -inf
    %2433 = vmax.xlane.f32.xlu0 %v2432
    %v2434 = vpop.xlane.xlu0 %2433
    %v2435 = vsel %vm481, %v2417, -inf
    %2436 = vmax.xlane.f32.xlu0 %v2435
    %v2437 = vpop.xlane.xlu0 %2436
    %v2438 = vsel %vm481, %v2418, -inf
    %2439 = vmax.xlane.f32.xlu0 %v2438
    %v2440 = vpop.xlane.xlu0 %2439
    %v2441 = vsel %vm481, %v2419, -inf
    %2442 = vmax.xlane.f32.xlu0 %v2441
    %v2443 = vpop.xlane.xlu0 %2442
    %v2444 = vsub.f32 %v2412, %v2422
    %v2445 = vsub.f32 %v2413, %v2425
    %v2446 = vsub.f32 %v2414, %v2428
    %v2447 = vsub.f32 %v2415, %v2431
    %v2448 = vsub.f32 %v2416, %v2434
    %v2449 = vsub.f32 %v2417, %v2437
    %v2450 = vsub.f32 %v2418, %v2440
    %v2451 = vsub.f32 %v2419, %v2443
    %v2452 = vmul.f32 %v2444, 1.442695
    %v2453 = vpow.pop %v2452
    %v2454 = vmul.f32 %v2445, 1.442695
    %v2455 = vpow.pop %v2454
    %v2456 = vmul.f32 %v2446, 1.442695
    %v2457 = vpow.pop %v2456
    %v2458 = vmul.f32 %v2447, 1.442695
    %v2459 = vpow.pop %v2458
    %v2460 = vmul.f32 %v2448, 1.442695
    %v2461 = vpow.pop %v2460
    %v2462 = vmul.f32 %v2449, 1.442695
    %v2463 = vpow.pop %v2462
    %v2464 = vmul.f32 %v2450, 1.442695
    %v2465 = vpow.pop %v2464
    %v2466 = vmul.f32 %v2451, 1.442695
    %v2467 = vpow.pop %v2466
    %v2468 = vsel %vm481, %v2453, 0.0
    %2469 = vadd.xlane.f32.xlu0 %v2468
    %v2470 = vpop.xlane.xlu0 %2469
    %v2471 = vsel %vm481, %v2455, 0.0
    %2472 = vadd.xlane.f32.xlu0 %v2471
    %v2473 = vpop.xlane.xlu0 %2472
    %v2474 = vsel %vm481, %v2457, 0.0
    %2475 = vadd.xlane.f32.xlu0 %v2474
    %v2476 = vpop.xlane.xlu0 %2475
    %v2477 = vsel %vm481, %v2459, 0.0
    %2478 = vadd.xlane.f32.xlu0 %v2477
    %v2479 = vpop.xlane.xlu0 %2478
    %v2480 = vsel %vm481, %v2461, 0.0
    %2481 = vadd.xlane.f32.xlu0 %v2480
    %v2482 = vpop.xlane.xlu0 %2481
    %v2483 = vsel %vm481, %v2463, 0.0
    %2484 = vadd.xlane.f32.xlu0 %v2483
    %v2485 = vpop.xlane.xlu0 %2484
    %v2486 = vsel %vm481, %v2465, 0.0
    %2487 = vadd.xlane.f32.xlu0 %v2486
    %v2488 = vpop.xlane.xlu0 %2487
    %v2489 = vsel %vm481, %v2467, 0.0
    %2490 = vadd.xlane.f32.xlu0 %v2489
    %v2491 = vpop.xlane.xlu0 %2490
    %v2492 = vrcp.pop %v2470
    %v2493 = vrcp.pop %v2473
    %v2494 = vrcp.pop %v2476
    %v2495 = vrcp.pop %v2479
    %v2496 = vrcp.pop %v2482
    %v2497 = vrcp.pop %v2485
    %v2498 = vrcp.pop %v2488
    %v2499 = vrcp.pop %v2491
    %v2500 = vmul.f32 %v2453, %v2492
    %v2501 = vmul.f32 %v2455, %v2493
    %v2502 = vmul.f32 %v2457, %v2494
    %v2503 = vmul.f32 %v2459, %v2495
    %v2504 = vmul.f32 %v2461, %v2496
    %v2505 = vmul.f32 %v2463, %v2497
    %v2506 = vmul.f32 %v2465, %v2498
    %v2507 = vmul.f32 %v2467, %v2499
    %2509 = vrot.lane.b32.xlu0 %v438, 120
    %v2510 = vpop.permute.xlu0 %2509
    %v2513 = vsel %vm481, %v2500, 0
    %2515 = vmatprep.subr.mxu0 0.0
    %2516 = vmatpush1.msra.mxu0 %v2510
    %2517 = vmatprep.subr.mxu0 0.0
    %2518 = vmatpush1.msra.mxu0 0.0
    %2519 = vmatprep.subr.mxu0 0.0
    %2520 = vmatpush1.msra.mxu0 0.0
    %2521 = vmatprep.subr.mxu0 0.0
    %2522 = vmatpush1.msra.mxu0 0.0
    %2523 = vmatprep.subr.mxu0 0.0
    %2524 = vmatpush1.msra.mxu0 0.0
    %2525 = vmatprep.subr.mxu0 0.0
    %2526 = vmatpush1.msra.mxu0 0.0
    %2527 = vmatprep.subr.mxu0 0.0
    %2528 = vmatpush1.msra.mxu0 0.0
    %2529 = vmatprep.subr.mxu0 0.0
    %2530 = vmatpush1.msra.mxu0 0.0
    %2531 = vmatprep.subr.mxu0 0.0
    %2532 = vmatpush1.msra.mxu0 0.0
    %2533 = vmatprep.subr.mxu0 0.0
    %2534 = vmatpush1.msra.mxu0 0.0
    %2535 = vmatprep.subr.mxu0 0.0
    %2536 = vmatpush1.msra.mxu0 0.0
    %2537 = vmatprep.subr.mxu0 0.0
    %2538 = vmatpush1.msra.mxu0 0.0
    %2539 = vmatprep.subr.mxu0 0.0
    %2540 = vmatpush1.msra.mxu0 0.0
    %2541 = vmatprep.subr.mxu0 0.0
    %2542 = vmatpush1.msra.mxu0 0.0
    %2543 = vmatprep.subr.mxu0 0.0
    %2544 = vmatpush1.msra.mxu0 0.0
    %2545 = vmatprep.subr.mxu0 0.0
    %2546 = vmatpush1.msra.mxu0 0.0
    %2547 = vmatprep.subr.mxu0 0.0
    %2548 = vmatpush1.msra.mxu0 0.0
    %2549 = vmatprep.subr.mxu0 0.0
    %2550 = vmatpush1.msra.mxu0 0.0
    %2551 = vmatprep.subr.mxu0 0.0
    %2552 = vmatpush1.msra.mxu0 0.0
    %2553 = vmatprep.subr.mxu0 0.0
    %2554 = vmatpush1.msra.mxu0 0.0
    %2555 = vmatprep.subr.mxu0 0.0
    %2556 = vmatpush1.msra.mxu0 0.0
    %2557 = vmatprep.subr.mxu0 0.0
    %2558 = vmatpush1.msra.mxu0 0.0
    %2559 = vmatprep.subr.mxu0 0.0
    %2560 = vmatpush1.msra.mxu0 0.0
    %2561 = vmatprep.subr.mxu0 0.0
    %2562 = vmatpush1.msra.mxu0 0.0
    %2563 = vmatprep.subr.mxu0 0.0
    %2564 = vmatpush1.msra.mxu0 0.0
    %2565 = vmatprep.subr.mxu0 0.0
    %2566 = vmatpush1.msra.mxu0 0.0
    %2567 = vmatprep.subr.mxu0 0.0
    %2568 = vmatpush1.msra.mxu0 0.0
    %2569 = vmatprep.subr.mxu0 0.0
    %2570 = vmatpush1.msra.mxu0 0.0
    %2571 = vmatprep.subr.mxu0 0.0
    %2572 = vmatpush1.msra.mxu0 0.0
    %2573 = vmatprep.subr.mxu0 0.0
    %2574 = vmatpush1.msra.mxu0 0.0
    %2575 = vmatprep.subr.mxu0 0.0
    %2576 = vmatpush1.msra.mxu0 0.0
    %2577 = vmatprep.subr.mxu0 0.0
    %2578 = vmatpush1.msra.mxu0 0.0
    %2579 = vmatprep.mubr.f32.mxu0 0.0
    %2580 = vmatmul.mubr.f32.gmra.mrb[0].mxu0 %v2513
    %v2581 = vpop.f32.mrb[0].mxu0
    %v2582 = vadd.f32 0.0, %v2581
    %v2583 = vpop.f32.mrb[0].mxu0
    %2584 = vdwg.mxu0
    %2586 = vrot.lane.b32.xlu0 %v443, 120
    %v2587 = vpop.permute.xlu0 %2586
    %v2590 = vsel %vm481, %v2501, 0
    %2592 = vmatprep.subr.mxu0 0.0
    %2593 = vmatpush1.msra.mxu0 %v2587
    %2594 = vmatprep.subr.mxu0 0.0
    %2595 = vmatpush1.msra.mxu0 0.0
    %2596 = vmatprep.subr.mxu0 0.0
    %2597 = vmatpush1.msra.mxu0 0.0
    %2598 = vmatprep.subr.mxu0 0.0
    %2599 = vmatpush1.msra.mxu0 0.0
    %2600 = vmatprep.subr.mxu0 0.0
    %2601 = vmatpush1.msra.mxu0 0.0
    %2602 = vmatprep.subr.mxu0 0.0
    %2603 = vmatpush1.msra.mxu0 0.0
    %2604 = vmatprep.subr.mxu0 0.0
    %2605 = vmatpush1.msra.mxu0 0.0
    %2606 = vmatprep.subr.mxu0 0.0
    %2607 = vmatpush1.msra.mxu0 0.0
    %2608 = vmatprep.subr.mxu0 0.0
    %2609 = vmatpush1.msra.mxu0 0.0
    %2610 = vmatprep.subr.mxu0 0.0
    %2611 = vmatpush1.msra.mxu0 0.0
    %2612 = vmatprep.subr.mxu0 0.0
    %2613 = vmatpush1.msra.mxu0 0.0
    %2614 = vmatprep.subr.mxu0 0.0
    %2615 = vmatpush1.msra.mxu0 0.0
    %2616 = vmatprep.subr.mxu0 0.0
    %2617 = vmatpush1.msra.mxu0 0.0
    %2618 = vmatprep.subr.mxu0 0.0
    %2619 = vmatpush1.msra.mxu0 0.0
    %2620 = vmatprep.subr.mxu0 0.0
    %2621 = vmatpush1.msra.mxu0 0.0
    %2622 = vmatprep.subr.mxu0 0.0
    %2623 = vmatpush1.msra.mxu0 0.0
    %2624 = vmatprep.subr.mxu0 0.0
    %2625 = vmatpush1.msra.mxu0 0.0
    %2626 = vmatprep.subr.mxu0 0.0
    %2627 = vmatpush1.msra.mxu0 0.0
    %2628 = vmatprep.subr.mxu0 0.0
    %2629 = vmatpush1.msra.mxu0 0.0
    %2630 = vmatprep.subr.mxu0 0.0
    %2631 = vmatpush1.msra.mxu0 0.0
    %2632 = vmatprep.subr.mxu0 0.0
    %2633 = vmatpush1.msra.mxu0 0.0
    %2634 = vmatprep.subr.mxu0 0.0
    %2635 = vmatpush1.msra.mxu0 0.0
    %2636 = vmatprep.subr.mxu0 0.0
    %2637 = vmatpush1.msra.mxu0 0.0
    %2638 = vmatprep.subr.mxu0 0.0
    %2639 = vmatpush1.msra.mxu0 0.0
    %2640 = vmatprep.subr.mxu0 0.0
    %2641 = vmatpush1.msra.mxu0 0.0
    %2642 = vmatprep.subr.mxu0 0.0
    %2643 = vmatpush1.msra.mxu0 0.0
    %2644 = vmatprep.subr.mxu0 0.0
    %2645 = vmatpush1.msra.mxu0 0.0
    %2646 = vmatprep.subr.mxu0 0.0
    %2647 = vmatpush1.msra.mxu0 0.0
    %2648 = vmatprep.subr.mxu0 0.0
    %2649 = vmatpush1.msra.mxu0 0.0
    %2650 = vmatprep.subr.mxu0 0.0
    %2651 = vmatpush1.msra.mxu0 0.0
    %2652 = vmatprep.subr.mxu0 0.0
    %2653 = vmatpush1.msra.mxu0 0.0
    %2654 = vmatprep.subr.mxu0 0.0
    %2655 = vmatpush1.msra.mxu0 0.0
    %2656 = vmatprep.mubr.f32.mxu0 0.0
    %2657 = vmatmul.mubr.f32.gmra.mrb[0].mxu0 %v2590
    %v2658 = vpop.f32.mrb[0].mxu0
    %v2659 = vadd.f32 0.0, %v2658
    %v2660 = vpop.f32.mrb[0].mxu0
    %2661 = vdwg.mxu0
    %2663 = vrot.lane.b32.xlu0 %v448, 120
    %v2664 = vpop.permute.xlu0 %2663
    %v2667 = vsel %vm481, %v2502, 0
    %2669 = vmatprep.subr.mxu0 0.0
    %2670 = vmatpush1.msra.mxu0 %v2664
    %2671 = vmatprep.subr.mxu0 0.0
    %2672 = vmatpush1.msra.mxu0 0.0
    %2673 = vmatprep.subr.mxu0 0.0
    %2674 = vmatpush1.msra.mxu0 0.0
    %2675 = vmatprep.subr.mxu0 0.0
    %2676 = vmatpush1.msra.mxu0 0.0
    %2677 = vmatprep.subr.mxu0 0.0
    %2678 = vmatpush1.msra.mxu0 0.0
    %2679 = vmatprep.subr.mxu0 0.0
    %2680 = vmatpush1.msra.mxu0 0.0
    %2681 = vmatprep.subr.mxu0 0.0
    %2682 = vmatpush1.msra.mxu0 0.0
    %2683 = vmatprep.subr.mxu0 0.0
    %2684 = vmatpush1.msra.mxu0 0.0
    %2685 = vmatprep.subr.mxu0 0.0
    %2686 = vmatpush1.msra.mxu0 0.0
    %2687 = vmatprep.subr.mxu0 0.0
    %2688 = vmatpush1.msra.mxu0 0.0
    %2689 = vmatprep.subr.mxu0 0.0
    %2690 = vmatpush1.msra.mxu0 0.0
    %2691 = vmatprep.subr.mxu0 0.0
    %2692 = vmatpush1.msra.mxu0 0.0
    %2693 = vmatprep.subr.mxu0 0.0
    %2694 = vmatpush1.msra.mxu0 0.0
    %2695 = vmatprep.subr.mxu0 0.0
    %2696 = vmatpush1.msra.mxu0 0.0
    %2697 = vmatprep.subr.mxu0 0.0
    %2698 = vmatpush1.msra.mxu0 0.0
    %2699 = vmatprep.subr.mxu0 0.0
    %2700 = vmatpush1.msra.mxu0 0.0
    %2701 = vmatprep.subr.mxu0 0.0
    %2702 = vmatpush1.msra.mxu0 0.0
    %2703 = vmatprep.subr.mxu0 0.0
    %2704 = vmatpush1.msra.mxu0 0.0
    %2705 = vmatprep.subr.mxu0 0.0
    %2706 = vmatpush1.msra.mxu0 0.0
    %2707 = vmatprep.subr.mxu0 0.0
    %2708 = vmatpush1.msra.mxu0 0.0
    %2709 = vmatprep.subr.mxu0 0.0
    %2710 = vmatpush1.msra.mxu0 0.0
    %2711 = vmatprep.subr.mxu0 0.0
    %2712 = vmatpush1.msra.mxu0 0.0
    %2713 = vmatprep.subr.mxu0 0.0
    %2714 = vmatpush1.msra.mxu0 0.0
    %2715 = vmatprep.subr.mxu0 0.0
    %2716 = vmatpush1.msra.mxu0 0.0
    %2717 = vmatprep.subr.mxu0 0.0
    %2718 = vmatpush1.msra.mxu0 0.0
    %2719 = vmatprep.subr.mxu0 0.0
    %2720 = vmatpush1.msra.mxu0 0.0
    %2721 = vmatprep.subr.mxu0 0.0
    %2722 = vmatpush1.msra.mxu0 0.0
    %2723 = vmatprep.subr.mxu0 0.0
    %2724 = vmatpush1.msra.mxu0 0.0
    %2725 = vmatprep.subr.mxu0 0.0
    %2726 = vmatpush1.msra.mxu0 0.0
    %2727 = vmatprep.subr.mxu0 0.0
    %2728 = vmatpush1.msra.mxu0 0.0
    %2729 = vmatprep.subr.mxu0 0.0
    %2730 = vmatpush1.msra.mxu0 0.0
    %2731 = vmatprep.subr.mxu0 0.0
    %2732 = vmatpush1.msra.mxu0 0.0
    %2733 = vmatprep.mubr.f32.mxu0 0.0
    %2734 = vmatmul.mubr.f32.gmra.mrb[0].mxu0 %v2667
    %v2735 = vpop.f32.mrb[0].mxu0
    %v2736 = vadd.f32 0.0, %v2735
    %v2737 = vpop.f32.mrb[0].mxu0
    %2738 = vdwg.mxu0
    %2740 = vrot.lane.b32.xlu0 %v453, 120
    %v2741 = vpop.permute.xlu0 %2740
    %v2744 = vsel %vm481, %v2503, 0
    %2746 = vmatprep.subr.mxu0 0.0
    %2747 = vmatpush1.msra.mxu0 %v2741
    %2748 = vmatprep.subr.mxu0 0.0
    %2749 = vmatpush1.msra.mxu0 0.0
    %2750 = vmatprep.subr.mxu0 0.0
    %2751 = vmatpush1.msra.mxu0 0.0
    %2752 = vmatprep.subr.mxu0 0.0
    %2753 = vmatpush1.msra.mxu0 0.0
    %2754 = vmatprep.subr.mxu0 0.0
    %2755 = vmatpush1.msra.mxu0 0.0
    %2756 = vmatprep.subr.mxu0 0.0
    %2757 = vmatpush1.msra.mxu0 0.0
    %2758 = vmatprep.subr.mxu0 0.0
    %2759 = vmatpush1.msra.mxu0 0.0
    %2760 = vmatprep.subr.mxu0 0.0
    %2761 = vmatpush1.msra.mxu0 0.0
    %2762 = vmatprep.subr.mxu0 0.0
    %2763 = vmatpush1.msra.mxu0 0.0
    %2764 = vmatprep.subr.mxu0 0.0
    %2765 = vmatpush1.msra.mxu0 0.0
    %2766 = vmatprep.subr.mxu0 0.0
    %2767 = vmatpush1.msra.mxu0 0.0
    %2768 = vmatprep.subr.mxu0 0.0
    %2769 = vmatpush1.msra.mxu0 0.0
    %2770 = vmatprep.subr.mxu0 0.0
    %2771 = vmatpush1.msra.mxu0 0.0
    %2772 = vmatprep.subr.mxu0 0.0
    %2773 = vmatpush1.msra.mxu0 0.0
    %2774 = vmatprep.subr.mxu0 0.0
    %2775 = vmatpush1.msra.mxu0 0.0
    %2776 = vmatprep.subr.mxu0 0.0
    %2777 = vmatpush1.msra.mxu0 0.0
    %2778 = vmatprep.subr.mxu0 0.0
    %2779 = vmatpush1.msra.mxu0 0.0
    %2780 = vmatprep.subr.mxu0 0.0
    %2781 = vmatpush1.msra.mxu0 0.0
    %2782 = vmatprep.subr.mxu0 0.0
    %2783 = vmatpush1.msra.mxu0 0.0
    %2784 = vmatprep.subr.mxu0 0.0
    %2785 = vmatpush1.msra.mxu0 0.0
    %2786 = vmatprep.subr.mxu0 0.0
    %2787 = vmatpush1.msra.mxu0 0.0
    %2788 = vmatprep.subr.mxu0 0.0
    %2789 = vmatpush1.msra.mxu0 0.0
    %2790 = vmatprep.subr.mxu0 0.0
    %2791 = vmatpush1.msra.mxu0 0.0
    %2792 = vmatprep.subr.mxu0 0.0
    %2793 = vmatpush1.msra.mxu0 0.0
    %2794 = vmatprep.subr.mxu0 0.0
    %2795 = vmatpush1.msra.mxu0 0.0
    %2796 = vmatprep.subr.mxu0 0.0
    %2797 = vmatpush1.msra.mxu0 0.0
    %2798 = vmatprep.subr.mxu0 0.0
    %2799 = vmatpush1.msra.mxu0 0.0
    %2800 = vmatprep.subr.mxu0 0.0
    %2801 = vmatpush1.msra.mxu0 0.0
    %2802 = vmatprep.subr.mxu0 0.0
    %2803 = vmatpush1.msra.mxu0 0.0
    %2804 = vmatprep.subr.mxu0 0.0
    %2805 = vmatpush1.msra.mxu0 0.0
    %2806 = vmatprep.subr.mxu0 0.0
    %2807 = vmatpush1.msra.mxu0 0.0
    %2808 = vmatprep.subr.mxu0 0.0
    %2809 = vmatpush1.msra.mxu0 0.0
    %2810 = vmatprep.mubr.f32.mxu0 0.0
    %2811 = vmatmul.mubr.f32.gmra.mrb[0].mxu0 %v2744
    %v2812 = vpop.f32.mrb[0].mxu0
    %v2813 = vadd.f32 0.0, %v2812
    %v2814 = vpop.f32.mrb[0].mxu0
    %2815 = vdwg.mxu0
    %2817 = vrot.lane.b32.xlu0 %v458, 120
    %v2818 = vpop.permute.xlu0 %2817
    %v2821 = vsel %vm481, %v2504, 0
    %2823 = vmatprep.subr.mxu0 0.0
    %2824 = vmatpush1.msra.mxu0 %v2818
    %2825 = vmatprep.subr.mxu0 0.0
    %2826 = vmatpush1.msra.mxu0 0.0
    %2827 = vmatprep.subr.mxu0 0.0
    %2828 = vmatpush1.msra.mxu0 0.0
    %2829 = vmatprep.subr.mxu0 0.0
    %2830 = vmatpush1.msra.mxu0 0.0
    %2831 = vmatprep.subr.mxu0 0.0
    %2832 = vmatpush1.msra.mxu0 0.0
    %2833 = vmatprep.subr.mxu0 0.0
    %2834 = vmatpush1.msra.mxu0 0.0
    %2835 = vmatprep.subr.mxu0 0.0
    %2836 = vmatpush1.msra.mxu0 0.0
    %2837 = vmatprep.subr.mxu0 0.0
    %2838 = vmatpush1.msra.mxu0 0.0
    %2839 = vmatprep.subr.mxu0 0.0
    %2840 = vmatpush1.msra.mxu0 0.0
    %2841 = vmatprep.subr.mxu0 0.0
    %2842 = vmatpush1.msra.mxu0 0.0
    %2843 = vmatprep.subr.mxu0 0.0
    %2844 = vmatpush1.msra.mxu0 0.0
    %2845 = vmatprep.subr.mxu0 0.0
    %2846 = vmatpush1.msra.mxu0 0.0
    %2847 = vmatprep.subr.mxu0 0.0
    %2848 = vmatpush1.msra.mxu0 0.0
    %2849 = vmatprep.subr.mxu0 0.0
    %2850 = vmatpush1.msra.mxu0 0.0
    %2851 = vmatprep.subr.mxu0 0.0
    %2852 = vmatpush1.msra.mxu0 0.0
    %2853 = vmatprep.subr.mxu0 0.0
    %2854 = vmatpush1.msra.mxu0 0.0
    %2855 = vmatprep.subr.mxu0 0.0
    %2856 = vmatpush1.msra.mxu0 0.0
    %2857 = vmatprep.subr.mxu0 0.0
    %2858 = vmatpush1.msra.mxu0 0.0
    %2859 = vmatprep.subr.mxu0 0.0
    %2860 = vmatpush1.msra.mxu0 0.0
    %2861 = vmatprep.subr.mxu0 0.0
    %2862 = vmatpush1.msra.mxu0 0.0
    %2863 = vmatprep.subr.mxu0 0.0
    %2864 = vmatpush1.msra.mxu0 0.0
    %2865 = vmatprep.subr.mxu0 0.0
    %2866 = vmatpush1.msra.mxu0 0.0
    %2867 = vmatprep.subr.mxu0 0.0
    %2868 = vmatpush1.msra.mxu0 0.0
    %2869 = vmatprep.subr.mxu0 0.0
    %2870 = vmatpush1.msra.mxu0 0.0
    %2871 = vmatprep.subr.mxu0 0.0
    %2872 = vmatpush1.msra.mxu0 0.0
    %2873 = vmatprep.subr.mxu0 0.0
    %2874 = vmatpush1.msra.mxu0 0.0
    %2875 = vmatprep.subr.mxu0 0.0
    %2876 = vmatpush1.msra.mxu0 0.0
    %2877 = vmatprep.subr.mxu0 0.0
    %2878 = vmatpush1.msra.mxu0 0.0
    %2879 = vmatprep.subr.mxu0 0.0
    %2880 = vmatpush1.msra.mxu0 0.0
    %2881 = vmatprep.subr.mxu0 0.0
    %2882 = vmatpush1.msra.mxu0 0.0
    %2883 = vmatprep.subr.mxu0 0.0
    %2884 = vmatpush1.msra.mxu0 0.0
    %2885 = vmatprep.subr.mxu0 0.0
    %2886 = vmatpush1.msra.mxu0 0.0
    %2887 = vmatprep.mubr.f32.mxu0 0.0
    %2888 = vmatmul.mubr.f32.gmra.mrb[0].mxu0 %v2821
    %v2889 = vpop.f32.mrb[0].mxu0
    %v2890 = vadd.f32 0.0, %v2889
    %v2891 = vpop.f32.mrb[0].mxu0
    %2892 = vdwg.mxu0
    %2894 = vrot.lane.b32.xlu0 %v463, 120
    %v2895 = vpop.permute.xlu0 %2894
    %v2898 = vsel %vm481, %v2505, 0
    %2900 = vmatprep.subr.mxu0 0.0
    %2901 = vmatpush1.msra.mxu0 %v2895
    %2902 = vmatprep.subr.mxu0 0.0
    %2903 = vmatpush1.msra.mxu0 0.0
    %2904 = vmatprep.subr.mxu0 0.0
    %2905 = vmatpush1.msra.mxu0 0.0
    %2906 = vmatprep.subr.mxu0 0.0
    %2907 = vmatpush1.msra.mxu0 0.0
    %2908 = vmatprep.subr.mxu0 0.0
    %2909 = vmatpush1.msra.mxu0 0.0
    %2910 = vmatprep.subr.mxu0 0.0
    %2911 = vmatpush1.msra.mxu0 0.0
    %2912 = vmatprep.subr.mxu0 0.0
    %2913 = vmatpush1.msra.mxu0 0.0
    %2914 = vmatprep.subr.mxu0 0.0
    %2915 = vmatpush1.msra.mxu0 0.0
    %2916 = vmatprep.subr.mxu0 0.0
    %2917 = vmatpush1.msra.mxu0 0.0
    %2918 = vmatprep.subr.mxu0 0.0
    %2919 = vmatpush1.msra.mxu0 0.0
    %2920 = vmatprep.subr.mxu0 0.0
    %2921 = vmatpush1.msra.mxu0 0.0
    %2922 = vmatprep.subr.mxu0 0.0
    %2923 = vmatpush1.msra.mxu0 0.0
    %2924 = vmatprep.subr.mxu0 0.0
    %2925 = vmatpush1.msra.mxu0 0.0
    %2926 = vmatprep.subr.mxu0 0.0
    %2927 = vmatpush1.msra.mxu0 0.0
    %2928 = vmatprep.subr.mxu0 0.0
    %2929 = vmatpush1.msra.mxu0 0.0
    %2930 = vmatprep.subr.mxu0 0.0
    %2931 = vmatpush1.msra.mxu0 0.0
    %2932 = vmatprep.subr.mxu0 0.0
    %2933 = vmatpush1.msra.mxu0 0.0
    %2934 = vmatprep.subr.mxu0 0.0
    %2935 = vmatpush1.msra.mxu0 0.0
    %2936 = vmatprep.subr.mxu0 0.0
    %2937 = vmatpush1.msra.mxu0 0.0
    %2938 = vmatprep.subr.mxu0 0.0
    %2939 = vmatpush1.msra.mxu0 0.0
    %2940 = vmatprep.subr.mxu0 0.0
    %2941 = vmatpush1.msra.mxu0 0.0
    %2942 = vmatprep.subr.mxu0 0.0
    %2943 = vmatpush1.msra.mxu0 0.0
    %2944 = vmatprep.subr.mxu0 0.0
    %2945 = vmatpush1.msra.mxu0 0.0
    %2946 = vmatprep.subr.mxu0 0.0
    %2947 = vmatpush1.msra.mxu0 0.0
    %2948 = vmatprep.subr.mxu0 0.0
    %2949 = vmatpush1.msra.mxu0 0.0
    %2950 = vmatprep.subr.mxu0 0.0
    %2951 = vmatpush1.msra.mxu0 0.0
    %2952 = vmatprep.subr.mxu0 0.0
    %2953 = vmatpush1.msra.mxu0 0.0
    %2954 = vmatprep.subr.mxu0 0.0
    %2955 = vmatpush1.msra.mxu0 0.0
    %2956 = vmatprep.subr.mxu0 0.0
    %2957 = vmatpush1.msra.mxu0 0.0
    %2958 = vmatprep.subr.mxu0 0.0
    %2959 = vmatpush1.msra.mxu0 0.0
    %2960 = vmatprep.subr.mxu0 0.0
    %2961 = vmatpush1.msra.mxu0 0.0
    %2962 = vmatprep.subr.mxu0 0.0
    %2963 = vmatpush1.msra.mxu0 0.0
    %2964 = vmatprep.mubr.f32.mxu0 0.0
    %2965 = vmatmul.mubr.f32.gmra.mrb[0].mxu0 %v2898
    %v2966 = vpop.f32.mrb[0].mxu0
    %v2967 = vadd.f32 0.0, %v2966
    %v2968 = vpop.f32.mrb[0].mxu0
    %2969 = vdwg.mxu0
    %2971 = vrot.lane.b32.xlu0 %v468, 120
    %v2972 = vpop.permute.xlu0 %2971
    %v2975 = vsel %vm481, %v2506, 0
    %2977 = vmatprep.subr.mxu0 0.0
    %2978 = vmatpush1.msra.mxu0 %v2972
    %2979 = vmatprep.subr.mxu0 0.0
    %2980 = vmatpush1.msra.mxu0 0.0
    %2981 = vmatprep.subr.mxu0 0.0
    %2982 = vmatpush1.msra.mxu0 0.0
    %2983 = vmatprep.subr.mxu0 0.0
    %2984 = vmatpush1.msra.mxu0 0.0
    %2985 = vmatprep.subr.mxu0 0.0
    %2986 = vmatpush1.msra.mxu0 0.0
    %2987 = vmatprep.subr.mxu0 0.0
    %2988 = vmatpush1.msra.mxu0 0.0
    %2989 = vmatprep.subr.mxu0 0.0
    %2990 = vmatpush1.msra.mxu0 0.0
    %2991 = vmatprep.subr.mxu0 0.0
    %2992 = vmatpush1.msra.mxu0 0.0
    %2993 = vmatprep.subr.mxu0 0.0
    %2994 = vmatpush1.msra.mxu0 0.0
    %2995 = vmatprep.subr.mxu0 0.0
    %2996 = vmatpush1.msra.mxu0 0.0
    %2997 = vmatprep.subr.mxu0 0.0
    %2998 = vmatpush1.msra.mxu0 0.0
    %2999 = vmatprep.subr.mxu0 0.0
    %3000 = vmatpush1.msra.mxu0 0.0
    %3001 = vmatprep.subr.mxu0 0.0
    %3002 = vmatpush1.msra.mxu0 0.0
    %3003 = vmatprep.subr.mxu0 0.0
    %3004 = vmatpush1.msra.mxu0 0.0
    %3005 = vmatprep.subr.mxu0 0.0
    %3006 = vmatpush1.msra.mxu0 0.0
    %3007 = vmatprep.subr.mxu0 0.0
    %3008 = vmatpush1.msra.mxu0 0.0
    %3009 = vmatprep.subr.mxu0 0.0
    %3010 = vmatpush1.msra.mxu0 0.0
    %3011 = vmatprep.subr.mxu0 0.0
    %3012 = vmatpush1.msra.mxu0 0.0
    %3013 = vmatprep.subr.mxu0 0.0
    %3014 = vmatpush1.msra.mxu0 0.0
    %3015 = vmatprep.subr.mxu0 0.0
    %3016 = vmatpush1.msra.mxu0 0.0
    %3017 = vmatprep.subr.mxu0 0.0
    %3018 = vmatpush1.msra.mxu0 0.0
    %3019 = vmatprep.subr.mxu0 0.0
    %3020 = vmatpush1.msra.mxu0 0.0
    %3021 = vmatprep.subr.mxu0 0.0
    %3022 = vmatpush1.msra.mxu0 0.0
    %3023 = vmatprep.subr.mxu0 0.0
    %3024 = vmatpush1.msra.mxu0 0.0
    %3025 = vmatprep.subr.mxu0 0.0
    %3026 = vmatpush1.msra.mxu0 0.0
    %3027 = vmatprep.subr.mxu0 0.0
    %3028 = vmatpush1.msra.mxu0 0.0
    %3029 = vmatprep.subr.mxu0 0.0
    %3030 = vmatpush1.msra.mxu0 0.0
    %3031 = vmatprep.subr.mxu0 0.0
    %3032 = vmatpush1.msra.mxu0 0.0
    %3033 = vmatprep.subr.mxu0 0.0
    %3034 = vmatpush1.msra.mxu0 0.0
    %3035 = vmatprep.subr.mxu0 0.0
    %3036 = vmatpush1.msra.mxu0 0.0
    %3037 = vmatprep.subr.mxu0 0.0
    %3038 = vmatpush1.msra.mxu0 0.0
    %3039 = vmatprep.subr.mxu0 0.0
    %3040 = vmatpush1.msra.mxu0 0.0
    %3041 = vmatprep.mubr.f32.mxu0 0.0
    %3042 = vmatmul.mubr.f32.gmra.mrb[0].mxu0 %v2975
    %v3043 = vpop.f32.mrb[0].mxu0
    %v3044 = vadd.f32 0.0, %v3043
    %v3045 = vpop.f32.mrb[0].mxu0
    %3046 = vdwg.mxu0
    %3048 = vrot.lane.b32.xlu0 %v473, 120
    %v3049 = vpop.permute.xlu0 %3048
    %v3052 = vsel %vm481, %v2507, 0
    %3054 = vmatprep.subr.mxu0 0.0
    %3055 = vmatpush1.msra.mxu0 %v3049
    %3056 = vmatprep.subr.mxu0 0.0
    %3057 = vmatpush1.msra.mxu0 0.0
    %3058 = vmatprep.subr.mxu0 0.0
    %3059 = vmatpush1.msra.mxu0 0.0
    %3060 = vmatprep.subr.mxu0 0.0
    %3061 = vmatpush1.msra.mxu0 0.0
    %3062 = vmatprep.subr.mxu0 0.0
    %3063 = vmatpush1.msra.mxu0 0.0
    %3064 = vmatprep.subr.mxu0 0.0
    %3065 = vmatpush1.msra.mxu0 0.0
    %3066 = vmatprep.subr.mxu0 0.0
    %3067 = vmatpush1.msra.mxu0 0.0
    %3068 = vmatprep.subr.mxu0 0.0
    %3069 = vmatpush1.msra.mxu0 0.0
    %3070 = vmatprep.subr.mxu0 0.0
    %3071 = vmatpush1.msra.mxu0 0.0
    %3072 = vmatprep.subr.mxu0 0.0
    %3073 = vmatpush1.msra.mxu0 0.0
    %3074 = vmatprep.subr.mxu0 0.0
    %3075 = vmatpush1.msra.mxu0 0.0
    %3076 = vmatprep.subr.mxu0 0.0
    %3077 = vmatpush1.msra.mxu0 0.0
    %3078 = vmatprep.subr.mxu0 0.0
    %3079 = vmatpush1.msra.mxu0 0.0
    %3080 = vmatprep.subr.mxu0 0.0
    %3081 = vmatpush1.msra.mxu0 0.0
    %3082 = vmatprep.subr.mxu0 0.0
    %3083 = vmatpush1.msra.mxu0 0.0
    %3084 = vmatprep.subr.mxu0 0.0
    %3085 = vmatpush1.msra.mxu0 0.0
    %3086 = vmatprep.subr.mxu0 0.0
    %3087 = vmatpush1.msra.mxu0 0.0
    %3088 = vmatprep.subr.mxu0 0.0
    %3089 = vmatpush1.msra.mxu0 0.0
    %3090 = vmatprep.subr.mxu0 0.0
    %3091 = vmatpush1.msra.mxu0 0.0
    %3092 = vmatprep.subr.mxu0 0.0
    %3093 = vmatpush1.msra.mxu0 0.0
    %3094 = vmatprep.subr.mxu0 0.0
    %3095 = vmatpush1.msra.mxu0 0.0
    %3096 = vmatprep.subr.mxu0 0.0
    %3097 = vmatpush1.msra.mxu0 0.0
    %3098 = vmatprep.subr.mxu0 0.0
    %3099 = vmatpush1.msra.mxu0 0.0
    %3100 = vmatprep.subr.mxu0 0.0
    %3101 = vmatpush1.msra.mxu0 0.0
    %3102 = vmatprep.subr.mxu0 0.0
    %3103 = vmatpush1.msra.mxu0 0.0
    %3104 = vmatprep.subr.mxu0 0.0
    %3105 = vmatpush1.msra.mxu0 0.0
    %3106 = vmatprep.subr.mxu0 0.0
    %3107 = vmatpush1.msra.mxu0 0.0
    %3108 = vmatprep.subr.mxu0 0.0
    %3109 = vmatpush1.msra.mxu0 0.0
    %3110 = vmatprep.subr.mxu0 0.0
    %3111 = vmatpush1.msra.mxu0 0.0
    %3112 = vmatprep.subr.mxu0 0.0
    %3113 = vmatpush1.msra.mxu0 0.0
    %3114 = vmatprep.subr.mxu0 0.0
    %3115 = vmatpush1.msra.mxu0 0.0
    %3116 = vmatprep.subr.mxu0 0.0
    %3117 = vmatpush1.msra.mxu0 0.0
    %3118 = vmatprep.mubr.f32.mxu0 0.0
    %3119 = vmatmul.mubr.f32.gmra.mrb[0].mxu0 %v3052
    %v3120 = vpop.f32.mrb[0].mxu0
    %v3121 = vadd.f32 0.0, %v3120
    %v3122 = vpop.f32.mrb[0].mxu0
    %3123 = vdwg.mxu0
    %3124 = vrot.lane.b32.xlu0 %v220, 112
    %v3125 = vpop.permute.xlu0 %3124
    %3126 = vrot.lane.b32.xlu0 %v329, 112
    %v3127 = vpop.permute.xlu0 %3126
    %v3128 = vsel %vm481, %v3125, 0
    %v3130 = vsel %vm481, %v3127, 0
    %3132 = vmatprep.subr.mxu0 0.0
    %3133 = vmatpush1.xpose.msra.mxu0 %v3130
    %3134 = vmatprep.subr.mxu0 0.0
    %3135 = vmatpush1.xpose.msra.mxu0 0.0
    %3136 = vmatprep.subr.mxu0 0.0
    %3137 = vmatpush1.xpose.msra.mxu0 0.0
    %3138 = vmatprep.subr.mxu0 0.0
    %3139 = vmatpush1.xpose.msra.mxu0 0.0
    %3140 = vmatprep.subr.mxu0 0.0
    %3141 = vmatpush1.xpose.msra.mxu0 0.0
    %3142 = vmatprep.subr.mxu0 0.0
    %3143 = vmatpush1.xpose.msra.mxu0 0.0
    %3144 = vmatprep.subr.mxu0 0.0
    %3145 = vmatpush1.xpose.msra.mxu0 0.0
    %3146 = vmatprep.subr.mxu0 0.0
    %3147 = vmatpush1.xpose.msra.mxu0 0.0
    %3148 = vmatprep.subr.mxu0 0.0
    %3149 = vmatpush1.xpose.msra.mxu0 0.0
    %3150 = vmatprep.subr.mxu0 0.0
    %3151 = vmatpush1.xpose.msra.mxu0 0.0
    %3152 = vmatprep.subr.mxu0 0.0
    %3153 = vmatpush1.xpose.msra.mxu0 0.0
    %3154 = vmatprep.subr.mxu0 0.0
    %3155 = vmatpush1.xpose.msra.mxu0 0.0
    %3156 = vmatprep.subr.mxu0 0.0
    %3157 = vmatpush1.xpose.msra.mxu0 0.0
    %3158 = vmatprep.subr.mxu0 0.0
    %3159 = vmatpush1.xpose.msra.mxu0 0.0
    %3160 = vmatprep.subr.mxu0 0.0
    %3161 = vmatpush1.xpose.msra.mxu0 0.0
    %3162 = vmatprep.subr.mxu0 0.0
    %3163 = vmatpush1.xpose.msra.mxu0 0.0
    %3164 = vmatprep.subr.mxu0 0.0
    %3165 = vmatpush1.xpose.msra.mxu0 0.0
    %3166 = vmatprep.subr.mxu0 0.0
    %3167 = vmatpush1.xpose.msra.mxu0 0.0
    %3168 = vmatprep.subr.mxu0 0.0
    %3169 = vmatpush1.xpose.msra.mxu0 0.0
    %3170 = vmatprep.subr.mxu0 0.0
    %3171 = vmatpush1.xpose.msra.mxu0 0.0
    %3172 = vmatprep.subr.mxu0 0.0
    %3173 = vmatpush1.xpose.msra.mxu0 0.0
    %3174 = vmatprep.subr.mxu0 0.0
    %3175 = vmatpush1.xpose.msra.mxu0 0.0
    %3176 = vmatprep.subr.mxu0 0.0
    %3177 = vmatpush1.xpose.msra.mxu0 0.0
    %3178 = vmatprep.subr.mxu0 0.0
    %3179 = vmatpush1.xpose.msra.mxu0 0.0
    %3180 = vmatprep.subr.mxu0 0.0
    %3181 = vmatpush1.xpose.msra.mxu0 0.0
    %3182 = vmatprep.subr.mxu0 0.0
    %3183 = vmatpush1.xpose.msra.mxu0 0.0
    %3184 = vmatprep.subr.mxu0 0.0
    %3185 = vmatpush1.xpose.msra.mxu0 0.0
    %3186 = vmatprep.subr.mxu0 0.0
    %3187 = vmatpush1.xpose.msra.mxu0 0.0
    %3188 = vmatprep.subr.mxu0 0.0
    %3189 = vmatpush1.xpose.msra.mxu0 0.0
    %3190 = vmatprep.subr.mxu0 0.0
    %3191 = vmatpush1.xpose.msra.mxu0 0.0
    %3192 = vmatprep.subr.mxu0 0.0
    %3193 = vmatpush1.xpose.msra.mxu0 0.0
    %3194 = vmatprep.subr.mxu0 0.0
    %3195 = vmatpush1.xpose.msra.mxu0 0.0
    %3196 = vmatprep.mubr.f32.mxu0 0.0
    %3197 = vmatmul.mubr.f32.gmra.mrb[0].mxu0 %v3128
    %v3198 = vpop.f32.mrb[0].mxu0
    %v3199 = vadd.f32 0.0, %v3198
    %v3200 = vpop.f32.mrb[0].mxu0
    %3201 = vdwg.mxu0
    %3202 = vrot.lane.b32.xlu0 %v225, 112
    %v3203 = vpop.permute.xlu0 %3202
    %3204 = vrot.lane.b32.xlu0 %v334, 112
    %v3205 = vpop.permute.xlu0 %3204
    %v3206 = vsel %vm481, %v3203, 0
    %v3208 = vsel %vm481, %v3205, 0
    %3210 = vmatprep.subr.mxu0 0.0
    %3211 = vmatpush1.xpose.msra.mxu0 %v3208
    %3212 = vmatprep.subr.mxu0 0.0
    %3213 = vmatpush1.xpose.msra.mxu0 0.0
    %3214 = vmatprep.subr.mxu0 0.0
    %3215 = vmatpush1.xpose.msra.mxu0 0.0
    %3216 = vmatprep.subr.mxu0 0.0
    %3217 = vmatpush1.xpose.msra.mxu0 0.0
    %3218 = vmatprep.subr.mxu0 0.0
    %3219 = vmatpush1.xpose.msra.mxu0 0.0
    %3220 = vmatprep.subr.mxu0 0.0
    %3221 = vmatpush1.xpose.msra.mxu0 0.0
    %3222 = vmatprep.subr.mxu0 0.0
    %3223 = vmatpush1.xpose.msra.mxu0 0.0
    %3224 = vmatprep.subr.mxu0 0.0
    %3225 = vmatpush1.xpose.msra.mxu0 0.0
    %3226 = vmatprep.subr.mxu0 0.0
    %3227 = vmatpush1.xpose.msra.mxu0 0.0
    %3228 = vmatprep.subr.mxu0 0.0
    %3229 = vmatpush1.xpose.msra.mxu0 0.0
    %3230 = vmatprep.subr.mxu0 0.0
    %3231 = vmatpush1.xpose.msra.mxu0 0.0
    %3232 = vmatprep.subr.mxu0 0.0
    %3233 = vmatpush1.xpose.msra.mxu0 0.0
    %3234 = vmatprep.subr.mxu0 0.0
    %3235 = vmatpush1.xpose.msra.mxu0 0.0
    %3236 = vmatprep.subr.mxu0 0.0
    %3237 = vmatpush1.xpose.msra.mxu0 0.0
    %3238 = vmatprep.subr.mxu0 0.0
    %3239 = vmatpush1.xpose.msra.mxu0 0.0
    %3240 = vmatprep.subr.mxu0 0.0
    %3241 = vmatpush1.xpose.msra.mxu0 0.0
    %3242 = vmatprep.subr.mxu0 0.0
    %3243 = vmatpush1.xpose.msra.mxu0 0.0
    %3244 = vmatprep.subr.mxu0 0.0
    %3245 = vmatpush1.xpose.msra.mxu0 0.0
    %3246 = vmatprep.subr.mxu0 0.0
    %3247 = vmatpush1.xpose.msra.mxu0 0.0
    %3248 = vmatprep.subr.mxu0 0.0
    %3249 = vmatpush1.xpose.msra.mxu0 0.0
    %3250 = vmatprep.subr.mxu0 0.0
    %3251 = vmatpush1.xpose.msra.mxu0 0.0
    %3252 = vmatprep.subr.mxu0 0.0
    %3253 = vmatpush1.xpose.msra.mxu0 0.0
    %3254 = vmatprep.subr.mxu0 0.0
    %3255 = vmatpush1.xpose.msra.mxu0 0.0
    %3256 = vmatprep.subr.mxu0 0.0
    %3257 = vmatpush1.xpose.msra.mxu0 0.0
    %3258 = vmatprep.subr.mxu0 0.0
    %3259 = vmatpush1.xpose.msra.mxu0 0.0
    %3260 = vmatprep.subr.mxu0 0.0
    %3261 = vmatpush1.xpose.msra.mxu0 0.0
    %3262 = vmatprep.subr.mxu0 0.0
    %3263 = vmatpush1.xpose.msra.mxu0 0.0
    %3264 = vmatprep.subr.mxu0 0.0
    %3265 = vmatpush1.xpose.msra.mxu0 0.0
    %3266 = vmatprep.subr.mxu0 0.0
    %3267 = vmatpush1.xpose.msra.mxu0 0.0
    %3268 = vmatprep.subr.mxu0 0.0
    %3269 = vmatpush1.xpose.msra.mxu0 0.0
    %3270 = vmatprep.subr.mxu0 0.0
    %3271 = vmatpush1.xpose.msra.mxu0 0.0
    %3272 = vmatprep.subr.mxu0 0.0
    %3273 = vmatpush1.xpose.msra.mxu0 0.0
    %3274 = vmatprep.mubr.f32.mxu0 0.0
    %3275 = vmatmul.mubr.f32.gmra.mrb[0].mxu0 %v3206
    %v3276 = vpop.f32.mrb[0].mxu0
    %v3277 = vadd.f32 0.0, %v3276
    %v3278 = vpop.f32.mrb[0].mxu0
    %3279 = vdwg.mxu0
    %3280 = vrot.lane.b32.xlu0 %v230, 112
    %v3281 = vpop.permute.xlu0 %3280
    %3282 = vrot.lane.b32.xlu0 %v339, 112
    %v3283 = vpop.permute.xlu0 %3282
    %v3284 = vsel %vm481, %v3281, 0
    %v3286 = vsel %vm481, %v3283, 0
    %3288 = vmatprep.subr.mxu0 0.0
    %3289 = vmatpush1.xpose.msra.mxu0 %v3286
    %3290 = vmatprep.subr.mxu0 0.0
    %3291 = vmatpush1.xpose.msra.mxu0 0.0
    %3292 = vmatprep.subr.mxu0 0.0
    %3293 = vmatpush1.xpose.msra.mxu0 0.0
    %3294 = vmatprep.subr.mxu0 0.0
    %3295 = vmatpush1.xpose.msra.mxu0 0.0
    %3296 = vmatprep.subr.mxu0 0.0
    %3297 = vmatpush1.xpose.msra.mxu0 0.0
    %3298 = vmatprep.subr.mxu0 0.0
    %3299 = vmatpush1.xpose.msra.mxu0 0.0
    %3300 = vmatprep.subr.mxu0 0.0
    %3301 = vmatpush1.xpose.msra.mxu0 0.0
    %3302 = vmatprep.subr.mxu0 0.0
    %3303 = vmatpush1.xpose.msra.mxu0 0.0
    %3304 = vmatprep.subr.mxu0 0.0
    %3305 = vmatpush1.xpose.msra.mxu0 0.0
    %3306 = vmatprep.subr.mxu0 0.0
    %3307 = vmatpush1.xpose.msra.mxu0 0.0
    %3308 = vmatprep.subr.mxu0 0.0
    %3309 = vmatpush1.xpose.msra.mxu0 0.0
    %3310 = vmatprep.subr.mxu0 0.0
    %3311 = vmatpush1.xpose.msra.mxu0 0.0
    %3312 = vmatprep.subr.mxu0 0.0
    %3313 = vmatpush1.xpose.msra.mxu0 0.0
    %3314 = vmatprep.subr.mxu0 0.0
    %3315 = vmatpush1.xpose.msra.mxu0 0.0
    %3316 = vmatprep.subr.mxu0 0.0
    %3317 = vmatpush1.xpose.msra.mxu0 0.0
    %3318 = vmatprep.subr.mxu0 0.0
    %3319 = vmatpush1.xpose.msra.mxu0 0.0
    %3320 = vmatprep.subr.mxu0 0.0
    %3321 = vmatpush1.xpose.msra.mxu0 0.0
    %3322 = vmatprep.subr.mxu0 0.0
    %3323 = vmatpush1.xpose.msra.mxu0 0.0
    %3324 = vmatprep.subr.mxu0 0.0
    %3325 = vmatpush1.xpose.msra.mxu0 0.0
    %3326 = vmatprep.subr.mxu0 0.0
    %3327 = vmatpush1.xpose.msra.mxu0 0.0
    %3328 = vmatprep.subr.mxu0 0.0
    %3329 = vmatpush1.xpose.msra.mxu0 0.0
    %3330 = vmatprep.subr.mxu0 0.0
    %3331 = vmatpush1.xpose.msra.mxu0 0.0
    %3332 = vmatprep.subr.mxu0 0.0
    %3333 = vmatpush1.xpose.msra.mxu0 0.0
    %3334 = vmatprep.subr.mxu0 0.0
    %3335 = vmatpush1.xpose.msra.mxu0 0.0
    %3336 = vmatprep.subr.mxu0 0.0
    %3337 = vmatpush1.xpose.msra.mxu0 0.0
    %3338 = vmatprep.subr.mxu0 0.0
    %3339 = vmatpush1.xpose.msra.mxu0 0.0
    %3340 = vmatprep.subr.mxu0 0.0
    %3341 = vmatpush1.xpose.msra.mxu0 0.0
    %3342 = vmatprep.subr.mxu0 0.0
    %3343 = vmatpush1.xpose.msra.mxu0 0.0
    %3344 = vmatprep.subr.mxu0 0.0
    %3345 = vmatpush1.xpose.msra.mxu0 0.0
    %3346 = vmatprep.subr.mxu0 0.0
    %3347 = vmatpush1.xpose.msra.mxu0 0.0
    %3348 = vmatprep.subr.mxu0 0.0
    %3349 = vmatpush1.xpose.msra.mxu0 0.0
    %3350 = vmatprep.subr.mxu0 0.0
    %3351 = vmatpush1.xpose.msra.mxu0 0.0
    %3352 = vmatprep.mubr.f32.mxu0 0.0
    %3353 = vmatmul.mubr.f32.gmra.mrb[0].mxu0 %v3284
    %v3354 = vpop.f32.mrb[0].mxu0
    %v3355 = vadd.f32 0.0, %v3354
    %v3356 = vpop.f32.mrb[0].mxu0
    %3357 = vdwg.mxu0
    %3358 = vrot.lane.b32.xlu0 %v235, 112
    %v3359 = vpop.permute.xlu0 %3358
    %3360 = vrot.lane.b32.xlu0 %v344, 112
    %v3361 = vpop.permute.xlu0 %3360
    %v3362 = vsel %vm481, %v3359, 0
    %v3364 = vsel %vm481, %v3361, 0
    %3366 = vmatprep.subr.mxu0 0.0
    %3367 = vmatpush1.xpose.msra.mxu0 %v3364
    %3368 = vmatprep.subr.mxu0 0.0
    %3369 = vmatpush1.xpose.msra.mxu0 0.0
    %3370 = vmatprep.subr.mxu0 0.0
    %3371 = vmatpush1.xpose.msra.mxu0 0.0
    %3372 = vmatprep.subr.mxu0 0.0
    %3373 = vmatpush1.xpose.msra.mxu0 0.0
    %3374 = vmatprep.subr.mxu0 0.0
    %3375 = vmatpush1.xpose.msra.mxu0 0.0
    %3376 = vmatprep.subr.mxu0 0.0
    %3377 = vmatpush1.xpose.msra.mxu0 0.0
    %3378 = vmatprep.subr.mxu0 0.0
    %3379 = vmatpush1.xpose.msra.mxu0 0.0
    %3380 = vmatprep.subr.mxu0 0.0
    %3381 = vmatpush1.xpose.msra.mxu0 0.0
    %3382 = vmatprep.subr.mxu0 0.0
    %3383 = vmatpush1.xpose.msra.mxu0 0.0
    %3384 = vmatprep.subr.mxu0 0.0
    %3385 = vmatpush1.xpose.msra.mxu0 0.0
    %3386 = vmatprep.subr.mxu0 0.0
    %3387 = vmatpush1.xpose.msra.mxu0 0.0
    %3388 = vmatprep.subr.mxu0 0.0
    %3389 = vmatpush1.xpose.msra.mxu0 0.0
    %3390 = vmatprep.subr.mxu0 0.0
    %3391 = vmatpush1.xpose.msra.mxu0 0.0
    %3392 = vmatprep.subr.mxu0 0.0
    %3393 = vmatpush1.xpose.msra.mxu0 0.0
    %3394 = vmatprep.subr.mxu0 0.0
    %3395 = vmatpush1.xpose.msra.mxu0 0.0
    %3396 = vmatprep.subr.mxu0 0.0
    %3397 = vmatpush1.xpose.msra.mxu0 0.0
    %3398 = vmatprep.subr.mxu0 0.0
    %3399 = vmatpush1.xpose.msra.mxu0 0.0
    %3400 = vmatprep.subr.mxu0 0.0
    %3401 = vmatpush1.xpose.msra.mxu0 0.0
    %3402 = vmatprep.subr.mxu0 0.0
    %3403 = vmatpush1.xpose.msra.mxu0 0.0
    %3404 = vmatprep.subr.mxu0 0.0
    %3405 = vmatpush1.xpose.msra.mxu0 0.0
    %3406 = vmatprep.subr.mxu0 0.0
    %3407 = vmatpush1.xpose.msra.mxu0 0.0
    %3408 = vmatprep.subr.mxu0 0.0
    %3409 = vmatpush1.xpose.msra.mxu0 0.0
    %3410 = vmatprep.subr.mxu0 0.0
    %3411 = vmatpush1.xpose.msra.mxu0 0.0
    %3412 = vmatprep.subr.mxu0 0.0
    %3413 = vmatpush1.xpose.msra.mxu0 0.0
    %3414 = vmatprep.subr.mxu0 0.0
    %3415 = vmatpush1.xpose.msra.mxu0 0.0
    %3416 = vmatprep.subr.mxu0 0.0
    %3417 = vmatpush1.xpose.msra.mxu0 0.0
    %3418 = vmatprep.subr.mxu0 0.0
    %3419 = vmatpush1.xpose.msra.mxu0 0.0
    %3420 = vmatprep.subr.mxu0 0.0
    %3421 = vmatpush1.xpose.msra.mxu0 0.0
    %3422 = vmatprep.subr.mxu0 0.0
    %3423 = vmatpush1.xpose.msra.mxu0 0.0
    %3424 = vmatprep.subr.mxu0 0.0
    %3425 = vmatpush1.xpose.msra.mxu0 0.0
    %3426 = vmatprep.subr.mxu0 0.0
    %3427 = vmatpush1.xpose.msra.mxu0 0.0
    %3428 = vmatprep.subr.mxu0 0.0
    %3429 = vmatpush1.xpose.msra.mxu0 0.0
    %3430 = vmatprep.mubr.f32.mxu0 0.0
    %3431 = vmatmul.mubr.f32.gmra.mrb[0].mxu0 %v3362
    %v3432 = vpop.f32.mrb[0].mxu0
    %v3433 = vadd.f32 0.0, %v3432
    %v3434 = vpop.f32.mrb[0].mxu0
    %3435 = vdwg.mxu0
    %3436 = vrot.lane.b32.xlu0 %v240, 112
    %v3437 = vpop.permute.xlu0 %3436
    %3438 = vrot.lane.b32.xlu0 %v349, 112
    %v3439 = vpop.permute.xlu0 %3438
    %v3440 = vsel %vm481, %v3437, 0
    %v3442 = vsel %vm481, %v3439, 0
    %3444 = vmatprep.subr.mxu0 0.0
    %3445 = vmatpush1.xpose.msra.mxu0 %v3442
    %3446 = vmatprep.subr.mxu0 0.0
    %3447 = vmatpush1.xpose.msra.mxu0 0.0
    %3448 = vmatprep.subr.mxu0 0.0
    %3449 = vmatpush1.xpose.msra.mxu0 0.0
    %3450 = vmatprep.subr.mxu0 0.0
    %3451 = vmatpush1.xpose.msra.mxu0 0.0
    %3452 = vmatprep.subr.mxu0 0.0
    %3453 = vmatpush1.xpose.msra.mxu0 0.0
    %3454 = vmatprep.subr.mxu0 0.0
    %3455 = vmatpush1.xpose.msra.mxu0 0.0
    %3456 = vmatprep.subr.mxu0 0.0
    %3457 = vmatpush1.xpose.msra.mxu0 0.0
    %3458 = vmatprep.subr.mxu0 0.0
    %3459 = vmatpush1.xpose.msra.mxu0 0.0
    %3460 = vmatprep.subr.mxu0 0.0
    %3461 = vmatpush1.xpose.msra.mxu0 0.0
    %3462 = vmatprep.subr.mxu0 0.0
    %3463 = vmatpush1.xpose.msra.mxu0 0.0
    %3464 = vmatprep.subr.mxu0 0.0
    %3465 = vmatpush1.xpose.msra.mxu0 0.0
    %3466 = vmatprep.subr.mxu0 0.0
    %3467 = vmatpush1.xpose.msra.mxu0 0.0
    %3468 = vmatprep.subr.mxu0 0.0
    %3469 = vmatpush1.xpose.msra.mxu0 0.0
    %3470 = vmatprep.subr.mxu0 0.0
    %3471 = vmatpush1.xpose.msra.mxu0 0.0
    %3472 = vmatprep.subr.mxu0 0.0
    %3473 = vmatpush1.xpose.msra.mxu0 0.0
    %3474 = vmatprep.subr.mxu0 0.0
    %3475 = vmatpush1.xpose.msra.mxu0 0.0
    %3476 = vmatprep.subr.mxu0 0.0
    %3477 = vmatpush1.xpose.msra.mxu0 0.0
    %3478 = vmatprep.subr.mxu0 0.0
    %3479 = vmatpush1.xpose.msra.mxu0 0.0
    %3480 = vmatprep.subr.mxu0 0.0
    %3481 = vmatpush1.xpose.msra.mxu0 0.0
    %3482 = vmatprep.subr.mxu0 0.0
    %3483 = vmatpush1.xpose.msra.mxu0 0.0
    %3484 = vmatprep.subr.mxu0 0.0
    %3485 = vmatpush1.xpose.msra.mxu0 0.0
    %3486 = vmatprep.subr.mxu0 0.0
    %3487 = vmatpush1.xpose.msra.mxu0 0.0
    %3488 = vmatprep.subr.mxu0 0.0
    %3489 = vmatpush1.xpose.msra.mxu0 0.0
    %3490 = vmatprep.subr.mxu0 0.0
    %3491 = vmatpush1.xpose.msra.mxu0 0.0
    %3492 = vmatprep.subr.mxu0 0.0
    %3493 = vmatpush1.xpose.msra.mxu0 0.0
    %3494 = vmatprep.subr.mxu0 0.0
    %3495 = vmatpush1.xpose.msra.mxu0 0.0
    %3496 = vmatprep.subr.mxu0 0.0
    %3497 = vmatpush1.xpose.msra.mxu0 0.0
    %3498 = vmatprep.subr.mxu0 0.0
    %3499 = vmatpush1.xpose.msra.mxu0 0.0
    %3500 = vmatprep.subr.mxu0 0.0
    %3501 = vmatpush1.xpose.msra.mxu0 0.0
    %3502 = vmatprep.subr.mxu0 0.0
    %3503 = vmatpush1.xpose.msra.mxu0 0.0
    %3504 = vmatprep.subr.mxu0 0.0
    %3505 = vmatpush1.xpose.msra.mxu0 0.0
    %3506 = vmatprep.subr.mxu0 0.0
    %3507 = vmatpush1.xpose.msra.mxu0 0.0
    %3508 = vmatprep.mubr.f32.mxu0 0.0
    %3509 = vmatmul.mubr.f32.gmra.mrb[0].mxu0 %v3440
    %v3510 = vpop.f32.mrb[0].mxu0
    %v3511 = vadd.f32 0.0, %v3510
    %v3512 = vpop.f32.mrb[0].mxu0
    %3513 = vdwg.mxu0
    %3514 = vrot.lane.b32.xlu0 %v245, 112
    %v3515 = vpop.permute.xlu0 %3514
    %3516 = vrot.lane.b32.xlu0 %v354, 112
    %v3517 = vpop.permute.xlu0 %3516
    %v3518 = vsel %vm481, %v3515, 0
    %v3520 = vsel %vm481, %v3517, 0
    %3522 = vmatprep.subr.mxu0 0.0
    %3523 = vmatpush1.xpose.msra.mxu0 %v3520
    %3524 = vmatprep.subr.mxu0 0.0
    %3525 = vmatpush1.xpose.msra.mxu0 0.0
    %3526 = vmatprep.subr.mxu0 0.0
    %3527 = vmatpush1.xpose.msra.mxu0 0.0
    %3528 = vmatprep.subr.mxu0 0.0
    %3529 = vmatpush1.xpose.msra.mxu0 0.0
    %3530 = vmatprep.subr.mxu0 0.0
    %3531 = vmatpush1.xpose.msra.mxu0 0.0
    %3532 = vmatprep.subr.mxu0 0.0
    %3533 = vmatpush1.xpose.msra.mxu0 0.0
    %3534 = vmatprep.subr.mxu0 0.0
    %3535 = vmatpush1.xpose.msra.mxu0 0.0
    %3536 = vmatprep.subr.mxu0 0.0
    %3537 = vmatpush1.xpose.msra.mxu0 0.0
    %3538 = vmatprep.subr.mxu0 0.0
    %3539 = vmatpush1.xpose.msra.mxu0 0.0
    %3540 = vmatprep.subr.mxu0 0.0
    %3541 = vmatpush1.xpose.msra.mxu0 0.0
    %3542 = vmatprep.subr.mxu0 0.0
    %3543 = vmatpush1.xpose.msra.mxu0 0.0
    %3544 = vmatprep.subr.mxu0 0.0
    %3545 = vmatpush1.xpose.msra.mxu0 0.0
    %3546 = vmatprep.subr.mxu0 0.0
    %3547 = vmatpush1.xpose.msra.mxu0 0.0
    %3548 = vmatprep.subr.mxu0 0.0
    %3549 = vmatpush1.xpose.msra.mxu0 0.0
    %3550 = vmatprep.subr.mxu0 0.0
    %3551 = vmatpush1.xpose.msra.mxu0 0.0
    %3552 = vmatprep.subr.mxu0 0.0
    %3553 = vmatpush1.xpose.msra.mxu0 0.0
    %3554 = vmatprep.subr.mxu0 0.0
    %3555 = vmatpush1.xpose.msra.mxu0 0.0
    %3556 = vmatprep.subr.mxu0 0.0
    %3557 = vmatpush1.xpose.msra.mxu0 0.0
    %3558 = vmatprep.subr.mxu0 0.0
    %3559 = vmatpush1.xpose.msra.mxu0 0.0
    %3560 = vmatprep.subr.mxu0 0.0
    %3561 = vmatpush1.xpose.msra.mxu0 0.0
    %3562 = vmatprep.subr.mxu0 0.0
    %3563 = vmatpush1.xpose.msra.mxu0 0.0
    %3564 = vmatprep.subr.mxu0 0.0
    %3565 = vmatpush1.xpose.msra.mxu0 0.0
    %3566 = vmatprep.subr.mxu0 0.0
    %3567 = vmatpush1.xpose.msra.mxu0 0.0
    %3568 = vmatprep.subr.mxu0 0.0
    %3569 = vmatpush1.xpose.msra.mxu0 0.0
    %3570 = vmatprep.subr.mxu0 0.0
    %3571 = vmatpush1.xpose.msra.mxu0 0.0
    %3572 = vmatprep.subr.mxu0 0.0
    %3573 = vmatpush1.xpose.msra.mxu0 0.0
    %3574 = vmatprep.subr.mxu0 0.0
    %3575 = vmatpush1.xpose.msra.mxu0 0.0
    %3576 = vmatprep.subr.mxu0 0.0
    %3577 = vmatpush1.xpose.msra.mxu0 0.0
    %3578 = vmatprep.subr.mxu0 0.0
    %3579 = vmatpush1.xpose.msra.mxu0 0.0
    %3580 = vmatprep.subr.mxu0 0.0
    %3581 = vmatpush1.xpose.msra.mxu0 0.0
    %3582 = vmatprep.subr.mxu0 0.0
    %3583 = vmatpush1.xpose.msra.mxu0 0.0
    %3584 = vmatprep.subr.mxu0 0.0
    %3585 = vmatpush1.xpose.msra.mxu0 0.0
    %3586 = vmatprep.mubr.f32.mxu0 0.0
    %3587 = vmatmul.mubr.f32.gmra.mrb[0].mxu0 %v3518
    %v3588 = vpop.f32.mrb[0].mxu0
    %v3589 = vadd.f32 0.0, %v3588
    %v3590 = vpop.f32.mrb[0].mxu0
    %3591 = vdwg.mxu0
    %3592 = vrot.lane.b32.xlu0 %v250, 112
    %v3593 = vpop.permute.xlu0 %3592
    %3594 = vrot.lane.b32.xlu0 %v359, 112
    %v3595 = vpop.permute.xlu0 %3594
    %v3596 = vsel %vm481, %v3593, 0
    %v3598 = vsel %vm481, %v3595, 0
    %3600 = vmatprep.subr.mxu0 0.0
    %3601 = vmatpush1.xpose.msra.mxu0 %v3598
    %3602 = vmatprep.subr.mxu0 0.0
    %3603 = vmatpush1.xpose.msra.mxu0 0.0
    %3604 = vmatprep.subr.mxu0 0.0
    %3605 = vmatpush1.xpose.msra.mxu0 0.0
    %3606 = vmatprep.subr.mxu0 0.0
    %3607 = vmatpush1.xpose.msra.mxu0 0.0
    %3608 = vmatprep.subr.mxu0 0.0
    %3609 = vmatpush1.xpose.msra.mxu0 0.0
    %3610 = vmatprep.subr.mxu0 0.0
    %3611 = vmatpush1.xpose.msra.mxu0 0.0
    %3612 = vmatprep.subr.mxu0 0.0
    %3613 = vmatpush1.xpose.msra.mxu0 0.0
    %3614 = vmatprep.subr.mxu0 0.0
    %3615 = vmatpush1.xpose.msra.mxu0 0.0
    %3616 = vmatprep.subr.mxu0 0.0
    %3617 = vmatpush1.xpose.msra.mxu0 0.0
    %3618 = vmatprep.subr.mxu0 0.0
    %3619 = vmatpush1.xpose.msra.mxu0 0.0
    %3620 = vmatprep.subr.mxu0 0.0
    %3621 = vmatpush1.xpose.msra.mxu0 0.0
    %3622 = vmatprep.subr.mxu0 0.0
    %3623 = vmatpush1.xpose.msra.mxu0 0.0
    %3624 = vmatprep.subr.mxu0 0.0
    %3625 = vmatpush1.xpose.msra.mxu0 0.0
    %3626 = vmatprep.subr.mxu0 0.0
    %3627 = vmatpush1.xpose.msra.mxu0 0.0
    %3628 = vmatprep.subr.mxu0 0.0
    %3629 = vmatpush1.xpose.msra.mxu0 0.0
    %3630 = vmatprep.subr.mxu0 0.0
    %3631 = vmatpush1.xpose.msra.mxu0 0.0
    %3632 = vmatprep.subr.mxu0 0.0
    %3633 = vmatpush1.xpose.msra.mxu0 0.0
    %3634 = vmatprep.subr.mxu0 0.0
    %3635 = vmatpush1.xpose.msra.mxu0 0.0
    %3636 = vmatprep.subr.mxu0 0.0
    %3637 = vmatpush1.xpose.msra.mxu0 0.0
    %3638 = vmatprep.subr.mxu0 0.0
    %3639 = vmatpush1.xpose.msra.mxu0 0.0
    %3640 = vmatprep.subr.mxu0 0.0
    %3641 = vmatpush1.xpose.msra.mxu0 0.0
    %3642 = vmatprep.subr.mxu0 0.0
    %3643 = vmatpush1.xpose.msra.mxu0 0.0
    %3644 = vmatprep.subr.mxu0 0.0
    %3645 = vmatpush1.xpose.msra.mxu0 0.0
    %3646 = vmatprep.subr.mxu0 0.0
    %3647 = vmatpush1.xpose.msra.mxu0 0.0
    %3648 = vmatprep.subr.mxu0 0.0
    %3649 = vmatpush1.xpose.msra.mxu0 0.0
    %3650 = vmatprep.subr.mxu0 0.0
    %3651 = vmatpush1.xpose.msra.mxu0 0.0
    %3652 = vmatprep.subr.mxu0 0.0
    %3653 = vmatpush1.xpose.msra.mxu0 0.0
    %3654 = vmatprep.subr.mxu0 0.0
    %3655 = vmatpush1.xpose.msra.mxu0 0.0
    %3656 = vmatprep.subr.mxu0 0.0
    %3657 = vmatpush1.xpose.msra.mxu0 0.0
    %3658 = vmatprep.subr.mxu0 0.0
    %3659 = vmatpush1.xpose.msra.mxu0 0.0
    %3660 = vmatprep.subr.mxu0 0.0
    %3661 = vmatpush1.xpose.msra.mxu0 0.0
    %3662 = vmatprep.subr.mxu0 0.0
    %3663 = vmatpush1.xpose.msra.mxu0 0.0
    %3664 = vmatprep.mubr.f32.mxu0 0.0
    %3665 = vmatmul.mubr.f32.gmra.mrb[0].mxu0 %v3596
    %v3666 = vpop.f32.mrb[0].mxu0
    %v3667 = vadd.f32 0.0, %v3666
    %v3668 = vpop.f32.mrb[0].mxu0
    %3669 = vdwg.mxu0
    %3670 = vrot.lane.b32.xlu0 %v255, 112
    %v3671 = vpop.permute.xlu0 %3670
    %3672 = vrot.lane.b32.xlu0 %v364, 112
    %v3673 = vpop.permute.xlu0 %3672
    %v3674 = vsel %vm481, %v3671, 0
    %v3676 = vsel %vm481, %v3673, 0
    %3678 = vmatprep.subr.mxu0 0.0
    %3679 = vmatpush1.xpose.msra.mxu0 %v3676
    %3680 = vmatprep.subr.mxu0 0.0
    %3681 = vmatpush1.xpose.msra.mxu0 0.0
    %3682 = vmatprep.subr.mxu0 0.0
    %3683 = vmatpush1.xpose.msra.mxu0 0.0
    %3684 = vmatprep.subr.mxu0 0.0
    %3685 = vmatpush1.xpose.msra.mxu0 0.0
    %3686 = vmatprep.subr.mxu0 0.0
    %3687 = vmatpush1.xpose.msra.mxu0 0.0
    %3688 = vmatprep.subr.mxu0 0.0
    %3689 = vmatpush1.xpose.msra.mxu0 0.0
    %3690 = vmatprep.subr.mxu0 0.0
    %3691 = vmatpush1.xpose.msra.mxu0 0.0
    %3692 = vmatprep.subr.mxu0 0.0
    %3693 = vmatpush1.xpose.msra.mxu0 0.0
    %3694 = vmatprep.subr.mxu0 0.0
    %3695 = vmatpush1.xpose.msra.mxu0 0.0
    %3696 = vmatprep.subr.mxu0 0.0
    %3697 = vmatpush1.xpose.msra.mxu0 0.0
    %3698 = vmatprep.subr.mxu0 0.0
    %3699 = vmatpush1.xpose.msra.mxu0 0.0
    %3700 = vmatprep.subr.mxu0 0.0
    %3701 = vmatpush1.xpose.msra.mxu0 0.0
    %3702 = vmatprep.subr.mxu0 0.0
    %3703 = vmatpush1.xpose.msra.mxu0 0.0
    %3704 = vmatprep.subr.mxu0 0.0
    %3705 = vmatpush1.xpose.msra.mxu0 0.0
    %3706 = vmatprep.subr.mxu0 0.0
    %3707 = vmatpush1.xpose.msra.mxu0 0.0
    %3708 = vmatprep.subr.mxu0 0.0
    %3709 = vmatpush1.xpose.msra.mxu0 0.0
    %3710 = vmatprep.subr.mxu0 0.0
    %3711 = vmatpush1.xpose.msra.mxu0 0.0
    %3712 = vmatprep.subr.mxu0 0.0
    %3713 = vmatpush1.xpose.msra.mxu0 0.0
    %3714 = vmatprep.subr.mxu0 0.0
    %3715 = vmatpush1.xpose.msra.mxu0 0.0
    %3716 = vmatprep.subr.mxu0 0.0
    %3717 = vmatpush1.xpose.msra.mxu0 0.0
    %3718 = vmatprep.subr.mxu0 0.0
    %3719 = vmatpush1.xpose.msra.mxu0 0.0
    %3720 = vmatprep.subr.mxu0 0.0
    %3721 = vmatpush1.xpose.msra.mxu0 0.0
    %3722 = vmatprep.subr.mxu0 0.0
    %3723 = vmatpush1.xpose.msra.mxu0 0.0
    %3724 = vmatprep.subr.mxu0 0.0
    %3725 = vmatpush1.xpose.msra.mxu0 0.0
    %3726 = vmatprep.subr.mxu0 0.0
    %3727 = vmatpush1.xpose.msra.mxu0 0.0
    %3728 = vmatprep.subr.mxu0 0.0
    %3729 = vmatpush1.xpose.msra.mxu0 0.0
    %3730 = vmatprep.subr.mxu0 0.0
    %3731 = vmatpush1.xpose.msra.mxu0 0.0
    %3732 = vmatprep.subr.mxu0 0.0
    %3733 = vmatpush1.xpose.msra.mxu0 0.0
    %3734 = vmatprep.subr.mxu0 0.0
    %3735 = vmatpush1.xpose.msra.mxu0 0.0
    %3736 = vmatprep.subr.mxu0 0.0
    %3737 = vmatpush1.xpose.msra.mxu0 0.0
    %3738 = vmatprep.subr.mxu0 0.0
    %3739 = vmatpush1.xpose.msra.mxu0 0.0
    %3740 = vmatprep.subr.mxu0 0.0
    %3741 = vmatpush1.xpose.msra.mxu0 0.0
    %3742 = vmatprep.mubr.f32.mxu0 0.0
    %3743 = vmatmul.mubr.f32.gmra.mrb[0].mxu0 %v3674
    %v3744 = vpop.f32.mrb[0].mxu0
    %v3745 = vadd.f32 0.0, %v3744
    %v3746 = vpop.f32.mrb[0].mxu0
    %3747 = vdwg.mxu0
    %v3748 = vmul.f32 %v3199, 0.35355338
    %v3749 = vmul.f32 %v3277, 0.35355338
    %v3750 = vmul.f32 %v3355, 0.35355338
    %v3751 = vmul.f32 %v3433, 0.35355338
    %v3752 = vmul.f32 %v3511, 0.35355338
    %v3753 = vmul.f32 %v3589, 0.35355338
    %v3754 = vmul.f32 %v3667, 0.35355338
    %v3755 = vmul.f32 %v3745, 0.35355338
    %v3756 = vsel %vm1099, -4.2949673e+09, %v3748
    %v3757 = vsel %vm1099, -4.2949673e+09, %v3749
    %v3758 = vsel %vm1099, -4.2949673e+09, %v3750
    %v3759 = vsel %vm1099, -4.2949673e+09, %v3751
    %v3760 = vsel %vm1099, -4.2949673e+09, %v3752
    %v3761 = vsel %vm1099, -4.2949673e+09, %v3753
    %v3762 = vsel %vm1099, -4.2949673e+09, %v3754
    %v3763 = vsel %vm1099, -4.2949673e+09, %v3755
    %v3764 = vsel %vm481, %v3756, -inf
    %3765 = vmax.xlane.f32.xlu0 %v3764
    %v3766 = vpop.xlane.xlu0 %3765
    %v3767 = vsel %vm481, %v3757, -inf
    %3768 = vmax.xlane.f32.xlu0 %v3767
    %v3769 = vpop.xlane.xlu0 %3768
    %v3770 = vsel %vm481, %v3758, -inf
    %3771 = vmax.xlane.f32.xlu0 %v3770
    %v3772 = vpop.xlane.xlu0 %3771
    %v3773 = vsel %vm481, %v3759, -inf
    %3774 = vmax.xlane.f32.xlu0 %v3773
    %v3775 = vpop.xlane.xlu0 %3774
    %v3776 = vsel %vm481, %v3760, -inf
    %3777 = vmax.xlane.f32.xlu0 %v3776
    %v3778 = vpop.xlane.xlu0 %3777
    %v3779 = vsel %vm481, %v3761, -inf
    %3780 = vmax.xlane.f32.xlu0 %v3779
    %v3781 = vpop.xlane.xlu0 %3780
    %v3782 = vsel %vm481, %v3762, -inf
    %3783 = vmax.xlane.f32.xlu0 %v3782
    %v3784 = vpop.xlane.xlu0 %3783
    %v3785 = vsel %vm481, %v3763, -inf
    %3786 = vmax.xlane.f32.xlu0 %v3785
    %v3787 = vpop.xlane.xlu0 %3786
    %v3788 = vsub.f32 %v3756, %v3766
    %v3789 = vsub.f32 %v3757, %v3769
    %v3790 = vsub.f32 %v3758, %v3772
    %v3791 = vsub.f32 %v3759, %v3775
    %v3792 = vsub.f32 %v3760, %v3778
    %v3793 = vsub.f32 %v3761, %v3781
    %v3794 = vsub.f32 %v3762, %v3784
    %v3795 = vsub.f32 %v3763, %v3787
    %v3796 = vmul.f32 %v3788, 1.442695
    %v3797 = vpow.pop %v3796
    %v3798 = vmul.f32 %v3789, 1.442695
    %v3799 = vpow.pop %v3798
    %v3800 = vmul.f32 %v3790, 1.442695
    %v3801 = vpow.pop %v3800
    %v3802 = vmul.f32 %v3791, 1.442695
    %v3803 = vpow.pop %v3802
    %v3804 = vmul.f32 %v3792, 1.442695
    %v3805 = vpow.pop %v3804
    %v3806 = vmul.f32 %v3793, 1.442695
    %v3807 = vpow.pop %v3806
    %v3808 = vmul.f32 %v3794, 1.442695
    %v3809 = vpow.pop %v3808
    %v3810 = vmul.f32 %v3795, 1.442695
    %v3811 = vpow.pop %v3810
    %v3812 = vsel %vm481, %v3797, 0.0
    %3813 = vadd.xlane.f32.xlu0 %v3812
    %v3814 = vpop.xlane.xlu0 %3813
    %v3815 = vsel %vm481, %v3799, 0.0
    %3816 = vadd.xlane.f32.xlu0 %v3815
    %v3817 = vpop.xlane.xlu0 %3816
    %v3818 = vsel %vm481, %v3801, 0.0
    %3819 = vadd.xlane.f32.xlu0 %v3818
    %v3820 = vpop.xlane.xlu0 %3819
    %v3821 = vsel %vm481, %v3803, 0.0
    %3822 = vadd.xlane.f32.xlu0 %v3821
    %v3823 = vpop.xlane.xlu0 %3822
    %v3824 = vsel %vm481, %v3805, 0.0
    %3825 = vadd.xlane.f32.xlu0 %v3824
    %v3826 = vpop.xlane.xlu0 %3825
    %v3827 = vsel %vm481, %v3807, 0.0
    %3828 = vadd.xlane.f32.xlu0 %v3827
    %v3829 = vpop.xlane.xlu0 %3828
    %v3830 = vsel %vm481, %v3809, 0.0
    %3831 = vadd.xlane.f32.xlu0 %v3830
    %v3832 = vpop.xlane.xlu0 %3831
    %v3833 = vsel %vm481, %v3811, 0.0
    %3834 = vadd.xlane.f32.xlu0 %v3833
    %v3835 = vpop.xlane.xlu0 %3834
    %v3836 = vrcp.pop %v3814
    %v3837 = vrcp.pop %v3817
    %v3838 = vrcp.pop %v3820
    %v3839 = vrcp.pop %v3823
    %v3840 = vrcp.pop %v3826
    %v3841 = vrcp.pop %v3829
    %v3842 = vrcp.pop %v3832
    %v3843 = vrcp.pop %v3835
    %v3844 = vmul.f32 %v3797, %v3836
    %v3845 = vmul.f32 %v3799, %v3837
    %v3846 = vmul.f32 %v3801, %v3838
    %v3847 = vmul.f32 %v3803, %v3839
    %v3848 = vmul.f32 %v3805, %v3840
    %v3849 = vmul.f32 %v3807, %v3841
    %v3850 = vmul.f32 %v3809, %v3842
    %v3851 = vmul.f32 %v3811, %v3843
    %3852 = vrot.lane.b32.xlu0 %v438, 112
    %v3853 = vpop.permute.xlu0 %3852
    %v3856 = vsel %vm481, %v3844, 0
    %3858 = vmatprep.subr.mxu0 0.0
    %3859 = vmatpush1.msra.mxu0 %v3853
    %3860 = vmatprep.subr.mxu0 0.0
    %3861 = vmatpush1.msra.mxu0 0.0
    %3862 = vmatprep.subr.mxu0 0.0
    %3863 = vmatpush1.msra.mxu0 0.0
    %3864 = vmatprep.subr.mxu0 0.0
    %3865 = vmatpush1.msra.mxu0 0.0
    %3866 = vmatprep.subr.mxu0 0.0
    %3867 = vmatpush1.msra.mxu0 0.0
    %3868 = vmatprep.subr.mxu0 0.0
    %3869 = vmatpush1.msra.mxu0 0.0
    %3870 = vmatprep.subr.mxu0 0.0
    %3871 = vmatpush1.msra.mxu0 0.0
    %3872 = vmatprep.subr.mxu0 0.0
    %3873 = vmatpush1.msra.mxu0 0.0
    %3874 = vmatprep.subr.mxu0 0.0
    %3875 = vmatpush1.msra.mxu0 0.0
    %3876 = vmatprep.subr.mxu0 0.0
    %3877 = vmatpush1.msra.mxu0 0.0
    %3878 = vmatprep.subr.mxu0 0.0
    %3879 = vmatpush1.msra.mxu0 0.0
    %3880 = vmatprep.subr.mxu0 0.0
    %3881 = vmatpush1.msra.mxu0 0.0
    %3882 = vmatprep.subr.mxu0 0.0
    %3883 = vmatpush1.msra.mxu0 0.0
    %3884 = vmatprep.subr.mxu0 0.0
    %3885 = vmatpush1.msra.mxu0 0.0
    %3886 = vmatprep.subr.mxu0 0.0
    %3887 = vmatpush1.msra.mxu0 0.0
    %3888 = vmatprep.subr.mxu0 0.0
    %3889 = vmatpush1.msra.mxu0 0.0
    %3890 = vmatprep.subr.mxu0 0.0
    %3891 = vmatpush1.msra.mxu0 0.0
    %3892 = vmatprep.subr.mxu0 0.0
    %3893 = vmatpush1.msra.mxu0 0.0
    %3894 = vmatprep.subr.mxu0 0.0
    %3895 = vmatpush1.msra.mxu0 0.0
    %3896 = vmatprep.subr.mxu0 0.0
    %3897 = vmatpush1.msra.mxu0 0.0
    %3898 = vmatprep.subr.mxu0 0.0
    %3899 = vmatpush1.msra.mxu0 0.0
    %3900 = vmatprep.subr.mxu0 0.0
    %3901 = vmatpush1.msra.mxu0 0.0
    %3902 = vmatprep.subr.mxu0 0.0
    %3903 = vmatpush1.msra.mxu0 0.0
    %3904 = vmatprep.subr.mxu0 0.0
    %3905 = vmatpush1.msra.mxu0 0.0
    %3906 = vmatprep.subr.mxu0 0.0
    %3907 = vmatpush1.msra.mxu0 0.0
    %3908 = vmatprep.subr.mxu0 0.0
    %3909 = vmatpush1.msra.mxu0 0.0
    %3910 = vmatprep.subr.mxu0 0.0
    %3911 = vmatpush1.msra.mxu0 0.0
    %3912 = vmatprep.subr.mxu0 0.0
    %3913 = vmatpush1.msra.mxu0 0.0
    %3914 = vmatprep.subr.mxu0 0.0
    %3915 = vmatpush1.msra.mxu0 0.0
    %3916 = vmatprep.subr.mxu0 0.0
    %3917 = vmatpush1.msra.mxu0 0.0
    %3918 = vmatprep.subr.mxu0 0.0
    %3919 = vmatpush1.msra.mxu0 0.0
    %3920 = vmatprep.subr.mxu0 0.0
    %3921 = vmatpush1.msra.mxu0 0.0
    %3922 = vmatprep.mubr.f32.mxu0 0.0
    %3923 = vmatmul.mubr.f32.gmra.mrb[0].mxu0 %v3856
    %v3924 = vpop.f32.mrb[0].mxu0
    %v3925 = vadd.f32 0.0, %v3924
    %v3926 = vpop.f32.mrb[0].mxu0
    %3927 = vdwg.mxu0
    %3928 = vrot.lane.b32.xlu0 %v443, 112
    %v3929 = vpop.permute.xlu0 %3928
    %v3932 = vsel %vm481, %v3845, 0
    %3934 = vmatprep.subr.mxu0 0.0
    %3935 = vmatpush1.msra.mxu0 %v3929
    %3936 = vmatprep.subr.mxu0 0.0
    %3937 = vmatpush1.msra.mxu0 0.0
    %3938 = vmatprep.subr.mxu0 0.0
    %3939 = vmatpush1.msra.mxu0 0.0
    %3940 = vmatprep.subr.mxu0 0.0
    %3941 = vmatpush1.msra.mxu0 0.0
    %3942 = vmatprep.subr.mxu0 0.0
    %3943 = vmatpush1.msra.mxu0 0.0
    %3944 = vmatprep.subr.mxu0 0.0
    %3945 = vmatpush1.msra.mxu0 0.0
    %3946 = vmatprep.subr.mxu0 0.0
    %3947 = vmatpush1.msra.mxu0 0.0
    %3948 = vmatprep.subr.mxu0 0.0
    %3949 = vmatpush1.msra.mxu0 0.0
    %3950 = vmatprep.subr.mxu0 0.0
    %3951 = vmatpush1.msra.mxu0 0.0
    %3952 = vmatprep.subr.mxu0 0.0
    %3953 = vmatpush1.msra.mxu0 0.0
    %3954 = vmatprep.subr.mxu0 0.0
    %3955 = vmatpush1.msra.mxu0 0.0
    %3956 = vmatprep.subr.mxu0 0.0
    %3957 = vmatpush1.msra.mxu0 0.0
    %3958 = vmatprep.subr.mxu0 0.0
    %3959 = vmatpush1.msra.mxu0 0.0
    %3960 = vmatprep.subr.mxu0 0.0
    %3961 = vmatpush1.msra.mxu0 0.0
    %3962 = vmatprep.subr.mxu0 0.0
    %3963 = vmatpush1.msra.mxu0 0.0
    %3964 = vmatprep.subr.mxu0 0.0
    %3965 = vmatpush1.msra.mxu0 0.0
    %3966 = vmatprep.subr.mxu0 0.0
    %3967 = vmatpush1.msra.mxu0 0.0
    %3968 = vmatprep.subr.mxu0 0.0
    %3969 = vmatpush1.msra.mxu0 0.0
    %3970 = vmatprep.subr.mxu0 0.0
    %3971 = vmatpush1.msra.mxu0 0.0
    %3972 = vmatprep.subr.mxu0 0.0
    %3973 = vmatpush1.msra.mxu0 0.0
    %3974 = vmatprep.subr.mxu0 0.0
    %3975 = vmatpush1.msra.mxu0 0.0
    %3976 = vmatprep.subr.mxu0 0.0
    %3977 = vmatpush1.msra.mxu0 0.0
    %3978 = vmatprep.subr.mxu0 0.0
    %3979 = vmatpush1.msra.mxu0 0.0
    %3980 = vmatprep.subr.mxu0 0.0
    %3981 = vmatpush1.msra.mxu0 0.0
    %3982 = vmatprep.subr.mxu0 0.0
    %3983 = vmatpush1.msra.mxu0 0.0
    %3984 = vmatprep.subr.mxu0 0.0
    %3985 = vmatpush1.msra.mxu0 0.0
    %3986 = vmatprep.subr.mxu0 0.0
    %3987 = vmatpush1.msra.mxu0 0.0
    %3988 = vmatprep.subr.mxu0 0.0
    %3989 = vmatpush1.msra.mxu0 0.0
    %3990 = vmatprep.subr.mxu0 0.0
    %3991 = vmatpush1.msra.mxu0 0.0
    %3992 = vmatprep.subr.mxu0 0.0
    %3993 = vmatpush1.msra.mxu0 0.0
    %3994 = vmatprep.subr.mxu0 0.0
    %3995 = vmatpush1.msra.mxu0 0.0
    %3996 = vmatprep.subr.mxu0 0.0
    %3997 = vmatpush1.msra.mxu0 0.0
    %3998 = vmatprep.mubr.f32.mxu0 0.0
    %3999 = vmatmul.mubr.f32.gmra.mrb[0].mxu0 %v3932
    %v4000 = vpop.f32.mrb[0].mxu0
    %v4001 = vadd.f32 0.0, %v4000
    %v4002 = vpop.f32.mrb[0].mxu0
    %4003 = vdwg.mxu0
    %4004 = vrot.lane.b32.xlu0 %v448, 112
    %v4005 = vpop.permute.xlu0 %4004
    %v4008 = vsel %vm481, %v3846, 0
    %4010 = vmatprep.subr.mxu0 0.0
    %4011 = vmatpush1.msra.mxu0 %v4005
    %4012 = vmatprep.subr.mxu0 0.0
    %4013 = vmatpush1.msra.mxu0 0.0
    %4014 = vmatprep.subr.mxu0 0.0
    %4015 = vmatpush1.msra.mxu0 0.0
    %4016 = vmatprep.subr.mxu0 0.0
    %4017 = vmatpush1.msra.mxu0 0.0
    %4018 = vmatprep.subr.mxu0 0.0
    %4019 = vmatpush1.msra.mxu0 0.0
    %4020 = vmatprep.subr.mxu0 0.0
    %4021 = vmatpush1.msra.mxu0 0.0
    %4022 = vmatprep.subr.mxu0 0.0
    %4023 = vmatpush1.msra.mxu0 0.0
    %4024 = vmatprep.subr.mxu0 0.0
    %4025 = vmatpush1.msra.mxu0 0.0
    %4026 = vmatprep.subr.mxu0 0.0
    %4027 = vmatpush1.msra.mxu0 0.0
    %4028 = vmatprep.subr.mxu0 0.0
    %4029 = vmatpush1.msra.mxu0 0.0
    %4030 = vmatprep.subr.mxu0 0.0
    %4031 = vmatpush1.msra.mxu0 0.0
    %4032 = vmatprep.subr.mxu0 0.0
    %4033 = vmatpush1.msra.mxu0 0.0
    %4034 = vmatprep.subr.mxu0 0.0
    %4035 = vmatpush1.msra.mxu0 0.0
    %4036 = vmatprep.subr.mxu0 0.0
    %4037 = vmatpush1.msra.mxu0 0.0
    %4038 = vmatprep.subr.mxu0 0.0
    %4039 = vmatpush1.msra.mxu0 0.0
    %4040 = vmatprep.subr.mxu0 0.0
    %4041 = vmatpush1.msra.mxu0 0.0
    %4042 = vmatprep.subr.mxu0 0.0
    %4043 = vmatpush1.msra.mxu0 0.0
    %4044 = vmatprep.subr.mxu0 0.0
    %4045 = vmatpush1.msra.mxu0 0.0
    %4046 = vmatprep.subr.mxu0 0.0
    %4047 = vmatpush1.msra.mxu0 0.0
    %4048 = vmatprep.subr.mxu0 0.0
    %4049 = vmatpush1.msra.mxu0 0.0
    %4050 = vmatprep.subr.mxu0 0.0
    %4051 = vmatpush1.msra.mxu0 0.0
    %4052 = vmatprep.subr.mxu0 0.0
    %4053 = vmatpush1.msra.mxu0 0.0
    %4054 = vmatprep.subr.mxu0 0.0
    %4055 = vmatpush1.msra.mxu0 0.0
    %4056 = vmatprep.subr.mxu0 0.0
    %4057 = vmatpush1.msra.mxu0 0.0
    %4058 = vmatprep.subr.mxu0 0.0
    %4059 = vmatpush1.msra.mxu0 0.0
    %4060 = vmatprep.subr.mxu0 0.0
    %4061 = vmatpush1.msra.mxu0 0.0
    %4062 = vmatprep.subr.mxu0 0.0
    %4063 = vmatpush1.msra.mxu0 0.0
    %4064 = vmatprep.subr.mxu0 0.0
    %4065 = vmatpush1.msra.mxu0 0.0
    %4066 = vmatprep.subr.mxu0 0.0
    %4067 = vmatpush1.msra.mxu0 0.0
    %4068 = vmatprep.subr.mxu0 0.0
    %4069 = vmatpush1.msra.mxu0 0.0
    %4070 = vmatprep.subr.mxu0 0.0
    %4071 = vmatpush1.msra.mxu0 0.0
    %4072 = vmatprep.subr.mxu0 0.0
    %4073 = vmatpush1.msra.mxu0 0.0
    %4074 = vmatprep.mubr.f32.mxu0 0.0
    %4075 = vmatmul.mubr.f32.gmra.mrb[0].mxu0 %v4008
    %v4076 = vpop.f32.mrb[0].mxu0
    %v4077 = vadd.f32 0.0, %v4076
    %v4078 = vpop.f32.mrb[0].mxu0
    %4079 = vdwg.mxu0
    %4080 = vrot.lane.b32.xlu0 %v453, 112
    %v4081 = vpop.permute.xlu0 %4080
    %v4084 = vsel %vm481, %v3847, 0
    %4086 = vmatprep.subr.mxu0 0.0
    %4087 = vmatpush1.msra.mxu0 %v4081
    %4088 = vmatprep.subr.mxu0 0.0
    %4089 = vmatpush1.msra.mxu0 0.0
    %4090 = vmatprep.subr.mxu0 0.0
    %4091 = vmatpush1.msra.mxu0 0.0
    %4092 = vmatprep.subr.mxu0 0.0
    %4093 = vmatpush1.msra.mxu0 0.0
    %4094 = vmatprep.subr.mxu0 0.0
    %4095 = vmatpush1.msra.mxu0 0.0
    %4096 = vmatprep.subr.mxu0 0.0
    %4097 = vmatpush1.msra.mxu0 0.0
    %4098 = vmatprep.subr.mxu0 0.0
    %4099 = vmatpush1.msra.mxu0 0.0
    %4100 = vmatprep.subr.mxu0 0.0
    %4101 = vmatpush1.msra.mxu0 0.0
    %4102 = vmatprep.subr.mxu0 0.0
    %4103 = vmatpush1.msra.mxu0 0.0
    %4104 = vmatprep.subr.mxu0 0.0
    %4105 = vmatpush1.msra.mxu0 0.0
    %4106 = vmatprep.subr.mxu0 0.0
    %4107 = vmatpush1.msra.mxu0 0.0
    %4108 = vmatprep.subr.mxu0 0.0
    %4109 = vmatpush1.msra.mxu0 0.0
    %4110 = vmatprep.subr.mxu0 0.0
    %4111 = vmatpush1.msra.mxu0 0.0
    %4112 = vmatprep.subr.mxu0 0.0
    %4113 = vmatpush1.msra.mxu0 0.0
    %4114 = vmatprep.subr.mxu0 0.0
    %4115 = vmatpush1.msra.mxu0 0.0
    %4116 = vmatprep.subr.mxu0 0.0
    %4117 = vmatpush1.msra.mxu0 0.0
    %4118 = vmatprep.subr.mxu0 0.0
    %4119 = vmatpush1.msra.mxu0 0.0
    %4120 = vmatprep.subr.mxu0 0.0
    %4121 = vmatpush1.msra.mxu0 0.0
    %4122 = vmatprep.subr.mxu0 0.0
    %4123 = vmatpush1.msra.mxu0 0.0
    %4124 = vmatprep.subr.mxu0 0.0
    %4125 = vmatpush1.msra.mxu0 0.0
    %4126 = vmatprep.subr.mxu0 0.0
    %4127 = vmatpush1.msra.mxu0 0.0
    %4128 = vmatprep.subr.mxu0 0.0
    %4129 = vmatpush1.msra.mxu0 0.0
    %4130 = vmatprep.subr.mxu0 0.0
    %4131 = vmatpush1.msra.mxu0 0.0
    %4132 = vmatprep.subr.mxu0 0.0
    %4133 = vmatpush1.msra.mxu0 0.0
    %4134 = vmatprep.subr.mxu0 0.0
    %4135 = vmatpush1.msra.mxu0 0.0
    %4136 = vmatprep.subr.mxu0 0.0
    %4137 = vmatpush1.msra.mxu0 0.0
    %4138 = vmatprep.subr.mxu0 0.0
    %4139 = vmatpush1.msra.mxu0 0.0
    %4140 = vmatprep.subr.mxu0 0.0
    %4141 = vmatpush1.msra.mxu0 0.0
    %4142 = vmatprep.subr.mxu0 0.0
    %4143 = vmatpush1.msra.mxu0 0.0
    %4144 = vmatprep.subr.mxu0 0.0
    %4145 = vmatpush1.msra.mxu0 0.0
    %4146 = vmatprep.subr.mxu0 0.0
    %4147 = vmatpush1.msra.mxu0 0.0
    %4148 = vmatprep.subr.mxu0 0.0
    %4149 = vmatpush1.msra.mxu0 0.0
    %4150 = vmatprep.mubr.f32.mxu0 0.0
    %4151 = vmatmul.mubr.f32.gmra.mrb[0].mxu0 %v4084
    %v4152 = vpop.f32.mrb[0].mxu0
    %v4153 = vadd.f32 0.0, %v4152
    %v4154 = vpop.f32.mrb[0].mxu0
    %4155 = vdwg.mxu0
    %4156 = vrot.lane.b32.xlu0 %v458, 112
    %v4157 = vpop.permute.xlu0 %4156
    %v4160 = vsel %vm481, %v3848, 0
    %4162 = vmatprep.subr.mxu0 0.0
    %4163 = vmatpush1.msra.mxu0 %v4157
    %4164 = vmatprep.subr.mxu0 0.0
    %4165 = vmatpush1.msra.mxu0 0.0
    %4166 = vmatprep.subr.mxu0 0.0
    %4167 = vmatpush1.msra.mxu0 0.0
    %4168 = vmatprep.subr.mxu0 0.0
    %4169 = vmatpush1.msra.mxu0 0.0
    %4170 = vmatprep.subr.mxu0 0.0
    %4171 = vmatpush1.msra.mxu0 0.0
    %4172 = vmatprep.subr.mxu0 0.0
    %4173 = vmatpush1.msra.mxu0 0.0
    %4174 = vmatprep.subr.mxu0 0.0
    %4175 = vmatpush1.msra.mxu0 0.0
    %4176 = vmatprep.subr.mxu0 0.0
    %4177 = vmatpush1.msra.mxu0 0.0
    %4178 = vmatprep.subr.mxu0 0.0
    %4179 = vmatpush1.msra.mxu0 0.0
    %4180 = vmatprep.subr.mxu0 0.0
    %4181 = vmatpush1.msra.mxu0 0.0
    %4182 = vmatprep.subr.mxu0 0.0
    %4183 = vmatpush1.msra.mxu0 0.0
    %4184 = vmatprep.subr.mxu0 0.0
    %4185 = vmatpush1.msra.mxu0 0.0
    %4186 = vmatprep.subr.mxu0 0.0
    %4187 = vmatpush1.msra.mxu0 0.0
    %4188 = vmatprep.subr.mxu0 0.0
    %4189 = vmatpush1.msra.mxu0 0.0
    %4190 = vmatprep.subr.mxu0 0.0
    %4191 = vmatpush1.msra.mxu0 0.0
    %4192 = vmatprep.subr.mxu0 0.0
    %4193 = vmatpush1.msra.mxu0 0.0
    %4194 = vmatprep.subr.mxu0 0.0
    %4195 = vmatpush1.msra.mxu0 0.0
    %4196 = vmatprep.subr.mxu0 0.0
    %4197 = vmatpush1.msra.mxu0 0.0
    %4198 = vmatprep.subr.mxu0 0.0
    %4199 = vmatpush1.msra.mxu0 0.0
    %4200 = vmatprep.subr.mxu0 0.0
    %4201 = vmatpush1.msra.mxu0 0.0
    %4202 = vmatprep.subr.mxu0 0.0
    %4203 = vmatpush1.msra.mxu0 0.0
    %4204 = vmatprep.subr.mxu0 0.0
    %4205 = vmatpush1.msra.mxu0 0.0
    %4206 = vmatprep.subr.mxu0 0.0
    %4207 = vmatpush1.msra.mxu0 0.0
    %4208 = vmatprep.subr.mxu0 0.0
    %4209 = vmatpush1.msra.mxu0 0.0
    %4210 = vmatprep.subr.mxu0 0.0
    %4211 = vmatpush1.msra.mxu0 0.0
    %4212 = vmatprep.subr.mxu0 0.0
    %4213 = vmatpush1.msra.mxu0 0.0
    %4214 = vmatprep.subr.mxu0 0.0
    %4215 = vmatpush1.msra.mxu0 0.0
    %4216 = vmatprep.subr.mxu0 0.0
    %4217 = vmatpush1.msra.mxu0 0.0
    %4218 = vmatprep.subr.mxu0 0.0
    %4219 = vmatpush1.msra.mxu0 0.0
    %4220 = vmatprep.subr.mxu0 0.0
    %4221 = vmatpush1.msra.mxu0 0.0
    %4222 = vmatprep.subr.mxu0 0.0
    %4223 = vmatpush1.msra.mxu0 0.0
    %4224 = vmatprep.subr.mxu0 0.0
    %4225 = vmatpush1.msra.mxu0 0.0
    %4226 = vmatprep.mubr.f32.mxu0 0.0
    %4227 = vmatmul.mubr.f32.gmra.mrb[0].mxu0 %v4160
    %v4228 = vpop.f32.mrb[0].mxu0
    %v4229 = vadd.f32 0.0, %v4228
    %v4230 = vpop.f32.mrb[0].mxu0
    %4231 = vdwg.mxu0
    %4232 = vrot.lane.b32.xlu0 %v463, 112
    %v4233 = vpop.permute.xlu0 %4232
    %v4236 = vsel %vm481, %v3849, 0
    %4238 = vmatprep.subr.mxu0 0.0
    %4239 = vmatpush1.msra.mxu0 %v4233
    %4240 = vmatprep.subr.mxu0 0.0
    %4241 = vmatpush1.msra.mxu0 0.0
    %4242 = vmatprep.subr.mxu0 0.0
    %4243 = vmatpush1.msra.mxu0 0.0
    %4244 = vmatprep.subr.mxu0 0.0
    %4245 = vmatpush1.msra.mxu0 0.0
    %4246 = vmatprep.subr.mxu0 0.0
    %4247 = vmatpush1.msra.mxu0 0.0
    %4248 = vmatprep.subr.mxu0 0.0
    %4249 = vmatpush1.msra.mxu0 0.0
    %4250 = vmatprep.subr.mxu0 0.0
    %4251 = vmatpush1.msra.mxu0 0.0
    %4252 = vmatprep.subr.mxu0 0.0
    %4253 = vmatpush1.msra.mxu0 0.0
    %4254 = vmatprep.subr.mxu0 0.0
    %4255 = vmatpush1.msra.mxu0 0.0
    %4256 = vmatprep.subr.mxu0 0.0
    %4257 = vmatpush1.msra.mxu0 0.0
    %4258 = vmatprep.subr.mxu0 0.0
    %4259 = vmatpush1.msra.mxu0 0.0
    %4260 = vmatprep.subr.mxu0 0.0
    %4261 = vmatpush1.msra.mxu0 0.0
    %4262 = vmatprep.subr.mxu0 0.0
    %4263 = vmatpush1.msra.mxu0 0.0
    %4264 = vmatprep.subr.mxu0 0.0
    %4265 = vmatpush1.msra.mxu0 0.0
    %4266 = vmatprep.subr.mxu0 0.0
    %4267 = vmatpush1.msra.mxu0 0.0
    %4268 = vmatprep.subr.mxu0 0.0
    %4269 = vmatpush1.msra.mxu0 0.0
    %4270 = vmatprep.subr.mxu0 0.0
    %4271 = vmatpush1.msra.mxu0 0.0
    %4272 = vmatprep.subr.mxu0 0.0
    %4273 = vmatpush1.msra.mxu0 0.0
    %4274 = vmatprep.subr.mxu0 0.0
    %4275 = vmatpush1.msra.mxu0 0.0
    %4276 = vmatprep.subr.mxu0 0.0
    %4277 = vmatpush1.msra.mxu0 0.0
    %4278 = vmatprep.subr.mxu0 0.0
    %4279 = vmatpush1.msra.mxu0 0.0
    %4280 = vmatprep.subr.mxu0 0.0
    %4281 = vmatpush1.msra.mxu0 0.0
    %4282 = vmatprep.subr.mxu0 0.0
    %4283 = vmatpush1.msra.mxu0 0.0
    %4284 = vmatprep.subr.mxu0 0.0
    %4285 = vmatpush1.msra.mxu0 0.0
    %4286 = vmatprep.subr.mxu0 0.0
    %4287 = vmatpush1.msra.mxu0 0.0
    %4288 = vmatprep.subr.mxu0 0.0
    %4289 = vmatpush1.msra.mxu0 0.0
    %4290 = vmatprep.subr.mxu0 0.0
    %4291 = vmatpush1.msra.mxu0 0.0
    %4292 = vmatprep.subr.mxu0 0.0
    %4293 = vmatpush1.msra.mxu0 0.0
    %4294 = vmatprep.subr.mxu0 0.0
    %4295 = vmatpush1.msra.mxu0 0.0
    %4296 = vmatprep.subr.mxu0 0.0
    %4297 = vmatpush1.msra.mxu0 0.0
    %4298 = vmatprep.subr.mxu0 0.0
    %4299 = vmatpush1.msra.mxu0 0.0
    %4300 = vmatprep.subr.mxu0 0.0
    %4301 = vmatpush1.msra.mxu0 0.0
    %4302 = vmatprep.mubr.f32.mxu0 0.0
    %4303 = vmatmul.mubr.f32.gmra.mrb[0].mxu0 %v4236
    %v4304 = vpop.f32.mrb[0].mxu0
    %v4305 = vadd.f32 0.0, %v4304
    %v4306 = vpop.f32.mrb[0].mxu0
    %4307 = vdwg.mxu0
    %4308 = vrot.lane.b32.xlu0 %v468, 112
    %v4309 = vpop.permute.xlu0 %4308
    %v4312 = vsel %vm481, %v3850, 0
    %4314 = vmatprep.subr.mxu0 0.0
    %4315 = vmatpush1.msra.mxu0 %v4309
    %4316 = vmatprep.subr.mxu0 0.0
    %4317 = vmatpush1.msra.mxu0 0.0
    %4318 = vmatprep.subr.mxu0 0.0
    %4319 = vmatpush1.msra.mxu0 0.0
    %4320 = vmatprep.subr.mxu0 0.0
    %4321 = vmatpush1.msra.mxu0 0.0
    %4322 = vmatprep.subr.mxu0 0.0
    %4323 = vmatpush1.msra.mxu0 0.0
    %4324 = vmatprep.subr.mxu0 0.0
    %4325 = vmatpush1.msra.mxu0 0.0
    %4326 = vmatprep.subr.mxu0 0.0
    %4327 = vmatpush1.msra.mxu0 0.0
    %4328 = vmatprep.subr.mxu0 0.0
    %4329 = vmatpush1.msra.mxu0 0.0
    %4330 = vmatprep.subr.mxu0 0.0
    %4331 = vmatpush1.msra.mxu0 0.0
    %4332 = vmatprep.subr.mxu0 0.0
    %4333 = vmatpush1.msra.mxu0 0.0
    %4334 = vmatprep.subr.mxu0 0.0
    %4335 = vmatpush1.msra.mxu0 0.0
    %4336 = vmatprep.subr.mxu0 0.0
    %4337 = vmatpush1.msra.mxu0 0.0
    %4338 = vmatprep.subr.mxu0 0.0
    %4339 = vmatpush1.msra.mxu0 0.0
    %4340 = vmatprep.subr.mxu0 0.0
    %4341 = vmatpush1.msra.mxu0 0.0
    %4342 = vmatprep.subr.mxu0 0.0
    %4343 = vmatpush1.msra.mxu0 0.0
    %4344 = vmatprep.subr.mxu0 0.0
    %4345 = vmatpush1.msra.mxu0 0.0
    %4346 = vmatprep.subr.mxu0 0.0
    %4347 = vmatpush1.msra.mxu0 0.0
    %4348 = vmatprep.subr.mxu0 0.0
    %4349 = vmatpush1.msra.mxu0 0.0
    %4350 = vmatprep.subr.mxu0 0.0
    %4351 = vmatpush1.msra.mxu0 0.0
    %4352 = vmatprep.subr.mxu0 0.0
    %4353 = vmatpush1.msra.mxu0 0.0
    %4354 = vmatprep.subr.mxu0 0.0
    %4355 = vmatpush1.msra.mxu0 0.0
    %4356 = vmatprep.subr.mxu0 0.0
    %4357 = vmatpush1.msra.mxu0 0.0
    %4358 = vmatprep.subr.mxu0 0.0
    %4359 = vmatpush1.msra.mxu0 0.0
    %4360 = vmatprep.subr.mxu0 0.0
    %4361 = vmatpush1.msra.mxu0 0.0
    %4362 = vmatprep.subr.mxu0 0.0
    %4363 = vmatpush1.msra.mxu0 0.0
    %4364 = vmatprep.subr.mxu0 0.0
    %4365 = vmatpush1.msra.mxu0 0.0
    %4366 = vmatprep.subr.mxu0 0.0
    %4367 = vmatpush1.msra.mxu0 0.0
    %4368 = vmatprep.subr.mxu0 0.0
    %4369 = vmatpush1.msra.mxu0 0.0
    %4370 = vmatprep.subr.mxu0 0.0
    %4371 = vmatpush1.msra.mxu0 0.0
    %4372 = vmatprep.subr.mxu0 0.0
    %4373 = vmatpush1.msra.mxu0 0.0
    %4374 = vmatprep.subr.mxu0 0.0
    %4375 = vmatpush1.msra.mxu0 0.0
    %4376 = vmatprep.subr.mxu0 0.0
    %4377 = vmatpush1.msra.mxu0 0.0
    %4378 = vmatprep.mubr.f32.mxu0 0.0
    %4379 = vmatmul.mubr.f32.gmra.mrb[0].mxu0 %v4312
    %v4380 = vpop.f32.mrb[0].mxu0
    %v4381 = vadd.f32 0.0, %v4380
    %v4382 = vpop.f32.mrb[0].mxu0
    %4383 = vdwg.mxu0
    %4384 = vrot.lane.b32.xlu0 %v473, 112
    %v4385 = vpop.permute.xlu0 %4384
    %v4388 = vsel %vm481, %v3851, 0
    %4390 = vmatprep.subr.mxu0 0.0
    %4391 = vmatpush1.msra.mxu0 %v4385
    %4392 = vmatprep.subr.mxu0 0.0
    %4393 = vmatpush1.msra.mxu0 0.0
    %4394 = vmatprep.subr.mxu0 0.0
    %4395 = vmatpush1.msra.mxu0 0.0
    %4396 = vmatprep.subr.mxu0 0.0
    %4397 = vmatpush1.msra.mxu0 0.0
    %4398 = vmatprep.subr.mxu0 0.0
    %4399 = vmatpush1.msra.mxu0 0.0
    %4400 = vmatprep.subr.mxu0 0.0
    %4401 = vmatpush1.msra.mxu0 0.0
    %4402 = vmatprep.subr.mxu0 0.0
    %4403 = vmatpush1.msra.mxu0 0.0
    %4404 = vmatprep.subr.mxu0 0.0
    %4405 = vmatpush1.msra.mxu0 0.0
    %4406 = vmatprep.subr.mxu0 0.0
    %4407 = vmatpush1.msra.mxu0 0.0
    %4408 = vmatprep.subr.mxu0 0.0
    %4409 = vmatpush1.msra.mxu0 0.0
    %4410 = vmatprep.subr.mxu0 0.0
    %4411 = vmatpush1.msra.mxu0 0.0
    %4412 = vmatprep.subr.mxu0 0.0
    %4413 = vmatpush1.msra.mxu0 0.0
    %4414 = vmatprep.subr.mxu0 0.0
    %4415 = vmatpush1.msra.mxu0 0.0
    %4416 = vmatprep.subr.mxu0 0.0
    %4417 = vmatpush1.msra.mxu0 0.0
    %4418 = vmatprep.subr.mxu0 0.0
    %4419 = vmatpush1.msra.mxu0 0.0
    %4420 = vmatprep.subr.mxu0 0.0
    %4421 = vmatpush1.msra.mxu0 0.0
    %4422 = vmatprep.subr.mxu0 0.0
    %4423 = vmatpush1.msra.mxu0 0.0
    %4424 = vmatprep.subr.mxu0 0.0
    %4425 = vmatpush1.msra.mxu0 0.0
    %4426 = vmatprep.subr.mxu0 0.0
    %4427 = vmatpush1.msra.mxu0 0.0
    %4428 = vmatprep.subr.mxu0 0.0
    %4429 = vmatpush1.msra.mxu0 0.0
    %4430 = vmatprep.subr.mxu0 0.0
    %4431 = vmatpush1.msra.mxu0 0.0
    %4432 = vmatprep.subr.mxu0 0.0
    %4433 = vmatpush1.msra.mxu0 0.0
    %4434 = vmatprep.subr.mxu0 0.0
    %4435 = vmatpush1.msra.mxu0 0.0
    %4436 = vmatprep.subr.mxu0 0.0
    %4437 = vmatpush1.msra.mxu0 0.0
    %4438 = vmatprep.subr.mxu0 0.0
    %4439 = vmatpush1.msra.mxu0 0.0
    %4440 = vmatprep.subr.mxu0 0.0
    %4441 = vmatpush1.msra.mxu0 0.0
    %4442 = vmatprep.subr.mxu0 0.0
    %4443 = vmatpush1.msra.mxu0 0.0
    %4444 = vmatprep.subr.mxu0 0.0
    %4445 = vmatpush1.msra.mxu0 0.0
    %4446 = vmatprep.subr.mxu0 0.0
    %4447 = vmatpush1.msra.mxu0 0.0
    %4448 = vmatprep.subr.mxu0 0.0
    %4449 = vmatpush1.msra.mxu0 0.0
    %4450 = vmatprep.subr.mxu0 0.0
    %4451 = vmatpush1.msra.mxu0 0.0
    %4452 = vmatprep.subr.mxu0 0.0
    %4453 = vmatpush1.msra.mxu0 0.0
    %4454 = vmatprep.mubr.f32.mxu0 0.0
    %4455 = vmatmul.mubr.f32.gmra.mrb[0].mxu0 %v4388
    %v4456 = vpop.f32.mrb[0].mxu0
    %v4457 = vadd.f32 0.0, %v4456
    %v4458 = vpop.f32.mrb[0].mxu0
    %4459 = vdwg.mxu0
    %4460 = vrot.lane.b32.xlu0 %v220, 104
    %v4461 = vpop.permute.xlu0 %4460
    %4462 = vrot.lane.b32.xlu0 %v329, 104
    %v4463 = vpop.permute.xlu0 %4462
    %v4464 = vsel %vm481, %v4461, 0
    %v4466 = vsel %vm481, %v4463, 0
    %4468 = vmatprep.subr.mxu0 0.0
    %4469 = vmatpush1.xpose.msra.mxu0 %v4466
    %4470 = vmatprep.subr.mxu0 0.0
    %4471 = vmatpush1.xpose.msra.mxu0 0.0
    %4472 = vmatprep.subr.mxu0 0.0
    %4473 = vmatpush1.xpose.msra.mxu0 0.0
    %4474 = vmatprep.subr.mxu0 0.0
    %4475 = vmatpush1.xpose.msra.mxu0 0.0
    %4476 = vmatprep.subr.mxu0 0.0
    %4477 = vmatpush1.xpose.msra.mxu0 0.0
    %4478 = vmatprep.subr.mxu0 0.0
    %4479 = vmatpush1.xpose.msra.mxu0 0.0
    %4480 = vmatprep.subr.mxu0 0.0
    %4481 = vmatpush1.xpose.msra.mxu0 0.0
    %4482 = vmatprep.subr.mxu0 0.0
    %4483 = vmatpush1.xpose.msra.mxu0 0.0
    %4484 = vmatprep.subr.mxu0 0.0
    %4485 = vmatpush1.xpose.msra.mxu0 0.0
    %4486 = vmatprep.subr.mxu0 0.0
    %4487 = vmatpush1.xpose.msra.mxu0 0.0
    %4488 = vmatprep.subr.mxu0 0.0
    %4489 = vmatpush1.xpose.msra.mxu0 0.0
    %4490 = vmatprep.subr.mxu0 0.0
    %4491 = vmatpush1.xpose.msra.mxu0 0.0
    %4492 = vmatprep.subr.mxu0 0.0
    %4493 = vmatpush1.xpose.msra.mxu0 0.0
    %4494 = vmatprep.subr.mxu0 0.0
    %4495 = vmatpush1.xpose.msra.mxu0 0.0
    %4496 = vmatprep.subr.mxu0 0.0
    %4497 = vmatpush1.xpose.msra.mxu0 0.0
    %4498 = vmatprep.subr.mxu0 0.0
    %4499 = vmatpush1.xpose.msra.mxu0 0.0
    %4500 = vmatprep.subr.mxu0 0.0
    %4501 = vmatpush1.xpose.msra.mxu0 0.0
    %4502 = vmatprep.subr.mxu0 0.0
    %4503 = vmatpush1.xpose.msra.mxu0 0.0
    %4504 = vmatprep.subr.mxu0 0.0
    %4505 = vmatpush1.xpose.msra.mxu0 0.0
    %4506 = vmatprep.subr.mxu0 0.0
    %4507 = vmatpush1.xpose.msra.mxu0 0.0
    %4508 = vmatprep.subr.mxu0 0.0
    %4509 = vmatpush1.xpose.msra.mxu0 0.0
    %4510 = vmatprep.subr.mxu0 0.0
    %4511 = vmatpush1.xpose.msra.mxu0 0.0
    %4512 = vmatprep.subr.mxu0 0.0
    %4513 = vmatpush1.xpose.msra.mxu0 0.0
    %4514 = vmatprep.subr.mxu0 0.0
    %4515 = vmatpush1.xpose.msra.mxu0 0.0
    %4516 = vmatprep.subr.mxu0 0.0
    %4517 = vmatpush1.xpose.msra.mxu0 0.0
    %4518 = vmatprep.subr.mxu0 0.0
    %4519 = vmatpush1.xpose.msra.mxu0 0.0
    %4520 = vmatprep.subr.mxu0 0.0
    %4521 = vmatpush1.xpose.msra.mxu0 0.0
    %4522 = vmatprep.subr.mxu0 0.0
    %4523 = vmatpush1.xpose.msra.mxu0 0.0
    %4524 = vmatprep.subr.mxu0 0.0
    %4525 = vmatpush1.xpose.msra.mxu0 0.0
    %4526 = vmatprep.subr.mxu0 0.0
    %4527 = vmatpush1.xpose.msra.mxu0 0.0
    %4528 = vmatprep.subr.mxu0 0.0
    %4529 = vmatpush1.xpose.msra.mxu0 0.0
    %4530 = vmatprep.subr.mxu0 0.0
    %4531 = vmatpush1.xpose.msra.mxu0 0.0
    %4532 = vmatprep.mubr.f32.mxu0 0.0
    %4533 = vmatmul.mubr.f32.gmra.mrb[0].mxu0 %v4464
    %v4534 = vpop.f32.mrb[0].mxu0
    %v4535 = vadd.f32 0.0, %v4534
    %v4536 = vpop.f32.mrb[0].mxu0
    %4537 = vdwg.mxu0
    %4538 = vrot.lane.b32.xlu0 %v225, 104
    %v4539 = vpop.permute.xlu0 %4538
    %4540 = vrot.lane.b32.xlu0 %v334, 104
    %v4541 = vpop.permute.xlu0 %4540
    %v4542 = vsel %vm481, %v4539, 0
    %v4544 = vsel %vm481, %v4541, 0
    %4546 = vmatprep.subr.mxu0 0.0
    %4547 = vmatpush1.xpose.msra.mxu0 %v4544
    %4548 = vmatprep.subr.mxu0 0.0
    %4549 = vmatpush1.xpose.msra.mxu0 0.0
    %4550 = vmatprep.subr.mxu0 0.0
    %4551 = vmatpush1.xpose.msra.mxu0 0.0
    %4552 = vmatprep.subr.mxu0 0.0
    %4553 = vmatpush1.xpose.msra.mxu0 0.0
    %4554 = vmatprep.subr.mxu0 0.0
    %4555 = vmatpush1.xpose.msra.mxu0 0.0
    %4556 = vmatprep.subr.mxu0 0.0
    %4557 = vmatpush1.xpose.msra.mxu0 0.0
    %4558 = vmatprep.subr.mxu0 0.0
    %4559 = vmatpush1.xpose.msra.mxu0 0.0
    %4560 = vmatprep.subr.mxu0 0.0
    %4561 = vmatpush1.xpose.msra.mxu0 0.0
    %4562 = vmatprep.subr.mxu0 0.0
    %4563 = vmatpush1.xpose.msra.mxu0 0.0
    %4564 = vmatprep.subr.mxu0 0.0
    %4565 = vmatpush1.xpose.msra.mxu0 0.0
    %4566 = vmatprep.subr.mxu0 0.0
    %4567 = vmatpush1.xpose.msra.mxu0 0.0
    %4568 = vmatprep.subr.mxu0 0.0
    %4569 = vmatpush1.xpose.msra.mxu0 0.0
    %4570 = vmatprep.subr.mxu0 0.0
    %4571 = vmatpush1.xpose.msra.mxu0 0.0
    %4572 = vmatprep.subr.mxu0 0.0
    %4573 = vmatpush1.xpose.msra.mxu0 0.0
    %4574 = vmatprep.subr.mxu0 0.0
    %4575 = vmatpush1.xpose.msra.mxu0 0.0
    %4576 = vmatprep.subr.mxu0 0.0
    %4577 = vmatpush1.xpose.msra.mxu0 0.0
    %4578 = vmatprep.subr.mxu0 0.0
    %4579 = vmatpush1.xpose.msra.mxu0 0.0
    %4580 = vmatprep.subr.mxu0 0.0
    %4581 = vmatpush1.xpose.msra.mxu0 0.0
    %4582 = vmatprep.subr.mxu0 0.0
    %4583 = vmatpush1.xpose.msra.mxu0 0.0
    %4584 = vmatprep.subr.mxu0 0.0
    %4585 = vmatpush1.xpose.msra.mxu0 0.0
    %4586 = vmatprep.subr.mxu0 0.0
    %4587 = vmatpush1.xpose.msra.mxu0 0.0
    %4588 = vmatprep.subr.mxu0 0.0
    %4589 = vmatpush1.xpose.msra.mxu0 0.0
    %4590 = vmatprep.subr.mxu0 0.0
    %4591 = vmatpush1.xpose.msra.mxu0 0.0
    %4592 = vmatprep.subr.mxu0 0.0
    %4593 = vmatpush1.xpose.msra.mxu0 0.0
    %4594 = vmatprep.subr.mxu0 0.0
    %4595 = vmatpush1.xpose.msra.mxu0 0.0
    %4596 = vmatprep.subr.mxu0 0.0
    %4597 = vmatpush1.xpose.msra.mxu0 0.0
    %4598 = vmatprep.subr.mxu0 0.0
    %4599 = vmatpush1.xpose.msra.mxu0 0.0
    %4600 = vmatprep.subr.mxu0 0.0
    %4601 = vmatpush1.xpose.msra.mxu0 0.0
    %4602 = vmatprep.subr.mxu0 0.0
    %4603 = vmatpush1.xpose.msra.mxu0 0.0
    %4604 = vmatprep.subr.mxu0 0.0
    %4605 = vmatpush1.xpose.msra.mxu0 0.0
    %4606 = vmatprep.subr.mxu0 0.0
    %4607 = vmatpush1.xpose.msra.mxu0 0.0
    %4608 = vmatprep.subr.mxu0 0.0
    %4609 = vmatpush1.xpose.msra.mxu0 0.0
    %4610 = vmatprep.mubr.f32.mxu0 0.0
    %4611 = vmatmul.mubr.f32.gmra.mrb[0].mxu0 %v4542
    %v4612 = vpop.f32.mrb[0].mxu0
    %v4613 = vadd.f32 0.0, %v4612
    %v4614 = vpop.f32.mrb[0].mxu0
    %4615 = vdwg.mxu0
    %4616 = vrot.lane.b32.xlu0 %v230, 104
    %v4617 = vpop.permute.xlu0 %4616
    %4618 = vrot.lane.b32.xlu0 %v339, 104
    %v4619 = vpop.permute.xlu0 %4618
    %v4620 = vsel %vm481, %v4617, 0
    %v4622 = vsel %vm481, %v4619, 0
    %4624 = vmatprep.subr.mxu0 0.0
    %4625 = vmatpush1.xpose.msra.mxu0 %v4622
    %4626 = vmatprep.subr.mxu0 0.0
    %4627 = vmatpush1.xpose.msra.mxu0 0.0
    %4628 = vmatprep.subr.mxu0 0.0
    %4629 = vmatpush1.xpose.msra.mxu0 0.0
    %4630 = vmatprep.subr.mxu0 0.0
    %4631 = vmatpush1.xpose.msra.mxu0 0.0
    %4632 = vmatprep.subr.mxu0 0.0
    %4633 = vmatpush1.xpose.msra.mxu0 0.0
    %4634 = vmatprep.subr.mxu0 0.0
    %4635 = vmatpush1.xpose.msra.mxu0 0.0
    %4636 = vmatprep.subr.mxu0 0.0
    %4637 = vmatpush1.xpose.msra.mxu0 0.0
    %4638 = vmatprep.subr.mxu0 0.0
    %4639 = vmatpush1.xpose.msra.mxu0 0.0
    %4640 = vmatprep.subr.mxu0 0.0
    %4641 = vmatpush1.xpose.msra.mxu0 0.0
    %4642 = vmatprep.subr.mxu0 0.0
    %4643 = vmatpush1.xpose.msra.mxu0 0.0
    %4644 = vmatprep.subr.mxu0 0.0
    %4645 = vmatpush1.xpose.msra.mxu0 0.0
    %4646 = vmatprep.subr.mxu0 0.0
    %4647 = vmatpush1.xpose.msra.mxu0 0.0
    %4648 = vmatprep.subr.mxu0 0.0
    %4649 = vmatpush1.xpose.msra.mxu0 0.0
    %4650 = vmatprep.subr.mxu0 0.0
    %4651 = vmatpush1.xpose.msra.mxu0 0.0
    %4652 = vmatprep.subr.mxu0 0.0
    %4653 = vmatpush1.xpose.msra.mxu0 0.0
    %4654 = vmatprep.subr.mxu0 0.0
    %4655 = vmatpush1.xpose.msra.mxu0 0.0
    %4656 = vmatprep.subr.mxu0 0.0
    %4657 = vmatpush1.xpose.msra.mxu0 0.0
    %4658 = vmatprep.subr.mxu0 0.0
    %4659 = vmatpush1.xpose.msra.mxu0 0.0
    %4660 = vmatprep.subr.mxu0 0.0
    %4661 = vmatpush1.xpose.msra.mxu0 0.0
    %4662 = vmatprep.subr.mxu0 0.0
    %4663 = vmatpush1.xpose.msra.mxu0 0.0
    %4664 = vmatprep.subr.mxu0 0.0
    %4665 = vmatpush1.xpose.msra.mxu0 0.0
    %4666 = vmatprep.subr.mxu0 0.0
    %4667 = vmatpush1.xpose.msra.mxu0 0.0
    %4668 = vmatprep.subr.mxu0 0.0
    %4669 = vmatpush1.xpose.msra.mxu0 0.0
    %4670 = vmatprep.subr.mxu0 0.0
    %4671 = vmatpush1.xpose.msra.mxu0 0.0
    %4672 = vmatprep.subr.mxu0 0.0
    %4673 = vmatpush1.xpose.msra.mxu0 0.0
    %4674 = vmatprep.subr.mxu0 0.0
    %4675 = vmatpush1.xpose.msra.mxu0 0.0
    %4676 = vmatprep.subr.mxu0 0.0
    %4677 = vmatpush1.xpose.msra.mxu0 0.0
    %4678 = vmatprep.subr.mxu0 0.0
    %4679 = vmatpush1.xpose.msra.mxu0 0.0
    %4680 = vmatprep.subr.mxu0 0.0
    %4681 = vmatpush1.xpose.msra.mxu0 0.0
    %4682 = vmatprep.subr.mxu0 0.0
    %4683 = vmatpush1.xpose.msra.mxu0 0.0
    %4684 = vmatprep.subr.mxu0 0.0
    %4685 = vmatpush1.xpose.msra.mxu0 0.0
    %4686 = vmatprep.subr.mxu0 0.0
    %4687 = vmatpush1.xpose.msra.mxu0 0.0
    %4688 = vmatprep.mubr.f32.mxu0 0.0
    %4689 = vmatmul.mubr.f32.gmra.mrb[0].mxu0 %v4620
    %v4690 = vpop.f32.mrb[0].mxu0
    %v4691 = vadd.f32 0.0, %v4690
    %v4692 = vpop.f32.mrb[0].mxu0
    %4693 = vdwg.mxu0
    %4694 = vrot.lane.b32.xlu0 %v235, 104
    %v4695 = vpop.permute.xlu0 %4694
    %4696 = vrot.lane.b32.xlu0 %v344, 104
    %v4697 = vpop.permute.xlu0 %4696
    %v4698 = vsel %vm481, %v4695, 0
    %v4700 = vsel %vm481, %v4697, 0
    %4702 = vmatprep.subr.mxu0 0.0
    %4703 = vmatpush1.xpose.msra.mxu0 %v4700
    %4704 = vmatprep.subr.mxu0 0.0
    %4705 = vmatpush1.xpose.msra.mxu0 0.0
    %4706 = vmatprep.subr.mxu0 0.0
    %4707 = vmatpush1.xpose.msra.mxu0 0.0
    %4708 = vmatprep.subr.mxu0 0.0
    %4709 = vmatpush1.xpose.msra.mxu0 0.0
    %4710 = vmatprep.subr.mxu0 0.0
    %4711 = vmatpush1.xpose.msra.mxu0 0.0
    %4712 = vmatprep.subr.mxu0 0.0
    %4713 = vmatpush1.xpose.msra.mxu0 0.0
    %4714 = vmatprep.subr.mxu0 0.0
    %4715 = vmatpush1.xpose.msra.mxu0 0.0
    %4716 = vmatprep.subr.mxu0 0.0
    %4717 = vmatpush1.xpose.msra.mxu0 0.0
    %4718 = vmatprep.subr.mxu0 0.0
    %4719 = vmatpush1.xpose.msra.mxu0 0.0
    %4720 = vmatprep.subr.mxu0 0.0
    %4721 = vmatpush1.xpose.msra.mxu0 0.0
    %4722 = vmatprep.subr.mxu0 0.0
    %4723 = vmatpush1.xpose.msra.mxu0 0.0
    %4724 = vmatprep.subr.mxu0 0.0
    %4725 = vmatpush1.xpose.msra.mxu0 0.0
    %4726 = vmatprep.subr.mxu0 0.0
    %4727 = vmatpush1.xpose.msra.mxu0 0.0
    %4728 = vmatprep.subr.mxu0 0.0
    %4729 = vmatpush1.xpose.msra.mxu0 0.0
    %4730 = vmatprep.subr.mxu0 0.0
    %4731 = vmatpush1.xpose.msra.mxu0 0.0
    %4732 = vmatprep.subr.mxu0 0.0
    %4733 = vmatpush1.xpose.msra.mxu0 0.0
    %4734 = vmatprep.subr.mxu0 0.0
    %4735 = vmatpush1.xpose.msra.mxu0 0.0
    %4736 = vmatprep.subr.mxu0 0.0
    %4737 = vmatpush1.xpose.msra.mxu0 0.0
    %4738 = vmatprep.subr.mxu0 0.0
    %4739 = vmatpush1.xpose.msra.mxu0 0.0
    %4740 = vmatprep.subr.mxu0 0.0
    %4741 = vmatpush1.xpose.msra.mxu0 0.0
    %4742 = vmatprep.subr.mxu0 0.0
    %4743 = vmatpush1.xpose.msra.mxu0 0.0
    %4744 = vmatprep.subr.mxu0 0.0
    %4745 = vmatpush1.xpose.msra.mxu0 0.0
    %4746 = vmatprep.subr.mxu0 0.0
    %4747 = vmatpush1.xpose.msra.mxu0 0.0
    %4748 = vmatprep.subr.mxu0 0.0
    %4749 = vmatpush1.xpose.msra.mxu0 0.0
    %4750 = vmatprep.subr.mxu0 0.0
    %4751 = vmatpush1.xpose.msra.mxu0 0.0
    %4752 = vmatprep.subr.mxu0 0.0
    %4753 = vmatpush1.xpose.msra.mxu0 0.0
    %4754 = vmatprep.subr.mxu0 0.0
    %4755 = vmatpush1.xpose.msra.mxu0 0.0
    %4756 = vmatprep.subr.mxu0 0.0
    %4757 = vmatpush1.xpose.msra.mxu0 0.0
    %4758 = vmatprep.subr.mxu0 0.0
    %4759 = vmatpush1.xpose.msra.mxu0 0.0
    %4760 = vmatprep.subr.mxu0 0.0
    %4761 = vmatpush1.xpose.msra.mxu0 0.0
    %4762 = vmatprep.subr.mxu0 0.0
    %4763 = vmatpush1.xpose.msra.mxu0 0.0
    %4764 = vmatprep.subr.mxu0 0.0
    %4765 = vmatpush1.xpose.msra.mxu0 0.0
    %4766 = vmatprep.mubr.f32.mxu0 0.0
    %4767 = vmatmul.mubr.f32.gmra.mrb[0].mxu0 %v4698
    %v4768 = vpop.f32.mrb[0].mxu0
    %v4769 = vadd.f32 0.0, %v4768
    %v4770 = vpop.f32.mrb[0].mxu0
    %4771 = vdwg.mxu0
    %4772 = vrot.lane.b32.xlu0 %v240, 104
    %v4773 = vpop.permute.xlu0 %4772
    %4774 = vrot.lane.b32.xlu0 %v349, 104
    %v4775 = vpop.permute.xlu0 %4774
    %v4776 = vsel %vm481, %v4773, 0
    %v4778 = vsel %vm481, %v4775, 0
    %4780 = vmatprep.subr.mxu0 0.0
    %4781 = vmatpush1.xpose.msra.mxu0 %v4778
    %4782 = vmatprep.subr.mxu0 0.0
    %4783 = vmatpush1.xpose.msra.mxu0 0.0
    %4784 = vmatprep.subr.mxu0 0.0
    %4785 = vmatpush1.xpose.msra.mxu0 0.0
    %4786 = vmatprep.subr.mxu0 0.0
    %4787 = vmatpush1.xpose.msra.mxu0 0.0
    %4788 = vmatprep.subr.mxu0 0.0
    %4789 = vmatpush1.xpose.msra.mxu0 0.0
    %4790 = vmatprep.subr.mxu0 0.0
    %4791 = vmatpush1.xpose.msra.mxu0 0.0
    %4792 = vmatprep.subr.mxu0 0.0
    %4793 = vmatpush1.xpose.msra.mxu0 0.0
    %4794 = vmatprep.subr.mxu0 0.0
    %4795 = vmatpush1.xpose.msra.mxu0 0.0
    %4796 = vmatprep.subr.mxu0 0.0
    %4797 = vmatpush1.xpose.msra.mxu0 0.0
    %4798 = vmatprep.subr.mxu0 0.0
    %4799 = vmatpush1.xpose.msra.mxu0 0.0
    %4800 = vmatprep.subr.mxu0 0.0
    %4801 = vmatpush1.xpose.msra.mxu0 0.0
    %4802 = vmatprep.subr.mxu0 0.0
    %4803 = vmatpush1.xpose.msra.mxu0 0.0
    %4804 = vmatprep.subr.mxu0 0.0
    %4805 = vmatpush1.xpose.msra.mxu0 0.0
    %4806 = vmatprep.subr.mxu0 0.0
    %4807 = vmatpush1.xpose.msra.mxu0 0.0
    %4808 = vmatprep.subr.mxu0 0.0
    %4809 = vmatpush1.xpose.msra.mxu0 0.0
    %4810 = vmatprep.subr.mxu0 0.0
    %4811 = vmatpush1.xpose.msra.mxu0 0.0
    %4812 = vmatprep.subr.mxu0 0.0
    %4813 = vmatpush1.xpose.msra.mxu0 0.0
    %4814 = vmatprep.subr.mxu0 0.0
    %4815 = vmatpush1.xpose.msra.mxu0 0.0
    %4816 = vmatprep.subr.mxu0 0.0
    %4817 = vmatpush1.xpose.msra.mxu0 0.0
    %4818 = vmatprep.subr.mxu0 0.0
    %4819 = vmatpush1.xpose.msra.mxu0 0.0
    %4820 = vmatprep.subr.mxu0 0.0
    %4821 = vmatpush1.xpose.msra.mxu0 0.0
    %4822 = vmatprep.subr.mxu0 0.0
    %4823 = vmatpush1.xpose.msra.mxu0 0.0
    %4824 = vmatprep.subr.mxu0 0.0
    %4825 = vmatpush1.xpose.msra.mxu0 0.0
    %4826 = vmatprep.subr.mxu0 0.0
    %4827 = vmatpush1.xpose.msra.mxu0 0.0
    %4828 = vmatprep.subr.mxu0 0.0
    %4829 = vmatpush1.xpose.msra.mxu0 0.0
    %4830 = vmatprep.subr.mxu0 0.0
    %4831 = vmatpush1.xpose.msra.mxu0 0.0
    %4832 = vmatprep.subr.mxu0 0.0
    %4833 = vmatpush1.xpose.msra.mxu0 0.0
    %4834 = vmatprep.subr.mxu0 0.0
    %4835 = vmatpush1.xpose.msra.mxu0 0.0
    %4836 = vmatprep.subr.mxu0 0.0
    %4837 = vmatpush1.xpose.msra.mxu0 0.0
    %4838 = vmatprep.subr.mxu0 0.0
    %4839 = vmatpush1.xpose.msra.mxu0 0.0
    %4840 = vmatprep.subr.mxu0 0.0
    %4841 = vmatpush1.xpose.msra.mxu0 0.0
    %4842 = vmatprep.subr.mxu0 0.0
    %4843 = vmatpush1.xpose.msra.mxu0 0.0
    %4844 = vmatprep.mubr.f32.mxu0 0.0
    %4845 = vmatmul.mubr.f32.gmra.mrb[0].mxu0 %v4776
    %v4846 = vpop.f32.mrb[0].mxu0
    %v4847 = vadd.f32 0.0, %v4846
    %v4848 = vpop.f32.mrb[0].mxu0
    %4849 = vdwg.mxu0
    %4850 = vrot.lane.b32.xlu0 %v245, 104
    %v4851 = vpop.permute.xlu0 %4850
    %4852 = vrot.lane.b32.xlu0 %v354, 104
    %v4853 = vpop.permute.xlu0 %4852
    %v4854 = vsel %vm481, %v4851, 0
    %v4856 = vsel %vm481, %v4853, 0
    %4858 = vmatprep.subr.mxu0 0.0
    %4859 = vmatpush1.xpose.msra.mxu0 %v4856
    %4860 = vmatprep.subr.mxu0 0.0
    %4861 = vmatpush1.xpose.msra.mxu0 0.0
    %4862 = vmatprep.subr.mxu0 0.0
    %4863 = vmatpush1.xpose.msra.mxu0 0.0
    %4864 = vmatprep.subr.mxu0 0.0
    %4865 = vmatpush1.xpose.msra.mxu0 0.0
    %4866 = vmatprep.subr.mxu0 0.0
    %4867 = vmatpush1.xpose.msra.mxu0 0.0
    %4868 = vmatprep.subr.mxu0 0.0
    %4869 = vmatpush1.xpose.msra.mxu0 0.0
    %4870 = vmatprep.subr.mxu0 0.0
    %4871 = vmatpush1.xpose.msra.mxu0 0.0
    %4872 = vmatprep.subr.mxu0 0.0
    %4873 = vmatpush1.xpose.msra.mxu0 0.0
    %4874 = vmatprep.subr.mxu0 0.0
    %4875 = vmatpush1.xpose.msra.mxu0 0.0
    %4876 = vmatprep.subr.mxu0 0.0
    %4877 = vmatpush1.xpose.msra.mxu0 0.0
    %4878 = vmatprep.subr.mxu0 0.0
    %4879 = vmatpush1.xpose.msra.mxu0 0.0
    %4880 = vmatprep.subr.mxu0 0.0
    %4881 = vmatpush1.xpose.msra.mxu0 0.0
    %4882 = vmatprep.subr.mxu0 0.0
    %4883 = vmatpush1.xpose.msra.mxu0 0.0
    %4884 = vmatprep.subr.mxu0 0.0
    %4885 = vmatpush1.xpose.msra.mxu0 0.0
    %4886 = vmatprep.subr.mxu0 0.0
    %4887 = vmatpush1.xpose.msra.mxu0 0.0
    %4888 = vmatprep.subr.mxu0 0.0
    %4889 = vmatpush1.xpose.msra.mxu0 0.0
    %4890 = vmatprep.subr.mxu0 0.0
    %4891 = vmatpush1.xpose.msra.mxu0 0.0
    %4892 = vmatprep.subr.mxu0 0.0
    %4893 = vmatpush1.xpose.msra.mxu0 0.0
    %4894 = vmatprep.subr.mxu0 0.0
    %4895 = vmatpush1.xpose.msra.mxu0 0.0
    %4896 = vmatprep.subr.mxu0 0.0
    %4897 = vmatpush1.xpose.msra.mxu0 0.0
    %4898 = vmatprep.subr.mxu0 0.0
    %4899 = vmatpush1.xpose.msra.mxu0 0.0
    %4900 = vmatprep.subr.mxu0 0.0
    %4901 = vmatpush1.xpose.msra.mxu0 0.0
    %4902 = vmatprep.subr.mxu0 0.0
    %4903 = vmatpush1.xpose.msra.mxu0 0.0
    %4904 = vmatprep.subr.mxu0 0.0
    %4905 = vmatpush1.xpose.msra.mxu0 0.0
    %4906 = vmatprep.subr.mxu0 0.0
    %4907 = vmatpush1.xpose.msra.mxu0 0.0
    %4908 = vmatprep.subr.mxu0 0.0
    %4909 = vmatpush1.xpose.msra.mxu0 0.0
    %4910 = vmatprep.subr.mxu0 0.0
    %4911 = vmatpush1.xpose.msra.mxu0 0.0
    %4912 = vmatprep.subr.mxu0 0.0
    %4913 = vmatpush1.xpose.msra.mxu0 0.0
    %4914 = vmatprep.subr.mxu0 0.0
    %4915 = vmatpush1.xpose.msra.mxu0 0.0
    %4916 = vmatprep.subr.mxu0 0.0
    %4917 = vmatpush1.xpose.msra.mxu0 0.0
    %4918 = vmatprep.subr.mxu0 0.0
    %4919 = vmatpush1.xpose.msra.mxu0 0.0
    %4920 = vmatprep.subr.mxu0 0.0
    %4921 = vmatpush1.xpose.msra.mxu0 0.0
    %4922 = vmatprep.mubr.f32.mxu0 0.0
    %4923 = vmatmul.mubr.f32.gmra.mrb[0].mxu0 %v4854
    %v4924 = vpop.f32.mrb[0].mxu0
    %v4925 = vadd.f32 0.0, %v4924
    %v4926 = vpop.f32.mrb[0].mxu0
    %4927 = vdwg.mxu0
    %4928 = vrot.lane.b32.xlu0 %v250, 104
    %v4929 = vpop.permute.xlu0 %4928
    %4930 = vrot.lane.b32.xlu0 %v359, 104
    %v4931 = vpop.permute.xlu0 %4930
    %v4932 = vsel %vm481, %v4929, 0
    %v4934 = vsel %vm481, %v4931, 0
    %4936 = vmatprep.subr.mxu0 0.0
    %4937 = vmatpush1.xpose.msra.mxu0 %v4934
    %4938 = vmatprep.subr.mxu0 0.0
    %4939 = vmatpush1.xpose.msra.mxu0 0.0
    %4940 = vmatprep.subr.mxu0 0.0
    %4941 = vmatpush1.xpose.msra.mxu0 0.0
    %4942 = vmatprep.subr.mxu0 0.0
    %4943 = vmatpush1.xpose.msra.mxu0 0.0
    %4944 = vmatprep.subr.mxu0 0.0
    %4945 = vmatpush1.xpose.msra.mxu0 0.0
    %4946 = vmatprep.subr.mxu0 0.0
    %4947 = vmatpush1.xpose.msra.mxu0 0.0
    %4948 = vmatprep.subr.mxu0 0.0
    %4949 = vmatpush1.xpose.msra.mxu0 0.0
    %4950 = vmatprep.subr.mxu0 0.0
    %4951 = vmatpush1.xpose.msra.mxu0 0.0
    %4952 = vmatprep.subr.mxu0 0.0
    %4953 = vmatpush1.xpose.msra.mxu0 0.0
    %4954 = vmatprep.subr.mxu0 0.0
    %4955 = vmatpush1.xpose.msra.mxu0 0.0
    %4956 = vmatprep.subr.mxu0 0.0
    %4957 = vmatpush1.xpose.msra.mxu0 0.0
    %4958 = vmatprep.subr.mxu0 0.0
    %4959 = vmatpush1.xpose.msra.mxu0 0.0
    %4960 = vmatprep.subr.mxu0 0.0
    %4961 = vmatpush1.xpose.msra.mxu0 0.0
    %4962 = vmatprep.subr.mxu0 0.0
    %4963 = vmatpush1.xpose.msra.mxu0 0.0
    %4964 = vmatprep.subr.mxu0 0.0
    %4965 = vmatpush1.xpose.msra.mxu0 0.0
    %4966 = vmatprep.subr.mxu0 0.0
    %4967 = vmatpush1.xpose.msra.mxu0 0.0
    %4968 = vmatprep.subr.mxu0 0.0
    %4969 = vmatpush1.xpose.msra.mxu0 0.0
    %4970 = vmatprep.subr.mxu0 0.0
    %4971 = vmatpush1.xpose.msra.mxu0 0.0
    %4972 = vmatprep.subr.mxu0 0.0
    %4973 = vmatpush1.xpose.msra.mxu0 0.0
    %4974 = vmatprep.subr.mxu0 0.0
    %4975 = vmatpush1.xpose.msra.mxu0 0.0
    %4976 = vmatprep.subr.mxu0 0.0
    %4977 = vmatpush1.xpose.msra.mxu0 0.0
    %4978 = vmatprep.subr.mxu0 0.0
    %4979 = vmatpush1.xpose.msra.mxu0 0.0
    %4980 = vmatprep.subr.mxu0 0.0
    %4981 = vmatpush1.xpose.msra.mxu0 0.0
    %4982 = vmatprep.subr.mxu0 0.0
    %4983 = vmatpush1.xpose.msra.mxu0 0.0
    %4984 = vmatprep.subr.mxu0 0.0
    %4985 = vmatpush1.xpose.msra.mxu0 0.0
    %4986 = vmatprep.subr.mxu0 0.0
    %4987 = vmatpush1.xpose.msra.mxu0 0.0
    %4988 = vmatprep.subr.mxu0 0.0
    %4989 = vmatpush1.xpose.msra.mxu0 0.0
    %4990 = vmatprep.subr.mxu0 0.0
    %4991 = vmatpush1.xpose.msra.mxu0 0.0
    %4992 = vmatprep.subr.mxu0 0.0
    %4993 = vmatpush1.xpose.msra.mxu0 0.0
    %4994 = vmatprep.subr.mxu0 0.0
    %4995 = vmatpush1.xpose.msra.mxu0 0.0
    %4996 = vmatprep.subr.mxu0 0.0
    %4997 = vmatpush1.xpose.msra.mxu0 0.0
    %4998 = vmatprep.subr.mxu0 0.0
    %4999 = vmatpush1.xpose.msra.mxu0 0.0
    %5000 = vmatprep.mubr.f32.mxu0 0.0
    %5001 = vmatmul.mubr.f32.gmra.mrb[0].mxu0 %v4932
    %v5002 = vpop.f32.mrb[0].mxu0
    %v5003 = vadd.f32 0.0, %v5002
    %v5004 = vpop.f32.mrb[0].mxu0
    %5005 = vdwg.mxu0
    %5006 = vrot.lane.b32.xlu0 %v255, 104
    %v5007 = vpop.permute.xlu0 %5006
    %5008 = vrot.lane.b32.xlu0 %v364, 104
    %v5009 = vpop.permute.xlu0 %5008
    %v5010 = vsel %vm481, %v5007, 0
    %v5012 = vsel %vm481, %v5009, 0
    %5014 = vmatprep.subr.mxu0 0.0
    %5015 = vmatpush1.xpose.msra.mxu0 %v5012
    %5016 = vmatprep.subr.mxu0 0.0
    %5017 = vmatpush1.xpose.msra.mxu0 0.0
    %5018 = vmatprep.subr.mxu0 0.0
    %5019 = vmatpush1.xpose.msra.mxu0 0.0
    %5020 = vmatprep.subr.mxu0 0.0
    %5021 = vmatpush1.xpose.msra.mxu0 0.0
    %5022 = vmatprep.subr.mxu0 0.0
    %5023 = vmatpush1.xpose.msra.mxu0 0.0
    %5024 = vmatprep.subr.mxu0 0.0
    %5025 = vmatpush1.xpose.msra.mxu0 0.0
    %5026 = vmatprep.subr.mxu0 0.0
    %5027 = vmatpush1.xpose.msra.mxu0 0.0
    %5028 = vmatprep.subr.mxu0 0.0
    %5029 = vmatpush1.xpose.msra.mxu0 0.0
    %5030 = vmatprep.subr.mxu0 0.0
    %5031 = vmatpush1.xpose.msra.mxu0 0.0
    %5032 = vmatprep.subr.mxu0 0.0
    %5033 = vmatpush1.xpose.msra.mxu0 0.0
    %5034 = vmatprep.subr.mxu0 0.0
    %5035 = vmatpush1.xpose.msra.mxu0 0.0
    %5036 = vmatprep.subr.mxu0 0.0
    %5037 = vmatpush1.xpose.msra.mxu0 0.0
    %5038 = vmatprep.subr.mxu0 0.0
    %5039 = vmatpush1.xpose.msra.mxu0 0.0
    %5040 = vmatprep.subr.mxu0 0.0
    %5041 = vmatpush1.xpose.msra.mxu0 0.0
    %5042 = vmatprep.subr.mxu0 0.0
    %5043 = vmatpush1.xpose.msra.mxu0 0.0
    %5044 = vmatprep.subr.mxu0 0.0
    %5045 = vmatpush1.xpose.msra.mxu0 0.0
    %5046 = vmatprep.subr.mxu0 0.0
    %5047 = vmatpush1.xpose.msra.mxu0 0.0
    %5048 = vmatprep.subr.mxu0 0.0
    %5049 = vmatpush1.xpose.msra.mxu0 0.0
    %5050 = vmatprep.subr.mxu0 0.0
    %5051 = vmatpush1.xpose.msra.mxu0 0.0
    %5052 = vmatprep.subr.mxu0 0.0
    %5053 = vmatpush1.xpose.msra.mxu0 0.0
    %5054 = vmatprep.subr.mxu0 0.0
    %5055 = vmatpush1.xpose.msra.mxu0 0.0
    %5056 = vmatprep.subr.mxu0 0.0
    %5057 = vmatpush1.xpose.msra.mxu0 0.0
    %5058 = vmatprep.subr.mxu0 0.0
    %5059 = vmatpush1.xpose.msra.mxu0 0.0
    %5060 = vmatprep.subr.mxu0 0.0
    %5061 = vmatpush1.xpose.msra.mxu0 0.0
    %5062 = vmatprep.subr.mxu0 0.0
    %5063 = vmatpush1.xpose.msra.mxu0 0.0
    %5064 = vmatprep.subr.mxu0 0.0
    %5065 = vmatpush1.xpose.msra.mxu0 0.0
    %5066 = vmatprep.subr.mxu0 0.0
    %5067 = vmatpush1.xpose.msra.mxu0 0.0
    %5068 = vmatprep.subr.mxu0 0.0
    %5069 = vmatpush1.xpose.msra.mxu0 0.0
    %5070 = vmatprep.subr.mxu0 0.0
    %5071 = vmatpush1.xpose.msra.mxu0 0.0
    %5072 = vmatprep.subr.mxu0 0.0
    %5073 = vmatpush1.xpose.msra.mxu0 0.0
    %5074 = vmatprep.subr.mxu0 0.0
    %5075 = vmatpush1.xpose.msra.mxu0 0.0
    %5076 = vmatprep.subr.mxu0 0.0
    %5077 = vmatpush1.xpose.msra.mxu0 0.0
    %5078 = vmatprep.mubr.f32.mxu0 0.0
    %5079 = vmatmul.mubr.f32.gmra.mrb[0].mxu0 %v5010
    %v5080 = vpop.f32.mrb[0].mxu0
    %v5081 = vadd.f32 0.0, %v5080
    %v5082 = vpop.f32.mrb[0].mxu0
    %5083 = vdwg.mxu0
    %v5084 = vmul.f32 %v4535, 0.35355338
    %v5085 = vmul.f32 %v4613, 0.35355338
    %v5086 = vmul.f32 %v4691, 0.35355338
    %v5087 = vmul.f32 %v4769, 0.35355338
    %v5088 = vmul.f32 %v4847, 0.35355338
    %v5089 = vmul.f32 %v4925, 0.35355338
    %v5090 = vmul.f32 %v5003, 0.35355338
    %v5091 = vmul.f32 %v5081, 0.35355338
    %v5092 = vsel %vm1099, -4.2949673e+09, %v5084
    %v5093 = vsel %vm1099, -4.2949673e+09, %v5085
    %v5094 = vsel %vm1099, -4.2949673e+09, %v5086
    %v5095 = vsel %vm1099, -4.2949673e+09, %v5087
    %v5096 = vsel %vm1099, -4.2949673e+09, %v5088
    %v5097 = vsel %vm1099, -4.2949673e+09, %v5089
    %v5098 = vsel %vm1099, -4.2949673e+09, %v5090
    %v5099 = vsel %vm1099, -4.2949673e+09, %v5091
    %v5100 = vsel %vm481, %v5092, -inf
    %5101 = vmax.xlane.f32.xlu0 %v5100
    %v5102 = vpop.xlane.xlu0 %5101
    %v5103 = vsel %vm481, %v5093, -inf
    %5104 = vmax.xlane.f32.xlu0 %v5103
    %v5105 = vpop.xlane.xlu0 %5104
    %v5106 = vsel %vm481, %v5094, -inf
    %5107 = vmax.xlane.f32.xlu0 %v5106
    %v5108 = vpop.xlane.xlu0 %5107
    %v5109 = vsel %vm481, %v5095, -inf
    %5110 = vmax.xlane.f32.xlu0 %v5109
    %v5111 = vpop.xlane.xlu0 %5110
    %v5112 = vsel %vm481, %v5096, -inf
    %5113 = vmax.xlane.f32.xlu0 %v5112
    %v5114 = vpop.xlane.xlu0 %5113
    %v5115 = vsel %vm481, %v5097, -inf
    %5116 = vmax.xlane.f32.xlu0 %v5115
    %v5117 = vpop.xlane.xlu0 %5116
    %v5118 = vsel %vm481, %v5098, -inf
    %5119 = vmax.xlane.f32.xlu0 %v5118
    %v5120 = vpop.xlane.xlu0 %5119
    %v5121 = vsel %vm481, %v5099, -inf
    %5122 = vmax.xlane.f32.xlu0 %v5121
    %v5123 = vpop.xlane.xlu0 %5122
    %v5124 = vsub.f32 %v5092, %v5102
    %v5125 = vsub.f32 %v5093, %v5105
    %v5126 = vsub.f32 %v5094, %v5108
    %v5127 = vsub.f32 %v5095, %v5111
    %v5128 = vsub.f32 %v5096, %v5114
    %v5129 = vsub.f32 %v5097, %v5117
    %v5130 = vsub.f32 %v5098, %v5120
    %v5131 = vsub.f32 %v5099, %v5123
    %v5132 = vmul.f32 %v5124, 1.442695
    %v5133 = vpow.pop %v5132
    %v5134 = vmul.f32 %v5125, 1.442695
    %v5135 = vpow.pop %v5134
    %v5136 = vmul.f32 %v5126, 1.442695
    %v5137 = vpow.pop %v5136
    %v5138 = vmul.f32 %v5127, 1.442695
    %v5139 = vpow.pop %v5138
    %v5140 = vmul.f32 %v5128, 1.442695
    %v5141 = vpow.pop %v5140
    %v5142 = vmul.f32 %v5129, 1.442695
    %v5143 = vpow.pop %v5142
    %v5144 = vmul.f32 %v5130, 1.442695
    %v5145 = vpow.pop %v5144
    %v5146 = vmul.f32 %v5131, 1.442695
    %v5147 = vpow.pop %v5146
    %v5148 = vsel %vm481, %v5133, 0.0
    %5149 = vadd.xlane.f32.xlu0 %v5148
    %v5150 = vpop.xlane.xlu0 %5149
    %v5151 = vsel %vm481, %v5135, 0.0
    %5152 = vadd.xlane.f32.xlu0 %v5151
    %v5153 = vpop.xlane.xlu0 %5152
    %v5154 = vsel %vm481, %v5137, 0.0
    %5155 = vadd.xlane.f32.xlu0 %v5154
    %v5156 = vpop.xlane.xlu0 %5155
    %v5157 = vsel %vm481, %v5139, 0.0
    %5158 = vadd.xlane.f32.xlu0 %v5157
    %v5159 = vpop.xlane.xlu0 %5158
    %v5160 = vsel %vm481, %v5141, 0.0
    %5161 = vadd.xlane.f32.xlu0 %v5160
    %v5162 = vpop.xlane.xlu0 %5161
    %v5163 = vsel %vm481, %v5143, 0.0
    %5164 = vadd.xlane.f32.xlu0 %v5163
    %v5165 = vpop.xlane.xlu0 %5164
    %v5166 = vsel %vm481, %v5145, 0.0
    %5167 = vadd.xlane.f32.xlu0 %v5166
    %v5168 = vpop.xlane.xlu0 %5167
    %v5169 = vsel %vm481, %v5147, 0.0
    %5170 = vadd.xlane.f32.xlu0 %v5169
    %v5171 = vpop.xlane.xlu0 %5170
    %v5172 = vrcp.pop %v5150
    %v5173 = vrcp.pop %v5153
    %v5174 = vrcp.pop %v5156
    %v5175 = vrcp.pop %v5159
    %v5176 = vrcp.pop %v5162
    %v5177 = vrcp.pop %v5165
    %v5178 = vrcp.pop %v5168
    %v5179 = vrcp.pop %v5171
    %v5180 = vmul.f32 %v5133, %v5172
    %v5181 = vmul.f32 %v5135, %v5173
    %v5182 = vmul.f32 %v5137, %v5174
    %v5183 = vmul.f32 %v5139, %v5175
    %v5184 = vmul.f32 %v5141, %v5176
    %v5185 = vmul.f32 %v5143, %v5177
    %v5186 = vmul.f32 %v5145, %v5178
    %v5187 = vmul.f32 %v5147, %v5179
    %5188 = vrot.lane.b32.xlu0 %v438, 104
    %v5189 = vpop.permute.xlu0 %5188
    %v5192 = vsel %vm481, %v5180, 0
    %5194 = vmatprep.subr.mxu0 0.0
    %5195 = vmatpush1.msra.mxu0 %v5189
    %5196 = vmatprep.subr.mxu0 0.0
    %5197 = vmatpush1.msra.mxu0 0.0
    %5198 = vmatprep.subr.mxu0 0.0
    %5199 = vmatpush1.msra.mxu0 0.0
    %5200 = vmatprep.subr.mxu0 0.0
    %5201 = vmatpush1.msra.mxu0 0.0
    %5202 = vmatprep.subr.mxu0 0.0
    %5203 = vmatpush1.msra.mxu0 0.0
    %5204 = vmatprep.subr.mxu0 0.0
    %5205 = vmatpush1.msra.mxu0 0.0
    %5206 = vmatprep.subr.mxu0 0.0
    %5207 = vmatpush1.msra.mxu0 0.0
    %5208 = vmatprep.subr.mxu0 0.0
    %5209 = vmatpush1.msra.mxu0 0.0
    %5210 = vmatprep.subr.mxu0 0.0
    %5211 = vmatpush1.msra.mxu0 0.0
    %5212 = vmatprep.subr.mxu0 0.0
    %5213 = vmatpush1.msra.mxu0 0.0
    %5214 = vmatprep.subr.mxu0 0.0
    %5215 = vmatpush1.msra.mxu0 0.0
    %5216 = vmatprep.subr.mxu0 0.0
    %5217 = vmatpush1.msra.mxu0 0.0
    %5218 = vmatprep.subr.mxu0 0.0
    %5219 = vmatpush1.msra.mxu0 0.0
    %5220 = vmatprep.subr.mxu0 0.0
    %5221 = vmatpush1.msra.mxu0 0.0
    %5222 = vmatprep.subr.mxu0 0.0
    %5223 = vmatpush1.msra.mxu0 0.0
    %5224 = vmatprep.subr.mxu0 0.0
    %5225 = vmatpush1.msra.mxu0 0.0
    %5226 = vmatprep.subr.mxu0 0.0
    %5227 = vmatpush1.msra.mxu0 0.0
    %5228 = vmatprep.subr.mxu0 0.0
    %5229 = vmatpush1.msra.mxu0 0.0
    %5230 = vmatprep.subr.mxu0 0.0
    %5231 = vmatpush1.msra.mxu0 0.0
    %5232 = vmatprep.subr.mxu0 0.0
    %5233 = vmatpush1.msra.mxu0 0.0
    %5234 = vmatprep.subr.mxu0 0.0
    %5235 = vmatpush1.msra.mxu0 0.0
    %5236 = vmatprep.subr.mxu0 0.0
    %5237 = vmatpush1.msra.mxu0 0.0
    %5238 = vmatprep.subr.mxu0 0.0
    %5239 = vmatpush1.msra.mxu0 0.0
    %5240 = vmatprep.subr.mxu0 0.0
    %5241 = vmatpush1.msra.mxu0 0.0
    %5242 = vmatprep.subr.mxu0 0.0
    %5243 = vmatpush1.msra.mxu0 0.0
    %5244 = vmatprep.subr.mxu0 0.0
    %5245 = vmatpush1.msra.mxu0 0.0
    %5246 = vmatprep.subr.mxu0 0.0
    %5247 = vmatpush1.msra.mxu0 0.0
    %5248 = vmatprep.subr.mxu0 0.0
    %5249 = vmatpush1.msra.mxu0 0.0
    %5250 = vmatprep.subr.mxu0 0.0
    %5251 = vmatpush1.msra.mxu0 0.0
    %5252 = vmatprep.subr.mxu0 0.0
    %5253 = vmatpush1.msra.mxu0 0.0
    %5254 = vmatprep.subr.mxu0 0.0
    %5255 = vmatpush1.msra.mxu0 0.0
    %5256 = vmatprep.subr.mxu0 0.0
    %5257 = vmatpush1.msra.mxu0 0.0
    %5258 = vmatprep.mubr.f32.mxu0 0.0
    %5259 = vmatmul.mubr.f32.gmra.mrb[0].mxu0 %v5192
    %v5260 = vpop.f32.mrb[0].mxu0
    %v5261 = vadd.f32 0.0, %v5260
    %v5262 = vpop.f32.mrb[0].mxu0
    %5263 = vdwg.mxu0
    %5264 = vrot.lane.b32.xlu0 %v443, 104
    %v5265 = vpop.permute.xlu0 %5264
    %v5268 = vsel %vm481, %v5181, 0
    %5270 = vmatprep.subr.mxu0 0.0
    %5271 = vmatpush1.msra.mxu0 %v5265
    %5272 = vmatprep.subr.mxu0 0.0
    %5273 = vmatpush1.msra.mxu0 0.0
    %5274 = vmatprep.subr.mxu0 0.0
    %5275 = vmatpush1.msra.mxu0 0.0
    %5276 = vmatprep.subr.mxu0 0.0
    %5277 = vmatpush1.msra.mxu0 0.0
    %5278 = vmatprep.subr.mxu0 0.0
    %5279 = vmatpush1.msra.mxu0 0.0
    %5280 = vmatprep.subr.mxu0 0.0
    %5281 = vmatpush1.msra.mxu0 0.0
    %5282 = vmatprep.subr.mxu0 0.0
    %5283 = vmatpush1.msra.mxu0 0.0
    %5284 = vmatprep.subr.mxu0 0.0
    %5285 = vmatpush1.msra.mxu0 0.0
    %5286 = vmatprep.subr.mxu0 0.0
    %5287 = vmatpush1.msra.mxu0 0.0
    %5288 = vmatprep.subr.mxu0 0.0
    %5289 = vmatpush1.msra.mxu0 0.0
    %5290 = vmatprep.subr.mxu0 0.0
    %5291 = vmatpush1.msra.mxu0 0.0
    %5292 = vmatprep.subr.mxu0 0.0
    %5293 = vmatpush1.msra.mxu0 0.0
    %5294 = vmatprep.subr.mxu0 0.0
    %5295 = vmatpush1.msra.mxu0 0.0
    %5296 = vmatprep.subr.mxu0 0.0
    %5297 = vmatpush1.msra.mxu0 0.0
    %5298 = vmatprep.subr.mxu0 0.0
    %5299 = vmatpush1.msra.mxu0 0.0
    %5300 = vmatprep.subr.mxu0 0.0
    %5301 = vmatpush1.msra.mxu0 0.0
    %5302 = vmatprep.subr.mxu0 0.0
    %5303 = vmatpush1.msra.mxu0 0.0
    %5304 = vmatprep.subr.mxu0 0.0
    %5305 = vmatpush1.msra.mxu0 0.0
    %5306 = vmatprep.subr.mxu0 0.0
    %5307 = vmatpush1.msra.mxu0 0.0
    %5308 = vmatprep.subr.mxu0 0.0
    %5309 = vmatpush1.msra.mxu0 0.0
    %5310 = vmatprep.subr.mxu0 0.0
    %5311 = vmatpush1.msra.mxu0 0.0
    %5312 = vmatprep.subr.mxu0 0.0
    %5313 = vmatpush1.msra.mxu0 0.0
    %5314 = vmatprep.subr.mxu0 0.0
    %5315 = vmatpush1.msra.mxu0 0.0
    %5316 = vmatprep.subr.mxu0 0.0
    %5317 = vmatpush1.msra.mxu0 0.0
    %5318 = vmatprep.subr.mxu0 0.0
    %5319 = vmatpush1.msra.mxu0 0.0
    %5320 = vmatprep.subr.mxu0 0.0
    %5321 = vmatpush1.msra.mxu0 0.0
    %5322 = vmatprep.subr.mxu0 0.0
    %5323 = vmatpush1.msra.mxu0 0.0
    %5324 = vmatprep.subr.mxu0 0.0
    %5325 = vmatpush1.msra.mxu0 0.0
    %5326 = vmatprep.subr.mxu0 0.0
    %5327 = vmatpush1.msra.mxu0 0.0
    %5328 = vmatprep.subr.mxu0 0.0
    %5329 = vmatpush1.msra.mxu0 0.0
    %5330 = vmatprep.subr.mxu0 0.0
    %5331 = vmatpush1.msra.mxu0 0.0
    %5332 = vmatprep.subr.mxu0 0.0
    %5333 = vmatpush1.msra.mxu0 0.0
    %5334 = vmatprep.mubr.f32.mxu0 0.0
    %5335 = vmatmul.mubr.f32.gmra.mrb[0].mxu0 %v5268
    %v5336 = vpop.f32.mrb[0].mxu0
    %v5337 = vadd.f32 0.0, %v5336
    %v5338 = vpop.f32.mrb[0].mxu0
    %5339 = vdwg.mxu0
    %5340 = vrot.lane.b32.xlu0 %v448, 104
    %v5341 = vpop.permute.xlu0 %5340
    %v5344 = vsel %vm481, %v5182, 0
    %5346 = vmatprep.subr.mxu0 0.0
    %5347 = vmatpush1.msra.mxu0 %v5341
    %5348 = vmatprep.subr.mxu0 0.0
    %5349 = vmatpush1.msra.mxu0 0.0
    %5350 = vmatprep.subr.mxu0 0.0
    %5351 = vmatpush1.msra.mxu0 0.0
    %5352 = vmatprep.subr.mxu0 0.0
    %5353 = vmatpush1.msra.mxu0 0.0
    %5354 = vmatprep.subr.mxu0 0.0
    %5355 = vmatpush1.msra.mxu0 0.0
    %5356 = vmatprep.subr.mxu0 0.0
    %5357 = vmatpush1.msra.mxu0 0.0
    %5358 = vmatprep.subr.mxu0 0.0
    %5359 = vmatpush1.msra.mxu0 0.0
    %5360 = vmatprep.subr.mxu0 0.0
    %5361 = vmatpush1.msra.mxu0 0.0
    %5362 = vmatprep.subr.mxu0 0.0
    %5363 = vmatpush1.msra.mxu0 0.0
    %5364 = vmatprep.subr.mxu0 0.0
    %5365 = vmatpush1.msra.mxu0 0.0
    %5366 = vmatprep.subr.mxu0 0.0
    %5367 = vmatpush1.msra.mxu0 0.0
    %5368 = vmatprep.subr.mxu0 0.0
    %5369 = vmatpush1.msra.mxu0 0.0
    %5370 = vmatprep.subr.mxu0 0.0
    %5371 = vmatpush1.msra.mxu0 0.0
    %5372 = vmatprep.subr.mxu0 0.0
    %5373 = vmatpush1.msra.mxu0 0.0
    %5374 = vmatprep.subr.mxu0 0.0
    %5375 = vmatpush1.msra.mxu0 0.0
    %5376 = vmatprep.subr.mxu0 0.0
    %5377 = vmatpush1.msra.mxu0 0.0
    %5378 = vmatprep.subr.mxu0 0.0
    %5379 = vmatpush1.msra.mxu0 0.0
    %5380 = vmatprep.subr.mxu0 0.0
    %5381 = vmatpush1.msra.mxu0 0.0
    %5382 = vmatprep.subr.mxu0 0.0
    %5383 = vmatpush1.msra.mxu0 0.0
    %5384 = vmatprep.subr.mxu0 0.0
    %5385 = vmatpush1.msra.mxu0 0.0
    %5386 = vmatprep.subr.mxu0 0.0
    %5387 = vmatpush1.msra.mxu0 0.0
    %5388 = vmatprep.subr.mxu0 0.0
    %5389 = vmatpush1.msra.mxu0 0.0
    %5390 = vmatprep.subr.mxu0 0.0
    %5391 = vmatpush1.msra.mxu0 0.0
    %5392 = vmatprep.subr.mxu0 0.0
    %5393 = vmatpush1.msra.mxu0 0.0
    %5394 = vmatprep.subr.mxu0 0.0
    %5395 = vmatpush1.msra.mxu0 0.0
    %5396 = vmatprep.subr.mxu0 0.0
    %5397 = vmatpush1.msra.mxu0 0.0
    %5398 = vmatprep.subr.mxu0 0.0
    %5399 = vmatpush1.msra.mxu0 0.0
    %5400 = vmatprep.subr.mxu0 0.0
    %5401 = vmatpush1.msra.mxu0 0.0
    %5402 = vmatprep.subr.mxu0 0.0
    %5403 = vmatpush1.msra.mxu0 0.0
    %5404 = vmatprep.subr.mxu0 0.0
    %5405 = vmatpush1.msra.mxu0 0.0
    %5406 = vmatprep.subr.mxu0 0.0
    %5407 = vmatpush1.msra.mxu0 0.0
    %5408 = vmatprep.subr.mxu0 0.0
    %5409 = vmatpush1.msra.mxu0 0.0
    %5410 = vmatprep.mubr.f32.mxu0 0.0
    %5411 = vmatmul.mubr.f32.gmra.mrb[0].mxu0 %v5344
    %v5412 = vpop.f32.mrb[0].mxu0
    %v5413 = vadd.f32 0.0, %v5412
    %v5414 = vpop.f32.mrb[0].mxu0
    %5415 = vdwg.mxu0
    %5416 = vrot.lane.b32.xlu0 %v453, 104
    %v5417 = vpop.permute.xlu0 %5416
    %v5420 = vsel %vm481, %v5183, 0
    %5422 = vmatprep.subr.mxu0 0.0
    %5423 = vmatpush1.msra.mxu0 %v5417
    %5424 = vmatprep.subr.mxu0 0.0
    %5425 = vmatpush1.msra.mxu0 0.0
    %5426 = vmatprep.subr.mxu0 0.0
    %5427 = vmatpush1.msra.mxu0 0.0
    %5428 = vmatprep.subr.mxu0 0.0
    %5429 = vmatpush1.msra.mxu0 0.0
    %5430 = vmatprep.subr.mxu0 0.0
    %5431 = vmatpush1.msra.mxu0 0.0
    %5432 = vmatprep.subr.mxu0 0.0
    %5433 = vmatpush1.msra.mxu0 0.0
    %5434 = vmatprep.subr.mxu0 0.0
    %5435 = vmatpush1.msra.mxu0 0.0
    %5436 = vmatprep.subr.mxu0 0.0
    %5437 = vmatpush1.msra.mxu0 0.0
    %5438 = vmatprep.subr.mxu0 0.0
    %5439 = vmatpush1.msra.mxu0 0.0
    %5440 = vmatprep.subr.mxu0 0.0
    %5441 = vmatpush1.msra.mxu0 0.0
    %5442 = vmatprep.subr.mxu0 0.0
    %5443 = vmatpush1.msra.mxu0 0.0
    %5444 = vmatprep.subr.mxu0 0.0
    %5445 = vmatpush1.msra.mxu0 0.0
    %5446 = vmatprep.subr.mxu0 0.0
    %5447 = vmatpush1.msra.mxu0 0.0
    %5448 = vmatprep.subr.mxu0 0.0
    %5449 = vmatpush1.msra.mxu0 0.0
    %5450 = vmatprep.subr.mxu0 0.0
    %5451 = vmatpush1.msra.mxu0 0.0
    %5452 = vmatprep.subr.mxu0 0.0
    %5453 = vmatpush1.msra.mxu0 0.0
    %5454 = vmatprep.subr.mxu0 0.0
    %5455 = vmatpush1.msra.mxu0 0.0
    %5456 = vmatprep.subr.mxu0 0.0
    %5457 = vmatpush1.msra.mxu0 0.0
    %5458 = vmatprep.subr.mxu0 0.0
    %5459 = vmatpush1.msra.mxu0 0.0
    %5460 = vmatprep.subr.mxu0 0.0
    %5461 = vmatpush1.msra.mxu0 0.0
    %5462 = vmatprep.subr.mxu0 0.0
    %5463 = vmatpush1.msra.mxu0 0.0
    %5464 = vmatprep.subr.mxu0 0.0
    %5465 = vmatpush1.msra.mxu0 0.0
    %5466 = vmatprep.subr.mxu0 0.0
    %5467 = vmatpush1.msra.mxu0 0.0
    %5468 = vmatprep.subr.mxu0 0.0
    %5469 = vmatpush1.msra.mxu0 0.0
    %5470 = vmatprep.subr.mxu0 0.0
    %5471 = vmatpush1.msra.mxu0 0.0
    %5472 = vmatprep.subr.mxu0 0.0
    %5473 = vmatpush1.msra.mxu0 0.0
    %5474 = vmatprep.subr.mxu0 0.0
    %5475 = vmatpush1.msra.mxu0 0.0
    %5476 = vmatprep.subr.mxu0 0.0
    %5477 = vmatpush1.msra.mxu0 0.0
    %5478 = vmatprep.subr.mxu0 0.0
    %5479 = vmatpush1.msra.mxu0 0.0
    %5480 = vmatprep.subr.mxu0 0.0
    %5481 = vmatpush1.msra.mxu0 0.0
    %5482 = vmatprep.subr.mxu0 0.0
    %5483 = vmatpush1.msra.mxu0 0.0
    %5484 = vmatprep.subr.mxu0 0.0
    %5485 = vmatpush1.msra.mxu0 0.0
    %5486 = vmatprep.mubr.f32.mxu0 0.0
    %5487 = vmatmul.mubr.f32.gmra.mrb[0].mxu0 %v5420
    %v5488 = vpop.f32.mrb[0].mxu0
    %v5489 = vadd.f32 0.0, %v5488
    %v5490 = vpop.f32.mrb[0].mxu0
    %5491 = vdwg.mxu0
    %5492 = vrot.lane.b32.xlu0 %v458, 104
    %v5493 = vpop.permute.xlu0 %5492
    %v5496 = vsel %vm481, %v5184, 0
    %5498 = vmatprep.subr.mxu0 0.0
    %5499 = vmatpush1.msra.mxu0 %v5493
    %5500 = vmatprep.subr.mxu0 0.0
    %5501 = vmatpush1.msra.mxu0 0.0
    %5502 = vmatprep.subr.mxu0 0.0
    %5503 = vmatpush1.msra.mxu0 0.0
    %5504 = vmatprep.subr.mxu0 0.0
    %5505 = vmatpush1.msra.mxu0 0.0
    %5506 = vmatprep.subr.mxu0 0.0
    %5507 = vmatpush1.msra.mxu0 0.0
    %5508 = vmatprep.subr.mxu0 0.0
    %5509 = vmatpush1.msra.mxu0 0.0
    %5510 = vmatprep.subr.mxu0 0.0
    %5511 = vmatpush1.msra.mxu0 0.0
    %5512 = vmatprep.subr.mxu0 0.0
    %5513 = vmatpush1.msra.mxu0 0.0
    %5514 = vmatprep.subr.mxu0 0.0
    %5515 = vmatpush1.msra.mxu0 0.0
    %5516 = vmatprep.subr.mxu0 0.0
    %5517 = vmatpush1.msra.mxu0 0.0
    %5518 = vmatprep.subr.mxu0 0.0
    %5519 = vmatpush1.msra.mxu0 0.0
    %5520 = vmatprep.subr.mxu0 0.0
    %5521 = vmatpush1.msra.mxu0 0.0
    %5522 = vmatprep.subr.mxu0 0.0
    %5523 = vmatpush1.msra.mxu0 0.0
    %5524 = vmatprep.subr.mxu0 0.0
    %5525 = vmatpush1.msra.mxu0 0.0
    %5526 = vmatprep.subr.mxu0 0.0
    %5527 = vmatpush1.msra.mxu0 0.0
    %5528 = vmatprep.subr.mxu0 0.0
    %5529 = vmatpush1.msra.mxu0 0.0
    %5530 = vmatprep.subr.mxu0 0.0
    %5531 = vmatpush1.msra.mxu0 0.0
    %5532 = vmatprep.subr.mxu0 0.0
    %5533 = vmatpush1.msra.mxu0 0.0
    %5534 = vmatprep.subr.mxu0 0.0
    %5535 = vmatpush1.msra.mxu0 0.0
    %5536 = vmatprep.subr.mxu0 0.0
    %5537 = vmatpush1.msra.mxu0 0.0
    %5538 = vmatprep.subr.mxu0 0.0
    %5539 = vmatpush1.msra.mxu0 0.0
    %5540 = vmatprep.subr.mxu0 0.0
    %5541 = vmatpush1.msra.mxu0 0.0
    %5542 = vmatprep.subr.mxu0 0.0
    %5543 = vmatpush1.msra.mxu0 0.0
    %5544 = vmatprep.subr.mxu0 0.0
    %5545 = vmatpush1.msra.mxu0 0.0
    %5546 = vmatprep.subr.mxu0 0.0
    %5547 = vmatpush1.msra.mxu0 0.0
    %5548 = vmatprep.subr.mxu0 0.0
    %5549 = vmatpush1.msra.mxu0 0.0
    %5550 = vmatprep.subr.mxu0 0.0
    %5551 = vmatpush1.msra.mxu0 0.0
    %5552 = vmatprep.subr.mxu0 0.0
    %5553 = vmatpush1.msra.mxu0 0.0
    %5554 = vmatprep.subr.mxu0 0.0
    %5555 = vmatpush1.msra.mxu0 0.0
    %5556 = vmatprep.subr.mxu0 0.0
    %5557 = vmatpush1.msra.mxu0 0.0
    %5558 = vmatprep.subr.mxu0 0.0
    %5559 = vmatpush1.msra.mxu0 0.0
    %5560 = vmatprep.subr.mxu0 0.0
    %5561 = vmatpush1.msra.mxu0 0.0
    %5562 = vmatprep.mubr.f32.mxu0 0.0
    %5563 = vmatmul.mubr.f32.gmra.mrb[0].mxu0 %v5496
    %v5564 = vpop.f32.mrb[0].mxu0
    %v5565 = vadd.f32 0.0, %v5564
    %v5566 = vpop.f32.mrb[0].mxu0
    %5567 = vdwg.mxu0
    %5568 = vrot.lane.b32.xlu0 %v463, 104
    %v5569 = vpop.permute.xlu0 %5568
    %v5572 = vsel %vm481, %v5185, 0
    %5574 = vmatprep.subr.mxu0 0.0
    %5575 = vmatpush1.msra.mxu0 %v5569
    %5576 = vmatprep.subr.mxu0 0.0
    %5577 = vmatpush1.msra.mxu0 0.0
    %5578 = vmatprep.subr.mxu0 0.0
    %5579 = vmatpush1.msra.mxu0 0.0
    %5580 = vmatprep.subr.mxu0 0.0
    %5581 = vmatpush1.msra.mxu0 0.0
    %5582 = vmatprep.subr.mxu0 0.0
    %5583 = vmatpush1.msra.mxu0 0.0
    %5584 = vmatprep.subr.mxu0 0.0
    %5585 = vmatpush1.msra.mxu0 0.0
    %5586 = vmatprep.subr.mxu0 0.0
    %5587 = vmatpush1.msra.mxu0 0.0
    %5588 = vmatprep.subr.mxu0 0.0
    %5589 = vmatpush1.msra.mxu0 0.0
    %5590 = vmatprep.subr.mxu0 0.0
    %5591 = vmatpush1.msra.mxu0 0.0
    %5592 = vmatprep.subr.mxu0 0.0
    %5593 = vmatpush1.msra.mxu0 0.0
    %5594 = vmatprep.subr.mxu0 0.0
    %5595 = vmatpush1.msra.mxu0 0.0
    %5596 = vmatprep.subr.mxu0 0.0
    %5597 = vmatpush1.msra.mxu0 0.0
    %5598 = vmatprep.subr.mxu0 0.0
    %5599 = vmatpush1.msra.mxu0 0.0
    %5600 = vmatprep.subr.mxu0 0.0
    %5601 = vmatpush1.msra.mxu0 0.0
    %5602 = vmatprep.subr.mxu0 0.0
    %5603 = vmatpush1.msra.mxu0 0.0
    %5604 = vmatprep.subr.mxu0 0.0
    %5605 = vmatpush1.msra.mxu0 0.0
    %5606 = vmatprep.subr.mxu0 0.0
    %5607 = vmatpush1.msra.mxu0 0.0
    %5608 = vmatprep.subr.mxu0 0.0
    %5609 = vmatpush1.msra.mxu0 0.0
    %5610 = vmatprep.subr.mxu0 0.0
    %5611 = vmatpush1.msra.mxu0 0.0
    %5612 = vmatprep.subr.mxu0 0.0
    %5613 = vmatpush1.msra.mxu0 0.0
    %5614 = vmatprep.subr.mxu0 0.0
    %5615 = vmatpush1.msra.mxu0 0.0
    %5616 = vmatprep.subr.mxu0 0.0
    %5617 = vmatpush1.msra.mxu0 0.0
    %5618 = vmatprep.subr.mxu0 0.0
    %5619 = vmatpush1.msra.mxu0 0.0
    %5620 = vmatprep.subr.mxu0 0.0
    %5621 = vmatpush1.msra.mxu0 0.0
    %5622 = vmatprep.subr.mxu0 0.0
    %5623 = vmatpush1.msra.mxu0 0.0
    %5624 = vmatprep.subr.mxu0 0.0
    %5625 = vmatpush1.msra.mxu0 0.0
    %5626 = vmatprep.subr.mxu0 0.0
    %5627 = vmatpush1.msra.mxu0 0.0
    %5628 = vmatprep.subr.mxu0 0.0
    %5629 = vmatpush1.msra.mxu0 0.0
    %5630 = vmatprep.subr.mxu0 0.0
    %5631 = vmatpush1.msra.mxu0 0.0
    %5632 = vmatprep.subr.mxu0 0.0
    %5633 = vmatpush1.msra.mxu0 0.0
    %5634 = vmatprep.subr.mxu0 0.0
    %5635 = vmatpush1.msra.mxu0 0.0
    %5636 = vmatprep.subr.mxu0 0.0
    %5637 = vmatpush1.msra.mxu0 0.0
    %5638 = vmatprep.mubr.f32.mxu0 0.0
    %5639 = vmatmul.mubr.f32.gmra.mrb[0].mxu0 %v5572
    %v5640 = vpop.f32.mrb[0].mxu0
    %v5641 = vadd.f32 0.0, %v5640
    %v5642 = vpop.f32.mrb[0].mxu0
    %5643 = vdwg.mxu0
    %5644 = vrot.lane.b32.xlu0 %v468, 104
    %v5645 = vpop.permute.xlu0 %5644
    %v5648 = vsel %vm481, %v5186, 0
    %5650 = vmatprep.subr.mxu0 0.0
    %5651 = vmatpush1.msra.mxu0 %v5645
    %5652 = vmatprep.subr.mxu0 0.0
    %5653 = vmatpush1.msra.mxu0 0.0
    %5654 = vmatprep.subr.mxu0 0.0
    %5655 = vmatpush1.msra.mxu0 0.0
    %5656 = vmatprep.subr.mxu0 0.0
    %5657 = vmatpush1.msra.mxu0 0.0
    %5658 = vmatprep.subr.mxu0 0.0
    %5659 = vmatpush1.msra.mxu0 0.0
    %5660 = vmatprep.subr.mxu0 0.0
    %5661 = vmatpush1.msra.mxu0 0.0
    %5662 = vmatprep.subr.mxu0 0.0
    %5663 = vmatpush1.msra.mxu0 0.0
    %5664 = vmatprep.subr.mxu0 0.0
    %5665 = vmatpush1.msra.mxu0 0.0
    %5666 = vmatprep.subr.mxu0 0.0
    %5667 = vmatpush1.msra.mxu0 0.0
    %5668 = vmatprep.subr.mxu0 0.0
    %5669 = vmatpush1.msra.mxu0 0.0
    %5670 = vmatprep.subr.mxu0 0.0
    %5671 = vmatpush1.msra.mxu0 0.0
    %5672 = vmatprep.subr.mxu0 0.0
    %5673 = vmatpush1.msra.mxu0 0.0
    %5674 = vmatprep.subr.mxu0 0.0
    %5675 = vmatpush1.msra.mxu0 0.0
    %5676 = vmatprep.subr.mxu0 0.0
    %5677 = vmatpush1.msra.mxu0 0.0
    %5678 = vmatprep.subr.mxu0 0.0
    %5679 = vmatpush1.msra.mxu0 0.0
    %5680 = vmatprep.subr.mxu0 0.0
    %5681 = vmatpush1.msra.mxu0 0.0
    %5682 = vmatprep.subr.mxu0 0.0
    %5683 = vmatpush1.msra.mxu0 0.0
    %5684 = vmatprep.subr.mxu0 0.0
    %5685 = vmatpush1.msra.mxu0 0.0
    %5686 = vmatprep.subr.mxu0 0.0
    %5687 = vmatpush1.msra.mxu0 0.0
    %5688 = vmatprep.subr.mxu0 0.0
    %5689 = vmatpush1.msra.mxu0 0.0
    %5690 = vmatprep.subr.mxu0 0.0
    %5691 = vmatpush1.msra.mxu0 0.0
    %5692 = vmatprep.subr.mxu0 0.0
    %5693 = vmatpush1.msra.mxu0 0.0
    %5694 = vmatprep.subr.mxu0 0.0
    %5695 = vmatpush1.msra.mxu0 0.0
    %5696 = vmatprep.subr.mxu0 0.0
    %5697 = vmatpush1.msra.mxu0 0.0
    %5698 = vmatprep.subr.mxu0 0.0
    %5699 = vmatpush1.msra.mxu0 0.0
    %5700 = vmatprep.subr.mxu0 0.0
    %5701 = vmatpush1.msra.mxu0 0.0
    %5702 = vmatprep.subr.mxu0 0.0
    %5703 = vmatpush1.msra.mxu0 0.0
    %5704 = vmatprep.subr.mxu0 0.0
    %5705 = vmatpush1.msra.mxu0 0.0
    %5706 = vmatprep.subr.mxu0 0.0
    %5707 = vmatpush1.msra.mxu0 0.0
    %5708 = vmatprep.subr.mxu0 0.0
    %5709 = vmatpush1.msra.mxu0 0.0
    %5710 = vmatprep.subr.mxu0 0.0
    %5711 = vmatpush1.msra.mxu0 0.0
    %5712 = vmatprep.subr.mxu0 0.0
    %5713 = vmatpush1.msra.mxu0 0.0
    %5714 = vmatprep.mubr.f32.mxu0 0.0
    %5715 = vmatmul.mubr.f32.gmra.mrb[0].mxu0 %v5648
    %v5716 = vpop.f32.mrb[0].mxu0
    %v5717 = vadd.f32 0.0, %v5716
    %v5718 = vpop.f32.mrb[0].mxu0
    %5719 = vdwg.mxu0
    %5720 = vrot.lane.b32.xlu0 %v473, 104
    %v5721 = vpop.permute.xlu0 %5720
    %v5724 = vsel %vm481, %v5187, 0
    %5726 = vmatprep.subr.mxu0 0.0
    %5727 = vmatpush1.msra.mxu0 %v5721
    %5728 = vmatprep.subr.mxu0 0.0
    %5729 = vmatpush1.msra.mxu0 0.0
    %5730 = vmatprep.subr.mxu0 0.0
    %5731 = vmatpush1.msra.mxu0 0.0
    %5732 = vmatprep.subr.mxu0 0.0
    %5733 = vmatpush1.msra.mxu0 0.0
    %5734 = vmatprep.subr.mxu0 0.0
    %5735 = vmatpush1.msra.mxu0 0.0
    %5736 = vmatprep.subr.mxu0 0.0
    %5737 = vmatpush1.msra.mxu0 0.0
    %5738 = vmatprep.subr.mxu0 0.0
    %5739 = vmatpush1.msra.mxu0 0.0
    %5740 = vmatprep.subr.mxu0 0.0
    %5741 = vmatpush1.msra.mxu0 0.0
    %5742 = vmatprep.subr.mxu0 0.0
    %5743 = vmatpush1.msra.mxu0 0.0
    %5744 = vmatprep.subr.mxu0 0.0
    %5745 = vmatpush1.msra.mxu0 0.0
    %5746 = vmatprep.subr.mxu0 0.0
    %5747 = vmatpush1.msra.mxu0 0.0
    %5748 = vmatprep.subr.mxu0 0.0
    %5749 = vmatpush1.msra.mxu0 0.0
    %5750 = vmatprep.subr.mxu0 0.0
    %5751 = vmatpush1.msra.mxu0 0.0
    %5752 = vmatprep.subr.mxu0 0.0
    %5753 = vmatpush1.msra.mxu0 0.0
    %5754 = vmatprep.subr.mxu0 0.0
    %5755 = vmatpush1.msra.mxu0 0.0
    %5756 = vmatprep.subr.mxu0 0.0
    %5757 = vmatpush1.msra.mxu0 0.0
    %5758 = vmatprep.subr.mxu0 0.0
    %5759 = vmatpush1.msra.mxu0 0.0
    %5760 = vmatprep.subr.mxu0 0.0
    %5761 = vmatpush1.msra.mxu0 0.0
    %5762 = vmatprep.subr.mxu0 0.0
    %5763 = vmatpush1.msra.mxu0 0.0
    %5764 = vmatprep.subr.mxu0 0.0
    %5765 = vmatpush1.msra.mxu0 0.0
    %5766 = vmatprep.subr.mxu0 0.0
    %5767 = vmatpush1.msra.mxu0 0.0
    %5768 = vmatprep.subr.mxu0 0.0
    %5769 = vmatpush1.msra.mxu0 0.0
    %5770 = vmatprep.subr.mxu0 0.0
    %5771 = vmatpush1.msra.mxu0 0.0
    %5772 = vmatprep.subr.mxu0 0.0
    %5773 = vmatpush1.msra.mxu0 0.0
    %5774 = vmatprep.subr.mxu0 0.0
    %5775 = vmatpush1.msra.mxu0 0.0
    %5776 = vmatprep.subr.mxu0 0.0
    %5777 = vmatpush1.msra.mxu0 0.0
    %5778 = vmatprep.subr.mxu0 0.0
    %5779 = vmatpush1.msra.mxu0 0.0
    %5780 = vmatprep.subr.mxu0 0.0
    %5781 = vmatpush1.msra.mxu0 0.0
    %5782 = vmatprep.subr.mxu0 0.0
    %5783 = vmatpush1.msra.mxu0 0.0
    %5784 = vmatprep.subr.mxu0 0.0
    %5785 = vmatpush1.msra.mxu0 0.0
    %5786 = vmatprep.subr.mxu0 0.0
    %5787 = vmatpush1.msra.mxu0 0.0
    %5788 = vmatprep.subr.mxu0 0.0
    %5789 = vmatpush1.msra.mxu0 0.0
    %5790 = vmatprep.mubr.f32.mxu0 0.0
    %5791 = vmatmul.mubr.f32.gmra.mrb[0].mxu0 %v5724
    %v5792 = vpop.f32.mrb[0].mxu0
    %v5793 = vadd.f32 0.0, %v5792
    %v5794 = vpop.f32.mrb[0].mxu0
    %5795 = vdwg.mxu0
    %5804 = vrot.lane.b32.xlu0 %v2582, 8
    %v5805 = vpop.permute.xlu0 %5804
    %5806 = vrot.lane.b32.xlu0 %v2659, 8
    %v5807 = vpop.permute.xlu0 %5806
    %5808 = vrot.lane.b32.xlu0 %v2736, 8
    %v5809 = vpop.permute.xlu0 %5808
    %5810 = vrot.lane.b32.xlu0 %v2813, 8
    %v5811 = vpop.permute.xlu0 %5810
    %5812 = vrot.lane.b32.xlu0 %v2890, 8
    %v5813 = vpop.permute.xlu0 %5812
    %5814 = vrot.lane.b32.xlu0 %v2967, 8
    %v5815 = vpop.permute.xlu0 %5814
    %5816 = vrot.lane.b32.xlu0 %v3044, 8
    %v5817 = vpop.permute.xlu0 %5816
    %5818 = vrot.lane.b32.xlu0 %v3121, 8
    %v5819 = vpop.permute.xlu0 %5818
    %5836 = vrot.lane.b32.xlu0 %v3925, 16
    %v5837 = vpop.permute.xlu0 %5836
    %5838 = vrot.lane.b32.xlu0 %v4001, 16
    %v5839 = vpop.permute.xlu0 %5838
    %5840 = vrot.lane.b32.xlu0 %v4077, 16
    %v5841 = vpop.permute.xlu0 %5840
    %5842 = vrot.lane.b32.xlu0 %v4153, 16
    %v5843 = vpop.permute.xlu0 %5842
    %5844 = vrot.lane.b32.xlu0 %v4229, 16
    %v5845 = vpop.permute.xlu0 %5844
    %5846 = vrot.lane.b32.xlu0 %v4305, 16
    %v5847 = vpop.permute.xlu0 %5846
    %5848 = vrot.lane.b32.xlu0 %v4381, 16
    %v5849 = vpop.permute.xlu0 %5848
    %5850 = vrot.lane.b32.xlu0 %v4457, 16
    %v5851 = vpop.permute.xlu0 %5850
    %5868 = vrot.lane.b32.xlu0 %v5261, 24
    %v5869 = vpop.permute.xlu0 %5868
    %5870 = vrot.lane.b32.xlu0 %v5337, 24
    %v5871 = vpop.permute.xlu0 %5870
    %5872 = vrot.lane.b32.xlu0 %v5413, 24
    %v5873 = vpop.permute.xlu0 %5872
    %5874 = vrot.lane.b32.xlu0 %v5489, 24
    %v5875 = vpop.permute.xlu0 %5874
    %5876 = vrot.lane.b32.xlu0 %v5565, 24
    %v5877 = vpop.permute.xlu0 %5876
    %5878 = vrot.lane.b32.xlu0 %v5641, 24
    %v5879 = vpop.permute.xlu0 %5878
    %5880 = vrot.lane.b32.xlu0 %v5717, 24
    %v5881 = vpop.permute.xlu0 %5880
    %5882 = vrot.lane.b32.xlu0 %v5793, 24
    %v5883 = vpop.permute.xlu0 %5882
    %v5892 = vsel %vm481, %v1266, %v5805
    %v5893 = vsel %vm481, %v1339, %v5807
    %v5894 = vsel %vm481, %v1412, %v5809
    %v5895 = vsel %vm481, %v1485, %v5811
    %v5896 = vsel %vm481, %v1558, %v5813
    %v5897 = vsel %vm481, %v1631, %v5815
    %v5898 = vsel %vm481, %v1704, %v5817
    %v5899 = vsel %vm481, %v1777, %v5819
    %vm5900 = vcmask 130048
    %v5901 = vsel %vm5900, %v5892, %v5837
    %v5902 = vsel %vm5900, %v5893, %v5839
    %v5903 = vsel %vm5900, %v5894, %v5841
    %v5904 = vsel %vm5900, %v5895, %v5843
    %v5905 = vsel %vm5900, %v5896, %v5845
    %v5906 = vsel %vm5900, %v5897, %v5847
    %v5907 = vsel %vm5900, %v5898, %v5849
    %v5908 = vsel %vm5900, %v5899, %v5851
    %vm5909 = vcmask 195584
    %v5910 = vsel %vm5909, %v5901, %v5869
    %v5911 = vsel %vm5909, %v5902, %v5871
    %v5912 = vsel %vm5909, %v5903, %v5873
    %v5913 = vsel %vm5909, %v5904, %v5875
    %v5914 = vsel %vm5909, %v5905, %v5877
    %v5915 = vsel %vm5909, %v5906, %v5879
    %v5916 = vsel %vm5909, %v5907, %v5881
    %v5917 = vsel %vm5909, %v5908, %v5883
    %v5918 = vld [vmem:[#allocation11] sm:$0xff]
    %v5919 = vld [vmem:[#allocation11 + $0x8] sm:$0xff]
    %v5920 = vld [vmem:[#allocation11 + $0x10] sm:$0xff]
    %v5921 = vld [vmem:[#allocation11 + $0x18] sm:$0xff]
    %v5922 = vld [vmem:[%s6] sm:$0x1]
    %v5924 = vlaneseq
    %v5925 = vshrl.u32 %v5924, 7
    %v5926 = vsub.s32 0, %v5925
    %v5927 = vrot.slane %v5922, %v5926
    %v5930 = vsel %vm128, %v5910, 0
    %v5933 = vsel %vm128, %v5911, 0
    %v5936 = vsel %vm128, %v5912, 0
    %v5939 = vsel %vm128, %v5913, 0
    %v5942 = vsel %vm128, %v5914, 0
    %v5945 = vsel %vm128, %v5915, 0
    %v5948 = vsel %vm128, %v5916, 0
    %v5951 = vsel %vm128, %v5917, 0
    %5953 = vmatprep.subr.mxu0 0.0
    %5954 = vmatpush1.msra.mxu0 %v5918
    %5955 = vmatprep.subr.mxu0 0.0
    %5956 = vmatpush1.msra.mxu0 %v5919
    %5957 = vmatprep.subr.mxu0 0.0
    %5958 = vmatpush1.msra.mxu0 %v5920
    %5959 = vmatprep.subr.mxu0 0.0
    %5960 = vmatpush1.msra.mxu0 %v5921
    %5961 = vmatprep.subr.mxu0 0.0
    %5962 = vmatpush1.msra.mxu0 0.0
    %5963 = vmatprep.subr.mxu0 0.0
    %5964 = vmatpush1.msra.mxu0 0.0
    %5965 = vmatprep.subr.mxu0 0.0
    %5966 = vmatpush1.msra.mxu0 0.0
    %5967 = vmatprep.subr.mxu0 0.0
    %5968 = vmatpush1.msra.mxu0 0.0
    %5969 = vmatprep.subr.mxu0 0.0
    %5970 = vmatpush1.msra.mxu0 0.0
    %5971 = vmatprep.subr.mxu0 0.0
    %5972 = vmatpush1.msra.mxu0 0.0
    %5973 = vmatprep.subr.mxu0 0.0
    %5974 = vmatpush1.msra.mxu0 0.0
    %5975 = vmatprep.subr.mxu0 0.0
    %5976 = vmatpush1.msra.mxu0 0.0
    %5977 = vmatprep.subr.mxu0 0.0
    %5978 = vmatpush1.msra.mxu0 0.0
    %5979 = vmatprep.subr.mxu0 0.0
    %5980 = vmatpush1.msra.mxu0 0.0
    %5981 = vmatprep.subr.mxu0 0.0
    %5982 = vmatpush1.msra.mxu0 0.0
    %5983 = vmatprep.subr.mxu0 0.0
    %5984 = vmatpush1.msra.mxu0 0.0
    %5985 = vmatprep.subr.mxu0 0.0
    %5986 = vmatpush1.msra.mxu0 0.0
    %5987 = vmatprep.subr.mxu0 0.0
    %5988 = vmatpush1.msra.mxu0 0.0
    %5989 = vmatprep.subr.mxu0 0.0
    %5990 = vmatpush1.msra.mxu0 0.0
    %5991 = vmatprep.subr.mxu0 0.0
    %5992 = vmatpush1.msra.mxu0 0.0
    %5993 = vmatprep.subr.mxu0 0.0
    %5994 = vmatpush1.msra.mxu0 0.0
    %5995 = vmatprep.subr.mxu0 0.0
    %5996 = vmatpush1.msra.mxu0 0.0
    %5997 = vmatprep.subr.mxu0 0.0
    %5998 = vmatpush1.msra.mxu0 0.0
    %5999 = vmatprep.subr.mxu0 0.0
    %6000 = vmatpush1.msra.mxu0 0.0
    %6001 = vmatprep.subr.mxu0 0.0
    %6002 = vmatpush1.msra.mxu0 0.0
    %6003 = vmatprep.subr.mxu0 0.0
    %6004 = vmatpush1.msra.mxu0 0.0
    %6005 = vmatprep.subr.mxu0 0.0
    %6006 = vmatpush1.msra.mxu0 0.0
    %6007 = vmatprep.subr.mxu0 0.0
    %6008 = vmatpush1.msra.mxu0 0.0
    %6009 = vmatprep.subr.mxu0 0.0
    %6010 = vmatpush1.msra.mxu0 0.0
    %6011 = vmatprep.subr.mxu0 0.0
    %6012 = vmatpush1.msra.mxu0 0.0
    %6013 = vmatprep.subr.mxu0 0.0
    %6014 = vmatpush1.msra.mxu0 0.0
    %6015 = vmatprep.subr.mxu0 0.0
    %6016 = vmatpush1.msra.mxu0 0.0
    %6017 = vmatprep.mubr.f32.mxu0 0.0
    %6018 = vmatmul.mubr.f32.gmra.mrb[0].mxu0 %v5930
    %v6019 = vpop.f32.mrb[0].mxu0
    %v6020 = vadd.f32 %v5927, %v6019
    %v6021 = vpop.f32.mrb[0].mxu0
    %6022 = vmatprep.mubr.f32.mxu0 0.0
    %6023 = vmatmul.mubr.f32.gmra.mrb[0].mxu0 %v5933
    %v6024 = vpop.f32.mrb[0].mxu0
    %v6025 = vadd.f32 %v5927, %v6024
    %v6026 = vpop.f32.mrb[0].mxu0
    %6027 = vmatprep.mubr.f32.mxu0 0.0
    %6028 = vmatmul.mubr.f32.gmra.mrb[0].mxu0 %v5936
    %v6029 = vpop.f32.mrb[0].mxu0
    %v6030 = vadd.f32 %v5927, %v6029
    %v6031 = vpop.f32.mrb[0].mxu0
    %6032 = vmatprep.mubr.f32.mxu0 0.0
    %6033 = vmatmul.mubr.f32.gmra.mrb[0].mxu0 %v5939
    %v6034 = vpop.f32.mrb[0].mxu0
    %v6035 = vadd.f32 %v5927, %v6034
    %v6036 = vpop.f32.mrb[0].mxu0
    %6037 = vmatprep.mubr.f32.mxu0 0.0
    %6038 = vmatmul.mubr.f32.gmra.mrb[0].mxu0 %v5942
    %v6039 = vpop.f32.mrb[0].mxu0
    %v6040 = vadd.f32 %v5927, %v6039
    %v6041 = vpop.f32.mrb[0].mxu0
    %6042 = vmatprep.mubr.f32.mxu0 0.0
    %6043 = vmatmul.mubr.f32.gmra.mrb[0].mxu0 %v5945
    %v6044 = vpop.f32.mrb[0].mxu0
    %v6045 = vadd.f32 %v5927, %v6044
    %v6046 = vpop.f32.mrb[0].mxu0
    %6047 = vmatprep.mubr.f32.mxu0 0.0
    %6048 = vmatmul.mubr.f32.gmra.mrb[0].mxu0 %v5948
    %v6049 = vpop.f32.mrb[0].mxu0
    %v6050 = vadd.f32 %v5927, %v6049
    %v6051 = vpop.f32.mrb[0].mxu0
    %6052 = vmatprep.mubr.f32.mxu0 0.0
    %6053 = vmatmul.mubr.f32.gmra.mrb[0].mxu0 %v5951
    %v6054 = vpop.f32.mrb[0].mxu0
    %v6055 = vadd.f32 %v5927, %v6054
    %v6056 = vpop.f32.mrb[0].mxu0
    %6057 = vdwg.mxu0
    %v6058 = vmax.f32 %v6020, 0.0
    %v6059 = vmax.f32 %v6025, 0.0
    %v6060 = vmax.f32 %v6030, 0.0
    %v6061 = vmax.f32 %v6035, 0.0
    %v6062 = vmax.f32 %v6040, 0.0
    %v6063 = vmax.f32 %v6045, 0.0
    %v6064 = vmax.f32 %v6050, 0.0
    %v6065 = vmax.f32 %v6055, 0.0
    %v6066 = vadd.f32 %v6058, %v5910
    %v6067 = vadd.f32 %v6059, %v5911
    %v6068 = vadd.f32 %v6060, %v5912
    %v6069 = vadd.f32 %v6061, %v5913
    %v6070 = vadd.f32 %v6062, %v5914
    %v6071 = vadd.f32 %v6063, %v5915
    %v6072 = vadd.f32 %v6064, %v5916
    %v6073 = vadd.f32 %v6065, %v5917
    %6074 = vst.msk [vmem:[#allocation13] sm:$0xff] %vm128, %v6066
    %6075 = vst.msk [vmem:[#allocation13 + $0x8] sm:$0xff] %vm128, %v6067
    %6076 = vst.msk [vmem:[#allocation13 + $0x10] sm:$0xff] %vm128, %v6068
    %6077 = vst.msk [vmem:[#allocation13 + $0x18] sm:$0xff] %vm128, %v6069
    %6078 = vst.msk [vmem:[#allocation13 + $0x20] sm:$0xff] %vm128, %v6070
    %6079 = vst.msk [vmem:[#allocation13 + $0x28] sm:$0xff] %vm128, %v6071
    %6080 = vst.msk [vmem:[#allocation13 + $0x30] sm:$0xff] %vm128, %v6072
    %6081 = vst.msk [vmem:[#allocation13 + $0x38] sm:$0xff] %vm128, %v6073
    // Predicated region
    $region54: #{tpu_custom_call.1} parent=1 // pred_check
      _
    $region55: #{tpu_custom_call.1} parent=1 // pred_check_branch
      %6083 = sbr.rel (0) target = $region57
    $region56: #{tpu_custom_call.1} parent=1 // pred_region
      %s6085 = ssub.s32 1024, 1024
      %6086 = vsyncadd [#allocation4], %s6085
      %s6087 = sshll.u32 [#allocation13], 4
      %s6088 = int_to_ptr.vmem [resolvable:$true] %s6087
      %6093 = dma.vmem_to_hbm [thread:$0]  %s6088, 1024, %s7, [#allocation4], 128, 128, 8
    $region57: #{tpu_custom_call.1} parent=1 // pred_fallthru
      _
    // Predicated region
    $region58: #{tpu_custom_call.1} parent=1 // pred_check
      _
    $region59: #{tpu_custom_call.1} parent=1 // pred_check_branch
      %6095 = sbr.rel (0) target = $region61
    $region60: #{tpu_custom_call.1} parent=1 // pred_region
      %6096 = dma.done [#allocation4], 1024
    $region61: #{tpu_custom_call.1} parent=1 // pred_fallthru
      _
    %6097 = vsyncpa [#allocation3], 1
    %6098 = vsyncpa [#allocation6], 1
    %6099 = vsyncpa [#allocation9], 1
    %6100 = vsyncpa [#allocation12], 1
    %6101 = vsyncpa [#allocation4], 1

</llo_original>
